<compile_context>
chip_gen: v6e
topology: v6e:2x2x1
jax: 0.10.0
libtpu: 0.0.40
codegen_flags: <defaults>
</compile_context>

<pallas_src>
import functools

import jax
import jax.numpy as jnp
from jax.experimental import pallas as pl
from jax.experimental.pallas import tpu as pltpu


def _round_up(x, m):
    return ((x + m - 1) // m) * m


# ----------------------------------------------------------------------------
# Pallas kernels
# ----------------------------------------------------------------------------
def _conv_mm_kernel(x_ref, w_ref, b_ref, o_ref):
    # x: [TM, 4K] bf16, w: [4K, 128] bf16 (block-diagonal), b: [1, 128] f32.
    y = jnp.dot(x_ref[...], w_ref[...], preferred_element_type=jnp.float32)
    y = jnp.maximum(y + b_ref[...], 0.0)
    o_ref[...] = y.astype(o_ref.dtype)            # full 128-lane (unmasked) store


def _actor_kernel(x_ref, w_ref, ob_ref, o_ref, acc_ref):
    # K-tiled: x [B, TK] bf16, w [TK, N] bf16, ob [B, N] f32 (gathered option + bias).
    k = pl.program_id(0)

    @pl.when(k == 0)
    def _():
        acc_ref[...] = jnp.zeros_like(acc_ref)

    acc_ref[...] += jnp.dot(x_ref[...], w_ref[...], preferred_element_type=jnp.float32)

    @pl.when(k == pl.num_programs(0) - 1)
    def _():
        o_ref[...] = jnp.maximum(acc_ref[...] + ob_ref[...], 0.0).astype(o_ref.dtype)


# ----------------------------------------------------------------------------
# Pallas wrappers
# ----------------------------------------------------------------------------
def pallas_conv_mxu(cols, w4, b4, *, block_rows=512):
    """cols: [M, K] bf16 (M%4==0), w4: [4K, 128] bf16, b4: [128] f32.

    Returns the packed conv output [M//4, 128] bf16, which is bitwise identical to
    the [M, 32] NHWC activation (4 pixels x 32 channels per row -> lane-dense stores).
    """
    M, K = cols.shape
    assert M % 4 == 0
    Mp = M // 4
    colsp = cols.reshape(Mp, 4 * K)                    # free, row-major repack

    tm = min(block_rows, _round_up(Mp, 8))
    Mpp = _round_up(Mp, tm)
    if Mpp != Mp:
        colsp = jnp.pad(colsp, ((0, Mpp - Mp), (0, 0)))

    out = pl.pallas_call(
        _conv_mm_kernel,
        out_shape=jax.ShapeDtypeStruct((Mpp, 128), jnp.bfloat16),
        grid=(Mpp // tm,),
        in_specs=[
            pl.BlockSpec((tm, 4 * K), lambda i: (i, 0)),       # activation tile (pipelined)
            pl.BlockSpec((4 * K, 128), lambda i: (0, 0)),      # weight: resident
            pl.BlockSpec((1, 128), lambda i: (0, 0)),          # bias: resident
        ],
        out_specs=pl.BlockSpec((tm, 128), lambda i: (i, 0)),
        compiler_params=pltpu.CompilerParams(dimension_semantics=("parallel",)),
    )(colsp, w4, b4.reshape(1, 128))
    return out[:Mp]


def pallas_actor(x, w, opt_bias, *, block_k=2048):
    """out = relu(x @ w + opt_bias).  x: [B, K] bf16, w: [K, N] bf16, opt_bias: [B, N] f32."""
    B, K = x.shape
    _, N = w.shape
    tk = min(block_k, _round_up(K, 128))
    Kp = _round_up(K, tk)
    if Kp != K:
        x = jnp.pad(x, ((0, 0), (0, Kp - K)))
        w = jnp.pad(w, ((0, Kp - K), (0, 0)))

    return pl.pallas_call(
        _actor_kernel,
        out_shape=jax.ShapeDtypeStruct((B, N), jnp.float32),
        grid=(Kp // tk,),
        in_specs=[
            pl.BlockSpec((B, tk), lambda k: (0, k)),
            pl.BlockSpec((tk, N), lambda k: (k, 0)),
            pl.BlockSpec((B, N), lambda k: (0, 0)),
        ],
        out_specs=pl.BlockSpec((B, N), lambda k: (0, 0)),
        scratch_shapes=[pltpu.VMEM((B, N), jnp.float32)],
        compiler_params=pltpu.CompilerParams(dimension_semantics=("arbitrary",)),
    )(x, w, opt_bias)


# ----------------------------------------------------------------------------
# Glue: im2col (gather/reshape only; the matmul hot path is in the kernels)
# ----------------------------------------------------------------------------
def im2col_nhwc(x, k, pad):
    """x: [B, H, W, C] -> ([B*Ho*Wo, k*k*C], (B, Ho, Wo)).  Patch order (ky, kx, ci)."""
    B, H, W, C = x.shape
    xp = jnp.pad(x, ((0, 0), (pad, pad), (pad, pad), (0, 0)))
    Ho = H + 2 * pad - k + 1
    Wo = W + 2 * pad - k + 1
    patches = []
    for ky in range(k):
        for kx in range(k):
            patches.append(xp[:, ky:ky + Ho, kx:kx + Wo, :])
    p = jnp.stack(patches, axis=3)                         # [B, Ho, Wo, k*k, C]
    return p.reshape(B * Ho * Wo, k * k * C), (B, Ho, Wo)


# ----------------------------------------------------------------------------
# Encoder forward (architecture = 'cnn') using the pre-packed kernel params
# ----------------------------------------------------------------------------
def encoder_forward(kp, inputs_nchw, option, *, k_size, padding):
    # norm_factor = 255.0 for the cnn architecture
    x = inputs_nchw.astype(jnp.float32) * (1.0 / 255.0)
    x = jnp.transpose(x, (0, 2, 3, 1)).astype(jnp.bfloat16)    # NCHW -> NHWC, bf16 MXU inputs

    # conv1 + ReLU (lane-dense packed output)
    cols1, (B, H1, W1) = im2col_nhwc(x, k_size, padding)
    p1 = pallas_conv_mxu(cols1, kp["w_conv1_p4"], kp["b_conv1_t"])
    h1 = p1.reshape(B, H1, W1, 32)                             # free row-major reshape (NHWC)

    # conv2 + ReLU
    cols2, (B, H2, W2) = im2col_nhwc(h1, k_size, padding)
    p2 = pallas_conv_mxu(cols2, kp["w_conv2_p4"], kp["b_conv2_t"])
    actor_features = p2.reshape(B, H2 * W2 * 32)               # NHWC flatten (weights pre-permuted)

    # Folded option path: (Wo@Wa_bot)[option] + (ba + bo@Wa_bot)  -> tiny gather, no kernel
    opt_bias = kp["w_opt_actor"][option[:, 0].astype(jnp.int32)] + kp["b_eff"][None, :]

    # actor: K-tiled matmul + bias/option add + ReLU
    return pallas_actor(actor_features, kp["w_actor_nhwc"], opt_bias)


# ----------------------------------------------------------------------------
# Parameter init (synthetic; PyTorch uses orthogonal + zero bias) and offline packing
# ----------------------------------------------------------------------------
def init_params(key, obs_shape, k_size, padding, num_options, output_size):
    cin, H, W = obs_shape
    H1 = H + 2 * padding - k_size + 1
    W1 = W + 2 * padding - k_size + 1
    H2 = H1 + 2 * padding - k_size + 1
    W2 = W1 + 2 * padding - k_size + 1
    n_last = H2 * W2 * 32
    keys = jax.random.split(key, 4)

    def _w(k, shape):
        fan_in = 1
        for s in shape[:-1]:
            fan_in *= s
        return (jax.random.normal(k, shape, jnp.float32) / jnp.sqrt(fan_in)).astype(jnp.float32)

    return {
        # "PyTorch-layout" parameters: conv weights [k*k*Cin, Cout] (patch order ky,kx,ci),
        # actor weight rows in NCHW-flatten order followed by the 128 option features.
        "w_conv1": _w(keys[0], (k_size * k_size * cin, 32)),
        "b_conv1": jnp.zeros((32,), jnp.float32),
        "w_conv2": _w(keys[1], (k_size * k_size * 32, 32)),
        "b_conv2": jnp.zeros((32,), jnp.float32),
        "w_opt": _w(keys[2], (num_options, 128)),
        "b_opt": jnp.zeros((128,), jnp.float32),
        "w_actor": _w(keys[3], (n_last + 128, output_size)),
        "b_actor": jnp.zeros((output_size,), jnp.float32),
    }


def _pack_block_diag_4(w, b):
    """[K, 32] -> block-diag [4K, 128] (bf16) plus tiled bias [128] (f32)."""
    K, N = w.shape
    w4 = jnp.zeros((4 * K, 4 * N), jnp.bfloat16)
    wb = w.astype(jnp.bfloat16)
    for j in range(4):
        w4 = w4.at[j * K:(j + 1) * K, j * N:(j + 1) * N].set(wb)
    return w4, jnp.tile(b, 4).astype(jnp.float32)


def prepare_kernel_params(p, obs_shape, k_size, padding):
    """One-time (host/offline) transformations of the PyTorch-layout parameters."""
    cin, H, W = obs_shape
    H1 = H + 2 * padding - k_size + 1
    W1 = W + 2 * padding - k_size + 1
    H2 = H1 + 2 * padding - k_size + 1
    W2 = W1 + 2 * padding - k_size + 1
    n_last = H2 * W2 * 32

    w1p, b1t = _pack_block_diag_4(p["w_conv1"], p["b_conv1"])
    w2p, b2t = _pack_block_diag_4(p["w_conv2"], p["b_conv2"])

    w_top = p["w_actor"][:n_last]          # NCHW-flatten row order
    w_bot = p["w_actor"][n_last:]          # option-feature rows

    # Row permutation so the actor matmul consumes NHWC-flattened features directly:
    # perm[p*32 + c] = c*(H2*W2) + p
    perm = (jnp.arange(32)[None, :] * (H2 * W2) + jnp.arange(H2 * W2)[:, None]).reshape(-1)

    return {
        "w_conv1_p4": w1p, "b_conv1_t": b1t,
        "w_conv2_p4": w2p, "b_conv2_t": b2t,
        "w_actor_nhwc": w_top[perm].astype(jnp.bfloat16),
        "w_opt_actor": p["w_opt"] @ w_bot,                     # [num_options, output_size] f32
        "b_eff": p["b_actor"] + p["b_opt"] @ w_bot,            # [output_size] f32
    }


# ----------------------------------------------------------------------------
# Pure-JAX reference (original PyTorch structure: NCHW flatten, option layer, concat).
# Matmul inputs are cast to bf16 at the same points as the kernel path so the
# comparison is tight; accumulation stays f32, matching the kernels.
# ----------------------------------------------------------------------------
def encoder_reference(params, inputs_nchw, option, *, k_size, padding):
    x = inputs_nchw.astype(jnp.float32) / 255.0
    x = jnp.transpose(x, (0, 2, 3, 1)).astype(jnp.bfloat16)

    cols1, (B, H1, W1) = im2col_nhwc(x, k_size, padding)
    h1 = jnp.maximum(jnp.dot(cols1, params["w_conv1"].astype(jnp.bfloat16),
                             preferred_element_type=jnp.float32) + params["b_conv1"], 0.0)
    h1 = h1.astype(jnp.bfloat16).reshape(B, H1, W1, 32)

    cols2, (B, H2, W2) = im2col_nhwc(h1, k_size, padding)
    h2 = jnp.maximum(jnp.dot(cols2, params["w_conv2"].astype(jnp.bfloat16),
                             preferred_element_type=jnp.float32) + params["b_conv2"], 0.0)
    h2 = h2.astype(jnp.bfloat16).reshape(B, H2, W2, 32)

    # torch Flatten() on the NCHW tensor
    af = jnp.transpose(h2, (0, 3, 1, 2)).reshape(B, -1)
    onehot = jax.nn.one_hot(option[:, 0], params["w_opt"].shape[0], dtype=jnp.float32)
    of = onehot @ params["w_opt"] + params["b_opt"]

    n_last = af.shape[1]
    w_top = params["w_actor"][:n_last].astype(jnp.bfloat16)
    w_bot = params["w_actor"][n_last:]
    y = (jnp.dot(af, w_top, preferred_element_type=jnp.float32)
         + of @ w_bot + params["b_actor"])
    return jnp.maximum(y, 0.0)


if __name__ == "__main__":
    # obs_shape = (C, H, W) = (4, 16, 16); architecture: cnn, k_size=3, padding=1,
    # num_options=8, encoder_output_size=32; batch=2.
    obs_shape = (4, 16, 16)
    k_size, padding = 3, 1
    num_options, output_size = 8, 32
    B = 2

    key = jax.random.PRNGKey(0)
    k_in, k_opt, k_par = jax.random.split(key, 3)

    inputs = jax.random.uniform(k_in, (B,) + obs_shape, jnp.float32, 0.0, 255.0)
    option = jax.random.randint(k_opt, (B, 1), 0, num_options, jnp.int32)

    params = init_params(k_par, obs_shape, k_size, padding, num_options, output_size)
    kparams = prepare_kernel_params(params, obs_shape, k_size, padding)

    fwd = jax.jit(functools.partial(encoder_forward, k_size=k_size, padding=padding))
    out = jax.block_until_ready(fwd(kparams, inputs, option))

    ref = jax.block_until_ready(
        encoder_reference(params, inputs, option, k_size=k_size, padding=padding))

    assert out.shape == (B, output_size), out.shape
    max_err = float(jnp.max(jnp.abs(out - ref)))
    assert jnp.allclose(out, ref, rtol=3e-2, atol=3e-2), f"mismatch vs reference: {max_err}"

    print("KERNEL_OK")
</pallas_src>

<mosaic_0001>
module attributes {stable_mosaic.version = 11 : i64} {
  func.func @_conv_mm_kernel(%arg0: i32, %arg1: memref<128x144xbf16, #tpu.memory_space<vmem>>, %arg2: memref<144x128xbf16, #tpu.memory_space<vmem>>, %arg3: memref<1x128xf32, #tpu.memory_space<vmem>>, %arg4: memref<128x128xbf16, #tpu.memory_space<vmem>>) attributes {dimension_semantics = [#tpu.dimension_semantics<parallel>], iteration_bounds = array<i64: 1>, scalar_prefetch = 0 : i64, scratch_operands = 0 : i64, tpu.core_type = #tpu.core_type<tc>, window_params = [{transform_indices = @transform_0, window_bounds = array<i64: 128, 144>}, {pipeline_mode = #tpu.pipeline_mode<synchronous>, transform_indices = @transform_1, window_bounds = array<i64: 144, 128>}, {pipeline_mode = #tpu.pipeline_mode<synchronous>, transform_indices = @transform_2, window_bounds = array<i64: 1, 128>}, {transform_indices = @transform_3, window_bounds = array<i64: 128, 128>}]} {
    %c0 = arith.constant 0 : index
    %c0_0 = arith.constant 0 : index
    %0 = vector.load %arg1[%c0, %c0_0] : memref<128x144xbf16, #tpu.memory_space<vmem>>, vector<128x144xbf16>
    %c0_1 = arith.constant 0 : index
    %c0_2 = arith.constant 0 : index
    %1 = vector.load %arg2[%c0_1, %c0_2] : memref<144x128xbf16, #tpu.memory_space<vmem>>, vector<144x128xbf16>
    %cst = arith.constant dense<0.000000e+00> : vector<128x128xf32>
    %2 = tpu.matmul %0, %1, %cst {dimension_numbers = #tpu.dot_dimension_numbers<[1], [0], [0], [1], [0, 0, 1, 1], [], []>} : vector<128x144xbf16>, vector<144x128xbf16>, vector<128x128xf32> -> vector<128x128xf32>
    %c0_3 = arith.constant 0 : index
    %c0_4 = arith.constant 0 : index
    %3 = vector.load %arg3[%c0_3, %c0_4] : memref<1x128xf32, #tpu.memory_space<vmem>>, vector<1x128xf32>
    %4 = vector.broadcast %3 : vector<1x128xf32> to vector<128x128xf32>
    %5 = arith.addf %2, %4 : vector<128x128xf32>
    %cst_5 = arith.constant 0.000000e+00 : f32
    %6 = vector.broadcast %cst_5 : f32 to vector<128x128xf32>
    %7 = arith.maximumf %5, %6 : vector<128x128xf32>
    %8 = arith.truncf %7 : vector<128x128xf32> to vector<128x128xbf16>
    %c0_6 = arith.constant 0 : index
    %c0_7 = arith.constant 0 : index
    %9 = vector.load %arg4[%c0_6, %c0_7] : memref<128x128xbf16, #tpu.memory_space<vmem>>, vector<128x128xbf16>
    tpu.vector_store %arg4[%c0_6, %c0_7], %8 {strides = array<i32>} : memref<128x128xbf16, #tpu.memory_space<vmem>>, vector<128x128xbf16>,
    return
  }
  func.func @transform_0(%arg0: i32) -> (i32, i32) {
    %c0_i32 = arith.constant 0 : i32
    %c0_i32_0 = arith.constant 0 : i32
    return %arg0, %c0_i32 : i32, i32
  }
  func.func @transform_1(%arg0: i32) -> (i32, i32) {
    %c0_i32 = arith.constant 0 : i32
    %c0_i32_0 = arith.constant 0 : i32
    %c0_i32_1 = arith.constant 0 : i32
    return %c0_i32, %c0_i32_0 : i32, i32
  }
  func.func @transform_2(%arg0: i32) -> (i32, i32) {
    %c0_i32 = arith.constant 0 : i32
    %c0_i32_0 = arith.constant 0 : i32
    %c0_i32_1 = arith.constant 0 : i32
    return %c0_i32, %c0_i32_0 : i32, i32
  }
  func.func @transform_3(%arg0: i32) -> (i32, i32) {
    %c0_i32 = arith.constant 0 : i32
    %c0_i32_0 = arith.constant 0 : i32
    return %arg0, %c0_i32 : i32, i32
  }
}

module attributes {stable_mosaic.version = 11 : i64} {
  func.func @_conv_mm_kernel(%arg0: i32, %arg1: memref<128x1152xbf16, #tpu.memory_space<vmem>>, %arg2: memref<1152x128xbf16, #tpu.memory_space<vmem>>, %arg3: memref<1x128xf32, #tpu.memory_space<vmem>>, %arg4: memref<128x128xbf16, #tpu.memory_space<vmem>>) attributes {dimension_semantics = [#tpu.dimension_semantics<parallel>], iteration_bounds = array<i64: 1>, scalar_prefetch = 0 : i64, scratch_operands = 0 : i64, tpu.core_type = #tpu.core_type<tc>, window_params = [{transform_indices = @transform_0, window_bounds = array<i64: 128, 1152>}, {pipeline_mode = #tpu.pipeline_mode<synchronous>, transform_indices = @transform_1, window_bounds = array<i64: 1152, 128>}, {pipeline_mode = #tpu.pipeline_mode<synchronous>, transform_indices = @transform_2, window_bounds = array<i64: 1, 128>}, {transform_indices = @transform_3, window_bounds = array<i64: 128, 128>}]} {
    %c0 = arith.constant 0 : index
    %c0_0 = arith.constant 0 : index
    %0 = vector.load %arg1[%c0, %c0_0] : memref<128x1152xbf16, #tpu.memory_space<vmem>>, vector<128x1152xbf16>
    %c0_1 = arith.constant 0 : index
    %c0_2 = arith.constant 0 : index
    %1 = vector.load %arg2[%c0_1, %c0_2] : memref<1152x128xbf16, #tpu.memory_space<vmem>>, vector<1152x128xbf16>
    %cst = arith.constant dense<0.000000e+00> : vector<128x128xf32>
    %2 = tpu.matmul %0, %1, %cst {dimension_numbers = #tpu.dot_dimension_numbers<[1], [0], [0], [1], [0, 0, 1, 1], [], []>} : vector<128x1152xbf16>, vector<1152x128xbf16>, vector<128x128xf32> -> vector<128x128xf32>
    %c0_3 = arith.constant 0 : index
    %c0_4 = arith.constant 0 : index
    %3 = vector.load %arg3[%c0_3, %c0_4] : memref<1x128xf32, #tpu.memory_space<vmem>>, vector<1x128xf32>
    %4 = vector.broadcast %3 : vector<1x128xf32> to vector<128x128xf32>
    %5 = arith.addf %2, %4 : vector<128x128xf32>
    %cst_5 = arith.constant 0.000000e+00 : f32
    %6 = vector.broadcast %cst_5 : f32 to vector<128x128xf32>
    %7 = arith.maximumf %5, %6 : vector<128x128xf32>
    %8 = arith.truncf %7 : vector<128x128xf32> to vector<128x128xbf16>
    %c0_6 = arith.constant 0 : index
    %c0_7 = arith.constant 0 : index
    %9 = vector.load %arg4[%c0_6, %c0_7] : memref<128x128xbf16, #tpu.memory_space<vmem>>, vector<128x128xbf16>
    tpu.vector_store %arg4[%c0_6, %c0_7], %8 {strides = array<i32>} : memref<128x128xbf16, #tpu.memory_space<vmem>>, vector<128x128xbf16>,
    return
  }
  func.func @transform_0(%arg0: i32) -> (i32, i32) {
    %c0_i32 = arith.constant 0 : i32
    %c0_i32_0 = arith.constant 0 : i32
    return %arg0, %c0_i32 : i32, i32
  }
  func.func @transform_1(%arg0: i32) -> (i32, i32) {
    %c0_i32 = arith.constant 0 : i32
    %c0_i32_0 = arith.constant 0 : i32
    %c0_i32_1 = arith.constant 0 : i32
    return %c0_i32, %c0_i32_0 : i32, i32
  }
  func.func @transform_2(%arg0: i32) -> (i32, i32) {
    %c0_i32 = arith.constant 0 : i32
    %c0_i32_0 = arith.constant 0 : i32
    %c0_i32_1 = arith.constant 0 : i32
    return %c0_i32, %c0_i32_0 : i32, i32
  }
  func.func @transform_3(%arg0: i32) -> (i32, i32) {
    %c0_i32 = arith.constant 0 : i32
    %c0_i32_0 = arith.constant 0 : i32
    return %arg0, %c0_i32 : i32, i32
  }
}

module attributes {stable_mosaic.version = 11 : i64} {
  func.func @_actor_kernel(%arg0: i32, %arg1: memref<2x2048xbf16, #tpu.memory_space<vmem>>, %arg2: memref<2048x32xbf16, #tpu.memory_space<vmem>>, %arg3: memref<2x32xf32, #tpu.memory_space<vmem>>, %arg4: memref<2x32xf32, #tpu.memory_space<vmem>>, %arg5: memref<2x32xf32, #tpu.memory_space<vmem>>) attributes {dimension_semantics = [#tpu.dimension_semantics<arbitrary>], iteration_bounds = array<i64: 4>, scalar_prefetch = 0 : i64, scratch_operands = 1 : i64, tpu.core_type = #tpu.core_type<tc>, window_params = [{transform_indices = @transform_0, window_bounds = array<i64: 2, 2048>}, {transform_indices = @transform_1, window_bounds = array<i64: 2048, 32>}, {pipeline_mode = #tpu.pipeline_mode<synchronous>, transform_indices = @transform_2, window_bounds = array<i64: 2, 32>}, {pipeline_mode = #tpu.pipeline_mode<synchronous>, transform_indices = @transform_3, window_bounds = array<i64: 2, 32>}]} {
    %c0_i32 = arith.constant 0 : i32
    %0 = arith.cmpi eq, %arg0, %c0_i32 : i32
    %1 = arith.extui %0 : i1 to i32
    %c0_i32_0 = arith.constant 0 : i32
    %2 = arith.cmpi ne, %1, %c0_i32_0 : i32
    scf.if %2 {
      %cst_9 = arith.constant 0.000000e+00 : f32
      %12 = vector.broadcast %cst_9 : f32 to vector<2x32xf32>
      %c0_10 = arith.constant 0 : index
      %c0_11 = arith.constant 0 : index
      %13 = vector.load %arg5[%c0_10, %c0_11] : memref<2x32xf32, #tpu.memory_space<vmem>>, vector<2x32xf32>
      tpu.vector_store %arg5[%c0_10, %c0_11], %12 {strides = array<i32>} : memref<2x32xf32, #tpu.memory_space<vmem>>, vector<2x32xf32>,
    } else {
    }
    %c0 = arith.constant 0 : index
    %c0_1 = arith.constant 0 : index
    %3 = vector.load %arg5[%c0, %c0_1] : memref<2x32xf32, #tpu.memory_space<vmem>>, vector<2x32xf32>
    %c0_2 = arith.constant 0 : index
    %c0_3 = arith.constant 0 : index
    %4 = vector.load %arg1[%c0_2, %c0_3] : memref<2x2048xbf16, #tpu.memory_space<vmem>>, vector<2x2048xbf16>
    %c0_4 = arith.constant 0 : index
    %c0_5 = arith.constant 0 : index
    %5 = vector.load %arg2[%c0_4, %c0_5] : memref<2048x32xbf16, #tpu.memory_space<vmem>>, vector<2048x32xbf16>
    %cst = arith.constant dense<0.000000e+00> : vector<2x32xf32>
    %6 = tpu.matmul %4, %5, %cst {dimension_numbers = #tpu.dot_dimension_numbers<[1], [0], [0], [1], [0, 0, 1, 1], [], []>} : vector<2x2048xbf16>, vector<2048x32xbf16>, vector<2x32xf32> -> vector<2x32xf32>
    %7 = arith.addf %3, %6 : vector<2x32xf32>
    %c0_6 = arith.constant 0 : index
    %c0_7 = arith.constant 0 : index
    %8 = vector.load %arg5[%c0_6, %c0_7] : memref<2x32xf32, #tpu.memory_space<vmem>>, vector<2x32xf32>
    tpu.vector_store %arg5[%c0_6, %c0_7], %7 {strides = array<i32>} : memref<2x32xf32, #tpu.memory_space<vmem>>, vector<2x32xf32>,
    %c3_i32 = arith.constant 3 : i32
    %9 = arith.cmpi eq, %arg0, %c3_i32 : i32
    %10 = arith.extui %9 : i1 to i32
    %c0_i32_8 = arith.constant 0 : i32
    %11 = arith.cmpi ne, %10, %c0_i32_8 : i32
    scf.if %11 {
      %c0_9 = arith.constant 0 : index
      %c0_10 = arith.constant 0 : index
      %12 = vector.load %arg5[%c0_9, %c0_10] : memref<2x32xf32, #tpu.memory_space<vmem>>, vector<2x32xf32>
      %c0_11 = arith.constant 0 : index
      %c0_12 = arith.constant 0 : index
      %13 = vector.load %arg3[%c0_11, %c0_12] : memref<2x32xf32, #tpu.memory_space<vmem>>, vector<2x32xf32>
      %14 = arith.addf %12, %13 : vector<2x32xf32>
      %cst_13 = arith.constant 0.000000e+00 : f32
      %15 = vector.broadcast %cst_13 : f32 to vector<2x32xf32>
      %16 = arith.maximumf %14, %15 : vector<2x32xf32>
      %c0_14 = arith.constant 0 : index
      %c0_15 = arith.constant 0 : index
      %17 = vector.load %arg4[%c0_14, %c0_15] : memref<2x32xf32, #tpu.memory_space<vmem>>, vector<2x32xf32>
      tpu.vector_store %arg4[%c0_14, %c0_15], %16 {strides = array<i32>} : memref<2x32xf32, #tpu.memory_space<vmem>>, vector<2x32xf32>,
    } else {
    }
    return
  }
  func.func @transform_0(%arg0: i32) -> (i32, i32) {
    %c0_i32 = arith.constant 0 : i32
    %c0_i32_0 = arith.constant 0 : i32
    return %c0_i32, %arg0 : i32, i32
  }
  func.func @transform_1(%arg0: i32) -> (i32, i32) {
    %c0_i32 = arith.constant 0 : i32
    %c0_i32_0 = arith.constant 0 : i32
    return %arg0, %c0_i32 : i32, i32
  }
  func.func @transform_2(%arg0: i32) -> (i32, i32) {
    %c0_i32 = arith.constant 0 : i32
    %c0_i32_0 = arith.constant 0 : i32
    %c0_i32_1 = arith.constant 0 : i32
    return %c0_i32, %c0_i32_0 : i32, i32
  }
  func.func @transform_3(%arg0: i32) -> (i32, i32) {
    %c0_i32 = arith.constant 0 : i32
    %c0_i32_0 = arith.constant 0 : i32
    %c0_i32_1 = arith.constant 0 : i32
    return %c0_i32, %c0_i32_0 : i32, i32
  }
}

</mosaic_0001>

<llo_original>
// kernel: encoder_forward.3
$region0: #{encoder_forward.3}
  #allocation0 [shape = 'u32[]', space=smem, size = 0x4, offset = 0x4, fixed_abs, tag = 'smem constant byte address 0x4 - core index']
  #allocation1 [shape = 'u32[144,128]{1,0:T(1,128)}', space=vmem, size = 0x12000, scoped, tag = 'internal scratch']
  %s0 = inlined_call_operand.vmem [shape: bf16[128,144], index: 0, kind: input, shape index: {}]
  %s1 = inlined_call_operand.vmem [shape: bf16[144,128], index: 1, kind: input, shape index: {}]
  %s2 = inlined_call_operand.vmem [shape: f32[1,128], index: 2, kind: input, shape index: {}]
  %s3 = inlined_call_operand.vmem [shape: bf16[128,128], index: 3, kind: output, shape index: {}]
  %s4 = sld [smem:[#allocation0]]
  $region22: #{encoder_forward.3} parent=0
    _
  %s6 = ssub.s32 1, %s4
  %s7 = scalar_select 0, %s6, %s4
  // Predicated region
  $region2: #{encoder_forward.3} parent=0 // pred_check
    _
  $region3: #{encoder_forward.3} parent=0 // pred_check_branch
    %9 = sbr.rel (0) target = $region5
  $region4: #{encoder_forward.3} parent=0 // pred_region
    _
  $region5: #{encoder_forward.3} parent=0 // pred_fallthru
    _
  // Predicated region
  $region6: #{encoder_forward.3} parent=0 // pred_check
    _
  $region7: #{encoder_forward.3} parent=0 // pred_check_branch
    %11 = sbr.rel (0) target = $region9
  $region8: #{encoder_forward.3} parent=0 // pred_region
    _
  $region9: #{encoder_forward.3} parent=0 // pred_fallthru
    _
  // Predicated region
  $region10: #{encoder_forward.3} parent=0 // pred_check
    _
  $region11: #{encoder_forward.3} parent=0 // pred_check_branch
    %13 = sbr.rel (0) target = $region13
  $region12: #{encoder_forward.3} parent=0 // pred_region
    _
  $region13: #{encoder_forward.3} parent=0 // pred_fallthru
    _
  %v15 = vld [vmem:[%s0] sm:$0xff]
  %v16 = vld [vmem:[%s0 + $0x8] sm:$0xff]
  %v17 = vld [vmem:[%s0 + $0x10] sm:$0xff]
  %v18 = vld [vmem:[%s0 + $0x18] sm:$0xff]
  %v19 = vld [vmem:[%s0 + $0x20] sm:$0xff]
  %v20 = vld [vmem:[%s0 + $0x28] sm:$0xff]
  %v21 = vld [vmem:[%s0 + $0x30] sm:$0xff]
  %v22 = vld [vmem:[%s0 + $0x38] sm:$0xff]
  %v23 = vld [vmem:[%s0 + $0x40] sm:$0xff]
  %v24 = vld [vmem:[%s0 + $0x48] sm:$0xff]
  %v25 = vld [vmem:[%s0 + $0x50] sm:$0xff]
  %v26 = vld [vmem:[%s0 + $0x58] sm:$0xff]
  %v27 = vld [vmem:[%s0 + $0x60] sm:$0xff]
  %v28 = vld [vmem:[%s0 + $0x68] sm:$0xff]
  %v29 = vld [vmem:[%s0 + $0x70] sm:$0xff]
  %v30 = vld [vmem:[%s0 + $0x78] sm:$0xff]
  %v31 = vld [vmem:[%s1] sm:$0xf]
  %v32 = vld [vmem:[%s1 + $0x4] sm:$0xf]
  %v33 = vld [vmem:[%s1 + $0x8] sm:$0xf]
  %v34 = vld [vmem:[%s1 + $0xc] sm:$0xf]
  %v35 = vld [vmem:[%s1 + $0x10] sm:$0xf]
  %v36 = vld [vmem:[%s1 + $0x14] sm:$0xf]
  %v37 = vld [vmem:[%s1 + $0x18] sm:$0xf]
  %v38 = vld [vmem:[%s1 + $0x1c] sm:$0xf]
  %v39 = vld [vmem:[%s1 + $0x20] sm:$0xf]
  %v40 = vld [vmem:[%s1 + $0x24] sm:$0xf]
  %v41 = vld [vmem:[%s1 + $0x28] sm:$0xf]
  %v42 = vld [vmem:[%s1 + $0x2c] sm:$0xf]
  %v43 = vld [vmem:[%s1 + $0x30] sm:$0xf]
  %v44 = vld [vmem:[%s1 + $0x34] sm:$0xf]
  %v45 = vld [vmem:[%s1 + $0x38] sm:$0xf]
  %v46 = vld [vmem:[%s1 + $0x3c] sm:$0xf]
  %v47 = vld [vmem:[%s1 + $0x40] sm:$0xf]
  %v48 = vld [vmem:[%s1 + $0x44] sm:$0xf]
  %v49 = vld [vmem:[%s2] sm:$0x1]
  %v51 = vlaneseq
  %v52 = vshrl.u32 %v51, 7
  %v53 = vsub.s32 0, %v52
  %v54 = vrot.slane %v49, %v53
  %v72 = vunpack.c.l.b16 %v15
  %v73 = vunpack.c.h.b16 %v15
  %v74 = vunpack.c.l.b16 %v16
  %v75 = vunpack.c.h.b16 %v16
  %v76 = vunpack.c.l.b16 %v17
  %v77 = vunpack.c.h.b16 %v17
  %v78 = vunpack.c.l.b16 %v18
  %v79 = vunpack.c.h.b16 %v18
  %v80 = vunpack.c.l.b16 %v19
  %v81 = vunpack.c.h.b16 %v19
  %v82 = vunpack.c.l.b16 %v20
  %v83 = vunpack.c.h.b16 %v20
  %v84 = vunpack.c.l.b16 %v21
  %v85 = vunpack.c.h.b16 %v21
  %v86 = vunpack.c.l.b16 %v22
  %v87 = vunpack.c.h.b16 %v22
  %v88 = vunpack.c.l.b16 %v23
  %v89 = vunpack.c.h.b16 %v23
  %v90 = vunpack.c.l.b16 %v24
  %v91 = vunpack.c.h.b16 %v24
  %v92 = vunpack.c.l.b16 %v25
  %v93 = vunpack.c.h.b16 %v25
  %v94 = vunpack.c.l.b16 %v26
  %v95 = vunpack.c.h.b16 %v26
  %v96 = vunpack.c.l.b16 %v27
  %v97 = vunpack.c.h.b16 %v27
  %v98 = vunpack.c.l.b16 %v28
  %v99 = vunpack.c.h.b16 %v28
  %v100 = vunpack.c.l.b16 %v29
  %v101 = vunpack.c.h.b16 %v29
  %v102 = vunpack.c.l.b16 %v30
  %v103 = vunpack.c.h.b16 %v30
  %v104 = vpack.c.b16 %v74, %v72
  %v105 = vpack.c.b16 %v75, %v73
  %v106 = vpack.c.b16 %v78, %v76
  %v107 = vpack.c.b16 %v79, %v77
  %v108 = vpack.c.b16 %v82, %v80
  %v109 = vpack.c.b16 %v83, %v81
  %v110 = vpack.c.b16 %v86, %v84
  %v111 = vpack.c.b16 %v87, %v85
  %v112 = vpack.c.b16 %v90, %v88
  %v113 = vpack.c.b16 %v91, %v89
  %v114 = vpack.c.b16 %v94, %v92
  %v115 = vpack.c.b16 %v95, %v93
  %v116 = vpack.c.b16 %v98, %v96
  %v117 = vpack.c.b16 %v99, %v97
  %v118 = vpack.c.b16 %v102, %v100
  %v119 = vpack.c.b16 %v103, %v101
  %v146 = vunpack.c.l.b16 %v31
  %v147 = vunpack.c.l.b16 %v32
  %v148 = vunpack.c.l.b16 %v33
  %v149 = vunpack.c.l.b16 %v34
  %v150 = vunpack.c.l.b16 %v35
  %v151 = vunpack.c.l.b16 %v36
  %v152 = vunpack.c.l.b16 %v37
  %v153 = vunpack.c.l.b16 %v38
  %v154 = vunpack.c.l.b16 %v39
  %v155 = vunpack.c.l.b16 %v40
  %v156 = vunpack.c.l.b16 %v41
  %v157 = vunpack.c.l.b16 %v42
  %v158 = vunpack.c.l.b16 %v43
  %v159 = vunpack.c.l.b16 %v44
  %v160 = vunpack.c.l.b16 %v45
  %v161 = vunpack.c.l.b16 %v46
  %v162 = vunpack.c.l.b16 %v47
  %v163 = vunpack.c.l.b16 %v48
  %v164 = vpack.c.b16 %v147, %v146
  %v165 = vpack.c.b16 %v149, %v148
  %v166 = vpack.c.b16 %v151, %v150
  %v167 = vpack.c.b16 %v153, %v152
  %v168 = vpack.c.b16 %v155, %v154
  %v169 = vpack.c.b16 %v157, %v156
  %v170 = vpack.c.b16 %v159, %v158
  %v171 = vpack.c.b16 %v161, %v160
  %v172 = vpack.c.b16 %v163, %v162
  %vm182 = vcmask 130048
  %v184 = vsel %vm182, %v105, 0
  %v187 = vsel %vm182, %v107, 0
  %v190 = vsel %vm182, %v109, 0
  %v193 = vsel %vm182, %v111, 0
  %v196 = vsel %vm182, %v113, 0
  %v199 = vsel %vm182, %v115, 0
  %v202 = vsel %vm182, %v117, 0
  %v205 = vsel %vm182, %v119, 0
  %207 = vmatprep.subr.bf16.mxu0 0
  %208 = vmatpush1.bf16.msra.mxu0 %v171
  %209 = vmatprep.subr.bf16.mxu0 0
  %210 = vmatpush1.bf16.msra.mxu0 %v170
  %211 = vmatprep.subr.bf16.mxu0 0
  %212 = vmatpush1.bf16.msra.mxu0 %v169
  %213 = vmatprep.subr.bf16.mxu0 0
  %214 = vmatpush1.bf16.msra.mxu0 %v168
  %215 = vmatprep.subr.bf16.mxu0 0
  %216 = vmatpush1.bf16.msra.mxu0 %v167
  %217 = vmatprep.subr.bf16.mxu0 0
  %218 = vmatpush1.bf16.msra.mxu0 %v166
  %219 = vmatprep.subr.bf16.mxu0 0
  %220 = vmatpush1.bf16.msra.mxu0 %v165
  %221 = vmatprep.subr.bf16.mxu0 0
  %222 = vmatpush1.bf16.msra.mxu0 %v164
  %223 = vmatprep.subr.bf16.mxu0 0
  %224 = vmatpush2.bf16.msra.mxu0 0
  %225 = vmatprep.subr.bf16.mxu0 0
  %226 = vmatpush2.bf16.msra.mxu0 0
  %227 = vmatprep.subr.bf16.mxu0 0
  %228 = vmatpush2.bf16.msra.mxu0 0
  %229 = vmatprep.subr.bf16.mxu0 0
  %230 = vmatpush2.bf16.msra.mxu0 0
  %231 = vmatprep.subr.bf16.mxu0 0
  %232 = vmatpush2.bf16.msra.mxu0 0
  %233 = vmatprep.subr.bf16.mxu0 0
  %234 = vmatpush2.bf16.msra.mxu0 0
  %235 = vmatprep.subr.bf16.mxu0 0
  %236 = vmatpush2.bf16.msra.mxu0 0
  %237 = vmatprep.subr.bf16.mxu0 0
  %238 = vmatpush2.bf16.msra.mxu0 %v172
  %239 = vmatprep.mubr.bf16.mxu0 %v184
  %240 = vmatmul.mubr.bf16.gmra.mxu0 %v104
  %v241 = vpop.f32.mrf.mxu0
  %v242 = vadd.f32 %v54, %v241
  %v243 = vpop.f32.mrf.mxu0
  %v244 = vpop.f32.mrf.mxu0
  %v245 = vadd.f32 %v54, %v244
  %v246 = vpop.f32.mrf.mxu0
  %247 = vmatprep.mubr.bf16.mxu0 %v187
  %248 = vmatmul.mubr.bf16.gmra.mxu0 %v106
  %v249 = vpop.f32.mrf.mxu0
  %v250 = vadd.f32 %v54, %v249
  %v251 = vpop.f32.mrf.mxu0
  %v252 = vpop.f32.mrf.mxu0
  %v253 = vadd.f32 %v54, %v252
  %v254 = vpop.f32.mrf.mxu0
  %255 = vmatprep.mubr.bf16.mxu0 %v190
  %256 = vmatmul.mubr.bf16.gmra.mxu0 %v108
  %v257 = vpop.f32.mrf.mxu0
  %v258 = vadd.f32 %v54, %v257
  %v259 = vpop.f32.mrf.mxu0
  %v260 = vpop.f32.mrf.mxu0
  %v261 = vadd.f32 %v54, %v260
  %v262 = vpop.f32.mrf.mxu0
  %263 = vmatprep.mubr.bf16.mxu0 %v193
  %264 = vmatmul.mubr.bf16.gmra.mxu0 %v110
  %v265 = vpop.f32.mrf.mxu0
  %v266 = vadd.f32 %v54, %v265
  %v267 = vpop.f32.mrf.mxu0
  %v268 = vpop.f32.mrf.mxu0
  %v269 = vadd.f32 %v54, %v268
  %v270 = vpop.f32.mrf.mxu0
  %271 = vmatprep.mubr.bf16.mxu0 %v196
  %272 = vmatmul.mubr.bf16.gmra.mxu0 %v112
  %v273 = vpop.f32.mrf.mxu0
  %v274 = vadd.f32 %v54, %v273
  %v275 = vpop.f32.mrf.mxu0
  %v276 = vpop.f32.mrf.mxu0
  %v277 = vadd.f32 %v54, %v276
  %v278 = vpop.f32.mrf.mxu0
  %279 = vmatprep.mubr.bf16.mxu0 %v199
  %280 = vmatmul.mubr.bf16.gmra.mxu0 %v114
  %v281 = vpop.f32.mrf.mxu0
  %v282 = vadd.f32 %v54, %v281
  %v283 = vpop.f32.mrf.mxu0
  %v284 = vpop.f32.mrf.mxu0
  %v285 = vadd.f32 %v54, %v284
  %v286 = vpop.f32.mrf.mxu0
  %287 = vmatprep.mubr.bf16.mxu0 %v202
  %288 = vmatmul.mubr.bf16.gmra.mxu0 %v116
  %v289 = vpop.f32.mrf.mxu0
  %v290 = vadd.f32 %v54, %v289
  %v291 = vpop.f32.mrf.mxu0
  %v292 = vpop.f32.mrf.mxu0
  %v293 = vadd.f32 %v54, %v292
  %v294 = vpop.f32.mrf.mxu0
  %295 = vmatprep.mubr.bf16.mxu0 %v205
  %296 = vmatmul.mubr.bf16.gmra.mxu0 %v118
  %v297 = vpop.f32.mrf.mxu0
  %v298 = vadd.f32 %v54, %v297
  %v299 = vpop.f32.mrf.mxu0
  %v300 = vpop.f32.mrf.mxu0
  %v301 = vadd.f32 %v54, %v300
  %v302 = vpop.f32.mrf.mxu0
  %303 = vdwg.mxu0
  %v304 = vmax.f32 %v242, 0.0
  %v305 = vmax.f32 %v245, 0.0
  %v306 = vmax.f32 %v250, 0.0
  %v307 = vmax.f32 %v253, 0.0
  %v308 = vmax.f32 %v258, 0.0
  %v309 = vmax.f32 %v261, 0.0
  %v310 = vmax.f32 %v266, 0.0
  %v311 = vmax.f32 %v269, 0.0
  %v312 = vmax.f32 %v274, 0.0
  %v313 = vmax.f32 %v277, 0.0
  %v314 = vmax.f32 %v282, 0.0
  %v315 = vmax.f32 %v285, 0.0
  %v316 = vmax.f32 %v290, 0.0
  %v317 = vmax.f32 %v293, 0.0
  %v318 = vmax.f32 %v298, 0.0
  %v319 = vmax.f32 %v301, 0.0
  %v320 = vpack.c.bf16 %v305, %v304
  %v321 = vpack.c.bf16 %v307, %v306
  %v322 = vpack.c.bf16 %v309, %v308
  %v323 = vpack.c.bf16 %v311, %v310
  %v324 = vpack.c.bf16 %v313, %v312
  %v325 = vpack.c.bf16 %v315, %v314
  %v326 = vpack.c.bf16 %v317, %v316
  %v327 = vpack.c.bf16 %v319, %v318
  %v336 = vunpack.c.l.b16 %v320
  %v337 = vunpack.c.h.b16 %v320
  %v338 = vunpack.c.l.b16 %v321
  %v339 = vunpack.c.h.b16 %v321
  %v340 = vunpack.c.l.b16 %v322
  %v341 = vunpack.c.h.b16 %v322
  %v342 = vunpack.c.l.b16 %v323
  %v343 = vunpack.c.h.b16 %v323
  %v344 = vunpack.c.l.b16 %v324
  %v345 = vunpack.c.h.b16 %v324
  %v346 = vunpack.c.l.b16 %v325
  %v347 = vunpack.c.h.b16 %v325
  %v348 = vunpack.c.l.b16 %v326
  %v349 = vunpack.c.h.b16 %v326
  %v350 = vunpack.c.l.b16 %v327
  %v351 = vunpack.c.h.b16 %v327
  %v352 = vpack.c.b16 %v336, %v336
  %v353 = vpack.c.b16 %v337, %v337
  %v354 = vpack.c.b16 %v338, %v338
  %v355 = vpack.c.b16 %v339, %v339
  %v356 = vpack.c.b16 %v340, %v340
  %v357 = vpack.c.b16 %v341, %v341
  %v358 = vpack.c.b16 %v342, %v342
  %v359 = vpack.c.b16 %v343, %v343
  %v360 = vpack.c.b16 %v344, %v344
  %v361 = vpack.c.b16 %v345, %v345
  %v362 = vpack.c.b16 %v346, %v346
  %v363 = vpack.c.b16 %v347, %v347
  %v364 = vpack.c.b16 %v348, %v348
  %v365 = vpack.c.b16 %v349, %v349
  %v366 = vpack.c.b16 %v350, %v350
  %v367 = vpack.c.b16 %v351, %v351
  %384 = vst [vmem:[%s3] sm:$0xf] %v352
  %385 = vst [vmem:[%s3 + $0x4] sm:$0xf] %v353
  %386 = vst [vmem:[%s3 + $0x8] sm:$0xf] %v354
  %387 = vst [vmem:[%s3 + $0xc] sm:$0xf] %v355
  %388 = vst [vmem:[%s3 + $0x10] sm:$0xf] %v356
  %389 = vst [vmem:[%s3 + $0x14] sm:$0xf] %v357
  %390 = vst [vmem:[%s3 + $0x18] sm:$0xf] %v358
  %391 = vst [vmem:[%s3 + $0x1c] sm:$0xf] %v359
  %392 = vst [vmem:[%s3 + $0x20] sm:$0xf] %v360
  %393 = vst [vmem:[%s3 + $0x24] sm:$0xf] %v361
  %394 = vst [vmem:[%s3 + $0x28] sm:$0xf] %v362
  %395 = vst [vmem:[%s3 + $0x2c] sm:$0xf] %v363
  %396 = vst [vmem:[%s3 + $0x30] sm:$0xf] %v364
  %397 = vst [vmem:[%s3 + $0x34] sm:$0xf] %v365
  %398 = vst [vmem:[%s3 + $0x38] sm:$0xf] %v366
  %399 = vst [vmem:[%s3 + $0x3c] sm:$0xf] %v367
  // Predicated region
  $region14: #{encoder_forward.3} parent=0 // pred_check
    _
  $region15: #{encoder_forward.3} parent=0 // pred_check_branch
    %401 = sbr.rel (0) target = $region17
  $region16: #{encoder_forward.3} parent=0 // pred_region
    _
  $region17: #{encoder_forward.3} parent=0 // pred_fallthru
    _
  // Predicated region
  $region18: #{encoder_forward.3} parent=0 // pred_check
    _
  $region19: #{encoder_forward.3} parent=0 // pred_check_branch
    %403 = sbr.rel (0) target = $region21
  $region20: #{encoder_forward.3} parent=0 // pred_region
    _
  $region21: #{encoder_forward.3} parent=0 // pred_fallthru
    _

// kernel: encoder_forward.4
$region0: #{encoder_forward.4}
  #allocation0 [shape = 'u32[]', space=smem, size = 0x4, offset = 0x4, fixed_abs, tag = 'smem constant byte address 0x4 - core index']
  #allocation1 [shape = 'u32[144,128]{1,0:T(1,128)}', space=vmem, size = 0x12000, scoped, tag = 'internal scratch']
  %s0 = inlined_call_operand.vmem [shape: bf16[128,1152], index: 0, kind: input, shape index: {}]
  %s1 = inlined_call_operand.vmem [shape: bf16[1152,128], index: 1, kind: input, shape index: {}]
  %s2 = inlined_call_operand.vmem [shape: f32[1,128], index: 2, kind: input, shape index: {}]
  %s3 = inlined_call_operand.vmem [shape: bf16[128,128], index: 3, kind: output, shape index: {}]
  %s4 = sld [smem:[#allocation0]]
  $region22: #{encoder_forward.4} parent=0
    _
  %s6 = ssub.s32 1, %s4
  %s7 = scalar_select 0, %s6, %s4
  // Predicated region
  $region2: #{encoder_forward.4} parent=0 // pred_check
    _
  $region3: #{encoder_forward.4} parent=0 // pred_check_branch
    %9 = sbr.rel (0) target = $region5
  $region4: #{encoder_forward.4} parent=0 // pred_region
    _
  $region5: #{encoder_forward.4} parent=0 // pred_fallthru
    _
  // Predicated region
  $region6: #{encoder_forward.4} parent=0 // pred_check
    _
  $region7: #{encoder_forward.4} parent=0 // pred_check_branch
    %11 = sbr.rel (0) target = $region9
  $region8: #{encoder_forward.4} parent=0 // pred_region
    _
  $region9: #{encoder_forward.4} parent=0 // pred_fallthru
    _
  // Predicated region
  $region10: #{encoder_forward.4} parent=0 // pred_check
    _
  $region11: #{encoder_forward.4} parent=0 // pred_check_branch
    %13 = sbr.rel (0) target = $region13
  $region12: #{encoder_forward.4} parent=0 // pred_region
    _
  $region13: #{encoder_forward.4} parent=0 // pred_fallthru
    _
  %v15 = vld [vmem:[%s0] sm:$0xff]
  %v16 = vld [vmem:[%s0 + $0x8] sm:$0xff]
  %v17 = vld [vmem:[%s0 + $0x10] sm:$0xff]
  %v18 = vld [vmem:[%s0 + $0x18] sm:$0xff]
  %v19 = vld [vmem:[%s0 + $0x20] sm:$0xf]
  %v20 = vld [vmem:[%s0 + $0x24] sm:$0xff]
  %v21 = vld [vmem:[%s0 + $0x2c] sm:$0xff]
  %v22 = vld [vmem:[%s0 + $0x34] sm:$0xff]
  %v23 = vld [vmem:[%s0 + $0x3c] sm:$0xff]
  %v24 = vld [vmem:[%s0 + $0x44] sm:$0xf]
  %v25 = vld [vmem:[%s0 + $0x48] sm:$0xff]
  %v26 = vld [vmem:[%s0 + $0x50] sm:$0xff]
  %v27 = vld [vmem:[%s0 + $0x58] sm:$0xff]
  %v28 = vld [vmem:[%s0 + $0x60] sm:$0xff]
  %v29 = vld [vmem:[%s0 + $0x68] sm:$0xf]
  %v30 = vld [vmem:[%s0 + $0x6c] sm:$0xff]
  %v31 = vld [vmem:[%s0 + $0x74] sm:$0xff]
  %v32 = vld [vmem:[%s0 + $0x7c] sm:$0xff]
  %v33 = vld [vmem:[%s0 + $0x84] sm:$0xff]
  %v34 = vld [vmem:[%s0 + $0x8c] sm:$0xf]
  %v35 = vld [vmem:[%s0 + $0x90] sm:$0xff]
  %v36 = vld [vmem:[%s0 + $0x98] sm:$0xff]
  %v37 = vld [vmem:[%s0 + $0xa0] sm:$0xff]
  %v38 = vld [vmem:[%s0 + $0xa8] sm:$0xff]
  %v39 = vld [vmem:[%s0 + $0xb0] sm:$0xf]
  %v40 = vld [vmem:[%s0 + $0xb4] sm:$0xff]
  %v41 = vld [vmem:[%s0 + $0xbc] sm:$0xff]
  %v42 = vld [vmem:[%s0 + $0xc4] sm:$0xff]
  %v43 = vld [vmem:[%s0 + $0xcc] sm:$0xff]
  %v44 = vld [vmem:[%s0 + $0xd4] sm:$0xf]
  %v45 = vld [vmem:[%s0 + $0xd8] sm:$0xff]
  %v46 = vld [vmem:[%s0 + $0xe0] sm:$0xff]
  %v47 = vld [vmem:[%s0 + $0xe8] sm:$0xff]
  %v48 = vld [vmem:[%s0 + $0xf0] sm:$0xff]
  %v49 = vld [vmem:[%s0 + $0xf8] sm:$0xf]
  %v50 = vld [vmem:[%s0 + $0xfc] sm:$0xff]
  %v51 = vld [vmem:[%s0 + $0x104] sm:$0xff]
  %v52 = vld [vmem:[%s0 + $0x10c] sm:$0xff]
  %v53 = vld [vmem:[%s0 + $0x114] sm:$0xff]
  %v54 = vld [vmem:[%s0 + $0x11c] sm:$0xf]
  %v55 = vld [vmem:[%s0 + $0x120] sm:$0xff]
  %v56 = vld [vmem:[%s0 + $0x128] sm:$0xff]
  %v57 = vld [vmem:[%s0 + $0x130] sm:$0xff]
  %v58 = vld [vmem:[%s0 + $0x138] sm:$0xff]
  %v59 = vld [vmem:[%s0 + $0x140] sm:$0xf]
  %v60 = vld [vmem:[%s0 + $0x144] sm:$0xff]
  %v61 = vld [vmem:[%s0 + $0x14c] sm:$0xff]
  %v62 = vld [vmem:[%s0 + $0x154] sm:$0xff]
  %v63 = vld [vmem:[%s0 + $0x15c] sm:$0xff]
  %v64 = vld [vmem:[%s0 + $0x164] sm:$0xf]
  %v65 = vld [vmem:[%s0 + $0x168] sm:$0xff]
  %v66 = vld [vmem:[%s0 + $0x170] sm:$0xff]
  %v67 = vld [vmem:[%s0 + $0x178] sm:$0xff]
  %v68 = vld [vmem:[%s0 + $0x180] sm:$0xff]
  %v69 = vld [vmem:[%s0 + $0x188] sm:$0xf]
  %v70 = vld [vmem:[%s0 + $0x18c] sm:$0xff]
  %v71 = vld [vmem:[%s0 + $0x194] sm:$0xff]
  %v72 = vld [vmem:[%s0 + $0x19c] sm:$0xff]
  %v73 = vld [vmem:[%s0 + $0x1a4] sm:$0xff]
  %v74 = vld [vmem:[%s0 + $0x1ac] sm:$0xf]
  %v75 = vld [vmem:[%s0 + $0x1b0] sm:$0xff]
  %v76 = vld [vmem:[%s0 + $0x1b8] sm:$0xff]
  %v77 = vld [vmem:[%s0 + $0x1c0] sm:$0xff]
  %v78 = vld [vmem:[%s0 + $0x1c8] sm:$0xff]
  %v79 = vld [vmem:[%s0 + $0x1d0] sm:$0xf]
  %v80 = vld [vmem:[%s0 + $0x1d4] sm:$0xff]
  %v81 = vld [vmem:[%s0 + $0x1dc] sm:$0xff]
  %v82 = vld [vmem:[%s0 + $0x1e4] sm:$0xff]
  %v83 = vld [vmem:[%s0 + $0x1ec] sm:$0xff]
  %v84 = vld [vmem:[%s0 + $0x1f4] sm:$0xf]
  %v85 = vld [vmem:[%s0 + $0x1f8] sm:$0xff]
  %v86 = vld [vmem:[%s0 + $0x200] sm:$0xff]
  %v87 = vld [vmem:[%s0 + $0x208] sm:$0xff]
  %v88 = vld [vmem:[%s0 + $0x210] sm:$0xff]
  %v89 = vld [vmem:[%s0 + $0x218] sm:$0xf]
  %v90 = vld [vmem:[%s0 + $0x21c] sm:$0xff]
  %v91 = vld [vmem:[%s0 + $0x224] sm:$0xff]
  %v92 = vld [vmem:[%s0 + $0x22c] sm:$0xff]
  %v93 = vld [vmem:[%s0 + $0x234] sm:$0xff]
  %v94 = vld [vmem:[%s0 + $0x23c] sm:$0xf]
  %v95 = vld [vmem:[%s1] sm:$0xf]
  %v96 = vld [vmem:[%s1 + $0x4] sm:$0xf]
  %v97 = vld [vmem:[%s1 + $0x8] sm:$0xf]
  %v98 = vld [vmem:[%s1 + $0xc] sm:$0xf]
  %v99 = vld [vmem:[%s1 + $0x10] sm:$0xf]
  %v100 = vld [vmem:[%s1 + $0x14] sm:$0xf]
  %v101 = vld [vmem:[%s1 + $0x18] sm:$0xf]
  %v102 = vld [vmem:[%s1 + $0x1c] sm:$0xf]
  %v103 = vld [vmem:[%s1 + $0x20] sm:$0xf]
  %v104 = vld [vmem:[%s1 + $0x24] sm:$0xf]
  %v105 = vld [vmem:[%s1 + $0x28] sm:$0xf]
  %v106 = vld [vmem:[%s1 + $0x2c] sm:$0xf]
  %v107 = vld [vmem:[%s1 + $0x30] sm:$0xf]
  %v108 = vld [vmem:[%s1 + $0x34] sm:$0xf]
  %v109 = vld [vmem:[%s1 + $0x38] sm:$0xf]
  %v110 = vld [vmem:[%s1 + $0x3c] sm:$0xf]
  %v111 = vld [vmem:[%s1 + $0x40] sm:$0xf]
  %v112 = vld [vmem:[%s1 + $0x44] sm:$0xf]
  %v113 = vld [vmem:[%s1 + $0x48] sm:$0xf]
  %v114 = vld [vmem:[%s1 + $0x4c] sm:$0xf]
  %v115 = vld [vmem:[%s1 + $0x50] sm:$0xf]
  %v116 = vld [vmem:[%s1 + $0x54] sm:$0xf]
  %v117 = vld [vmem:[%s1 + $0x58] sm:$0xf]
  %v118 = vld [vmem:[%s1 + $0x5c] sm:$0xf]
  %v119 = vld [vmem:[%s1 + $0x60] sm:$0xf]
  %v120 = vld [vmem:[%s1 + $0x64] sm:$0xf]
  %v121 = vld [vmem:[%s1 + $0x68] sm:$0xf]
  %v122 = vld [vmem:[%s1 + $0x6c] sm:$0xf]
  %v123 = vld [vmem:[%s1 + $0x70] sm:$0xf]
  %v124 = vld [vmem:[%s1 + $0x74] sm:$0xf]
  %v125 = vld [vmem:[%s1 + $0x78] sm:$0xf]
  %v126 = vld [vmem:[%s1 + $0x7c] sm:$0xf]
  %v127 = vld [vmem:[%s1 + $0x80] sm:$0xf]
  %v128 = vld [vmem:[%s1 + $0x84] sm:$0xf]
  %v129 = vld [vmem:[%s1 + $0x88] sm:$0xf]
  %v130 = vld [vmem:[%s1 + $0x8c] sm:$0xf]
  %v131 = vld [vmem:[%s1 + $0x90] sm:$0xf]
  %v132 = vld [vmem:[%s1 + $0x94] sm:$0xf]
  %v133 = vld [vmem:[%s1 + $0x98] sm:$0xf]
  %v134 = vld [vmem:[%s1 + $0x9c] sm:$0xf]
  %v135 = vld [vmem:[%s1 + $0xa0] sm:$0xf]
  %v136 = vld [vmem:[%s1 + $0xa4] sm:$0xf]
  %v137 = vld [vmem:[%s1 + $0xa8] sm:$0xf]
  %v138 = vld [vmem:[%s1 + $0xac] sm:$0xf]
  %v139 = vld [vmem:[%s1 + $0xb0] sm:$0xf]
  %v140 = vld [vmem:[%s1 + $0xb4] sm:$0xf]
  %v141 = vld [vmem:[%s1 + $0xb8] sm:$0xf]
  %v142 = vld [vmem:[%s1 + $0xbc] sm:$0xf]
  %v143 = vld [vmem:[%s1 + $0xc0] sm:$0xf]
  %v144 = vld [vmem:[%s1 + $0xc4] sm:$0xf]
  %v145 = vld [vmem:[%s1 + $0xc8] sm:$0xf]
  %v146 = vld [vmem:[%s1 + $0xcc] sm:$0xf]
  %v147 = vld [vmem:[%s1 + $0xd0] sm:$0xf]
  %v148 = vld [vmem:[%s1 + $0xd4] sm:$0xf]
  %v149 = vld [vmem:[%s1 + $0xd8] sm:$0xf]
  %v150 = vld [vmem:[%s1 + $0xdc] sm:$0xf]
  %v151 = vld [vmem:[%s1 + $0xe0] sm:$0xf]
  %v152 = vld [vmem:[%s1 + $0xe4] sm:$0xf]
  %v153 = vld [vmem:[%s1 + $0xe8] sm:$0xf]
  %v154 = vld [vmem:[%s1 + $0xec] sm:$0xf]
  %v155 = vld [vmem:[%s1 + $0xf0] sm:$0xf]
  %v156 = vld [vmem:[%s1 + $0xf4] sm:$0xf]
  %v157 = vld [vmem:[%s1 + $0xf8] sm:$0xf]
  %v158 = vld [vmem:[%s1 + $0xfc] sm:$0xf]
  %v159 = vld [vmem:[%s1 + $0x100] sm:$0xf]
  %v160 = vld [vmem:[%s1 + $0x104] sm:$0xf]
  %v161 = vld [vmem:[%s1 + $0x108] sm:$0xf]
  %v162 = vld [vmem:[%s1 + $0x10c] sm:$0xf]
  %v163 = vld [vmem:[%s1 + $0x110] sm:$0xf]
  %v164 = vld [vmem:[%s1 + $0x114] sm:$0xf]
  %v165 = vld [vmem:[%s1 + $0x118] sm:$0xf]
  %v166 = vld [vmem:[%s1 + $0x11c] sm:$0xf]
  %v167 = vld [vmem:[%s1 + $0x120] sm:$0xf]
  %v168 = vld [vmem:[%s1 + $0x124] sm:$0xf]
  %v169 = vld [vmem:[%s1 + $0x128] sm:$0xf]
  %v170 = vld [vmem:[%s1 + $0x12c] sm:$0xf]
  %v171 = vld [vmem:[%s1 + $0x130] sm:$0xf]
  %v172 = vld [vmem:[%s1 + $0x134] sm:$0xf]
  %v173 = vld [vmem:[%s1 + $0x138] sm:$0xf]
  %v174 = vld [vmem:[%s1 + $0x13c] sm:$0xf]
  %v175 = vld [vmem:[%s1 + $0x140] sm:$0xf]
  %v176 = vld [vmem:[%s1 + $0x144] sm:$0xf]
  %v177 = vld [vmem:[%s1 + $0x148] sm:$0xf]
  %v178 = vld [vmem:[%s1 + $0x14c] sm:$0xf]
  %v179 = vld [vmem:[%s1 + $0x150] sm:$0xf]
  %v180 = vld [vmem:[%s1 + $0x154] sm:$0xf]
  %v181 = vld [vmem:[%s1 + $0x158] sm:$0xf]
  %v182 = vld [vmem:[%s1 + $0x15c] sm:$0xf]
  %v183 = vld [vmem:[%s1 + $0x160] sm:$0xf]
  %v184 = vld [vmem:[%s1 + $0x164] sm:$0xf]
  %v185 = vld [vmem:[%s1 + $0x168] sm:$0xf]
  %v186 = vld [vmem:[%s1 + $0x16c] sm:$0xf]
  %v187 = vld [vmem:[%s1 + $0x170] sm:$0xf]
  %v188 = vld [vmem:[%s1 + $0x174] sm:$0xf]
  %v189 = vld [vmem:[%s1 + $0x178] sm:$0xf]
  %v190 = vld [vmem:[%s1 + $0x17c] sm:$0xf]
  %v191 = vld [vmem:[%s1 + $0x180] sm:$0xf]
  %v192 = vld [vmem:[%s1 + $0x184] sm:$0xf]
  %v193 = vld [vmem:[%s1 + $0x188] sm:$0xf]
  %v194 = vld [vmem:[%s1 + $0x18c] sm:$0xf]
  %v195 = vld [vmem:[%s1 + $0x190] sm:$0xf]
  %v196 = vld [vmem:[%s1 + $0x194] sm:$0xf]
  %v197 = vld [vmem:[%s1 + $0x198] sm:$0xf]
  %v198 = vld [vmem:[%s1 + $0x19c] sm:$0xf]
  %v199 = vld [vmem:[%s1 + $0x1a0] sm:$0xf]
  %v200 = vld [vmem:[%s1 + $0x1a4] sm:$0xf]
  %v201 = vld [vmem:[%s1 + $0x1a8] sm:$0xf]
  %v202 = vld [vmem:[%s1 + $0x1ac] sm:$0xf]
  %v203 = vld [vmem:[%s1 + $0x1b0] sm:$0xf]
  %v204 = vld [vmem:[%s1 + $0x1b4] sm:$0xf]
  %v205 = vld [vmem:[%s1 + $0x1b8] sm:$0xf]
  %v206 = vld [vmem:[%s1 + $0x1bc] sm:$0xf]
  %v207 = vld [vmem:[%s1 + $0x1c0] sm:$0xf]
  %v208 = vld [vmem:[%s1 + $0x1c4] sm:$0xf]
  %v209 = vld [vmem:[%s1 + $0x1c8] sm:$0xf]
  %v210 = vld [vmem:[%s1 + $0x1cc] sm:$0xf]
  %v211 = vld [vmem:[%s1 + $0x1d0] sm:$0xf]
  %v212 = vld [vmem:[%s1 + $0x1d4] sm:$0xf]
  %v213 = vld [vmem:[%s1 + $0x1d8] sm:$0xf]
  %v214 = vld [vmem:[%s1 + $0x1dc] sm:$0xf]
  %v215 = vld [vmem:[%s1 + $0x1e0] sm:$0xf]
  %v216 = vld [vmem:[%s1 + $0x1e4] sm:$0xf]
  %v217 = vld [vmem:[%s1 + $0x1e8] sm:$0xf]
  %v218 = vld [vmem:[%s1 + $0x1ec] sm:$0xf]
  %v219 = vld [vmem:[%s1 + $0x1f0] sm:$0xf]
  %v220 = vld [vmem:[%s1 + $0x1f4] sm:$0xf]
  %v221 = vld [vmem:[%s1 + $0x1f8] sm:$0xf]
  %v222 = vld [vmem:[%s1 + $0x1fc] sm:$0xf]
  %v223 = vld [vmem:[%s1 + $0x200] sm:$0xf]
  %v224 = vld [vmem:[%s1 + $0x204] sm:$0xf]
  %v225 = vld [vmem:[%s1 + $0x208] sm:$0xf]
  %v226 = vld [vmem:[%s1 + $0x20c] sm:$0xf]
  %v227 = vld [vmem:[%s1 + $0x210] sm:$0xf]
  %v228 = vld [vmem:[%s1 + $0x214] sm:$0xf]
  %v229 = vld [vmem:[%s1 + $0x218] sm:$0xf]
  %v230 = vld [vmem:[%s1 + $0x21c] sm:$0xf]
  %v231 = vld [vmem:[%s1 + $0x220] sm:$0xf]
  %v232 = vld [vmem:[%s1 + $0x224] sm:$0xf]
  %v233 = vld [vmem:[%s1 + $0x228] sm:$0xf]
  %v234 = vld [vmem:[%s1 + $0x22c] sm:$0xf]
  %v235 = vld [vmem:[%s1 + $0x230] sm:$0xf]
  %v236 = vld [vmem:[%s1 + $0x234] sm:$0xf]
  %v237 = vld [vmem:[%s1 + $0x238] sm:$0xf]
  %v238 = vld [vmem:[%s1 + $0x23c] sm:$0xf]
  %v239 = vld [vmem:[%s2] sm:$0x1]
  %v241 = vlaneseq
  %v242 = vshrl.u32 %v241, 7
  %v243 = vsub.s32 0, %v242
  %v244 = vrot.slane %v239, %v243
  %v326 = vunpack.c.l.b16 %v15
  %v327 = vunpack.c.h.b16 %v15
  %v328 = vunpack.c.l.b16 %v16
  %v329 = vunpack.c.h.b16 %v16
  %v330 = vunpack.c.l.b16 %v17
  %v331 = vunpack.c.h.b16 %v17
  %v332 = vunpack.c.l.b16 %v18
  %v333 = vunpack.c.h.b16 %v18
  %v334 = vunpack.c.l.b16 %v19
  %v335 = vunpack.c.l.b16 %v20
  %v336 = vunpack.c.h.b16 %v20
  %v337 = vunpack.c.l.b16 %v21
  %v338 = vunpack.c.h.b16 %v21
  %v339 = vunpack.c.l.b16 %v22
  %v340 = vunpack.c.h.b16 %v22
  %v341 = vunpack.c.l.b16 %v23
  %v342 = vunpack.c.h.b16 %v23
  %v343 = vunpack.c.l.b16 %v24
  %v344 = vunpack.c.l.b16 %v25
  %v345 = vunpack.c.h.b16 %v25
  %v346 = vunpack.c.l.b16 %v26
  %v347 = vunpack.c.h.b16 %v26
  %v348 = vunpack.c.l.b16 %v27
  %v349 = vunpack.c.h.b16 %v27
  %v350 = vunpack.c.l.b16 %v28
  %v351 = vunpack.c.h.b16 %v28
  %v352 = vunpack.c.l.b16 %v29
  %v353 = vunpack.c.l.b16 %v30
  %v354 = vunpack.c.h.b16 %v30
  %v355 = vunpack.c.l.b16 %v31
  %v356 = vunpack.c.h.b16 %v31
  %v357 = vunpack.c.l.b16 %v32
  %v358 = vunpack.c.h.b16 %v32
  %v359 = vunpack.c.l.b16 %v33
  %v360 = vunpack.c.h.b16 %v33
  %v361 = vunpack.c.l.b16 %v34
  %v362 = vunpack.c.l.b16 %v35
  %v363 = vunpack.c.h.b16 %v35
  %v364 = vunpack.c.l.b16 %v36
  %v365 = vunpack.c.h.b16 %v36
  %v366 = vunpack.c.l.b16 %v37
  %v367 = vunpack.c.h.b16 %v37
  %v368 = vunpack.c.l.b16 %v38
  %v369 = vunpack.c.h.b16 %v38
  %v370 = vunpack.c.l.b16 %v39
  %v371 = vunpack.c.l.b16 %v40
  %v372 = vunpack.c.h.b16 %v40
  %v373 = vunpack.c.l.b16 %v41
  %v374 = vunpack.c.h.b16 %v41
  %v375 = vunpack.c.l.b16 %v42
  %v376 = vunpack.c.h.b16 %v42
  %v377 = vunpack.c.l.b16 %v43
  %v378 = vunpack.c.h.b16 %v43
  %v379 = vunpack.c.l.b16 %v44
  %v380 = vunpack.c.l.b16 %v45
  %v381 = vunpack.c.h.b16 %v45
  %v382 = vunpack.c.l.b16 %v46
  %v383 = vunpack.c.h.b16 %v46
  %v384 = vunpack.c.l.b16 %v47
  %v385 = vunpack.c.h.b16 %v47
  %v386 = vunpack.c.l.b16 %v48
  %v387 = vunpack.c.h.b16 %v48
  %v388 = vunpack.c.l.b16 %v49
  %v389 = vunpack.c.l.b16 %v50
  %v390 = vunpack.c.h.b16 %v50
  %v391 = vunpack.c.l.b16 %v51
  %v392 = vunpack.c.h.b16 %v51
  %v393 = vunpack.c.l.b16 %v52
  %v394 = vunpack.c.h.b16 %v52
  %v395 = vunpack.c.l.b16 %v53
  %v396 = vunpack.c.h.b16 %v53
  %v397 = vunpack.c.l.b16 %v54
  %v398 = vunpack.c.l.b16 %v55
  %v399 = vunpack.c.h.b16 %v55
  %v400 = vunpack.c.l.b16 %v56
  %v401 = vunpack.c.h.b16 %v56
  %v402 = vunpack.c.l.b16 %v57
  %v403 = vunpack.c.h.b16 %v57
  %v404 = vunpack.c.l.b16 %v58
  %v405 = vunpack.c.h.b16 %v58
  %v406 = vunpack.c.l.b16 %v59
  %v407 = vunpack.c.l.b16 %v60
  %v408 = vunpack.c.h.b16 %v60
  %v409 = vunpack.c.l.b16 %v61
  %v410 = vunpack.c.h.b16 %v61
  %v411 = vunpack.c.l.b16 %v62
  %v412 = vunpack.c.h.b16 %v62
  %v413 = vunpack.c.l.b16 %v63
  %v414 = vunpack.c.h.b16 %v63
  %v415 = vunpack.c.l.b16 %v64
  %v416 = vunpack.c.l.b16 %v65
  %v417 = vunpack.c.h.b16 %v65
  %v418 = vunpack.c.l.b16 %v66
  %v419 = vunpack.c.h.b16 %v66
  %v420 = vunpack.c.l.b16 %v67
  %v421 = vunpack.c.h.b16 %v67
  %v422 = vunpack.c.l.b16 %v68
  %v423 = vunpack.c.h.b16 %v68
  %v424 = vunpack.c.l.b16 %v69
  %v425 = vunpack.c.l.b16 %v70
  %v426 = vunpack.c.h.b16 %v70
  %v427 = vunpack.c.l.b16 %v71
  %v428 = vunpack.c.h.b16 %v71
  %v429 = vunpack.c.l.b16 %v72
  %v430 = vunpack.c.h.b16 %v72
  %v431 = vunpack.c.l.b16 %v73
  %v432 = vunpack.c.h.b16 %v73
  %v433 = vunpack.c.l.b16 %v74
  %v434 = vunpack.c.l.b16 %v75
  %v435 = vunpack.c.h.b16 %v75
  %v436 = vunpack.c.l.b16 %v76
  %v437 = vunpack.c.h.b16 %v76
  %v438 = vunpack.c.l.b16 %v77
  %v439 = vunpack.c.h.b16 %v77
  %v440 = vunpack.c.l.b16 %v78
  %v441 = vunpack.c.h.b16 %v78
  %v442 = vunpack.c.l.b16 %v79
  %v443 = vunpack.c.l.b16 %v80
  %v444 = vunpack.c.h.b16 %v80
  %v445 = vunpack.c.l.b16 %v81
  %v446 = vunpack.c.h.b16 %v81
  %v447 = vunpack.c.l.b16 %v82
  %v448 = vunpack.c.h.b16 %v82
  %v449 = vunpack.c.l.b16 %v83
  %v450 = vunpack.c.h.b16 %v83
  %v451 = vunpack.c.l.b16 %v84
  %v452 = vunpack.c.l.b16 %v85
  %v453 = vunpack.c.h.b16 %v85
  %v454 = vunpack.c.l.b16 %v86
  %v455 = vunpack.c.h.b16 %v86
  %v456 = vunpack.c.l.b16 %v87
  %v457 = vunpack.c.h.b16 %v87
  %v458 = vunpack.c.l.b16 %v88
  %v459 = vunpack.c.h.b16 %v88
  %v460 = vunpack.c.l.b16 %v89
  %v461 = vunpack.c.l.b16 %v90
  %v462 = vunpack.c.h.b16 %v90
  %v463 = vunpack.c.l.b16 %v91
  %v464 = vunpack.c.h.b16 %v91
  %v465 = vunpack.c.l.b16 %v92
  %v466 = vunpack.c.h.b16 %v92
  %v467 = vunpack.c.l.b16 %v93
  %v468 = vunpack.c.h.b16 %v93
  %v469 = vunpack.c.l.b16 %v94
  %v470 = vpack.c.b16 %v335, %v326
  %v471 = vpack.c.b16 %v336, %v327
  %v472 = vpack.c.b16 %v337, %v328
  %v473 = vpack.c.b16 %v338, %v329
  %v474 = vpack.c.b16 %v339, %v330
  %v475 = vpack.c.b16 %v340, %v331
  %v476 = vpack.c.b16 %v341, %v332
  %v477 = vpack.c.b16 %v342, %v333
  %v478 = vpack.c.b16 %v343, %v334
  %v479 = vpack.c.b16 %v353, %v344
  %v480 = vpack.c.b16 %v354, %v345
  %v481 = vpack.c.b16 %v355, %v346
  %v482 = vpack.c.b16 %v356, %v347
  %v483 = vpack.c.b16 %v357, %v348
  %v484 = vpack.c.b16 %v358, %v349
  %v485 = vpack.c.b16 %v359, %v350
  %v486 = vpack.c.b16 %v360, %v351
  %v487 = vpack.c.b16 %v361, %v352
  %v488 = vpack.c.b16 %v371, %v362
  %v489 = vpack.c.b16 %v372, %v363
  %v490 = vpack.c.b16 %v373, %v364
  %v491 = vpack.c.b16 %v374, %v365
  %v492 = vpack.c.b16 %v375, %v366
  %v493 = vpack.c.b16 %v376, %v367
  %v494 = vpack.c.b16 %v377, %v368
  %v495 = vpack.c.b16 %v378, %v369
  %v496 = vpack.c.b16 %v379, %v370
  %v497 = vpack.c.b16 %v389, %v380
  %v498 = vpack.c.b16 %v390, %v381
  %v499 = vpack.c.b16 %v391, %v382
  %v500 = vpack.c.b16 %v392, %v383
  %v501 = vpack.c.b16 %v393, %v384
  %v502 = vpack.c.b16 %v394, %v385
  %v503 = vpack.c.b16 %v395, %v386
  %v504 = vpack.c.b16 %v396, %v387
  %v505 = vpack.c.b16 %v397, %v388
  %v506 = vpack.c.b16 %v407, %v398
  %v507 = vpack.c.b16 %v408, %v399
  %v508 = vpack.c.b16 %v409, %v400
  %v509 = vpack.c.b16 %v410, %v401
  %v510 = vpack.c.b16 %v411, %v402
  %v511 = vpack.c.b16 %v412, %v403
  %v512 = vpack.c.b16 %v413, %v404
  %v513 = vpack.c.b16 %v414, %v405
  %v514 = vpack.c.b16 %v415, %v406
  %v515 = vpack.c.b16 %v425, %v416
  %v516 = vpack.c.b16 %v426, %v417
  %v517 = vpack.c.b16 %v427, %v418
  %v518 = vpack.c.b16 %v428, %v419
  %v519 = vpack.c.b16 %v429, %v420
  %v520 = vpack.c.b16 %v430, %v421
  %v521 = vpack.c.b16 %v431, %v422
  %v522 = vpack.c.b16 %v432, %v423
  %v523 = vpack.c.b16 %v433, %v424
  %v524 = vpack.c.b16 %v443, %v434
  %v525 = vpack.c.b16 %v444, %v435
  %v526 = vpack.c.b16 %v445, %v436
  %v527 = vpack.c.b16 %v446, %v437
  %v528 = vpack.c.b16 %v447, %v438
  %v529 = vpack.c.b16 %v448, %v439
  %v530 = vpack.c.b16 %v449, %v440
  %v531 = vpack.c.b16 %v450, %v441
  %v532 = vpack.c.b16 %v451, %v442
  %v533 = vpack.c.b16 %v461, %v452
  %v534 = vpack.c.b16 %v462, %v453
  %v535 = vpack.c.b16 %v463, %v454
  %v536 = vpack.c.b16 %v464, %v455
  %v537 = vpack.c.b16 %v465, %v456
  %v538 = vpack.c.b16 %v466, %v457
  %v539 = vpack.c.b16 %v467, %v458
  %v540 = vpack.c.b16 %v468, %v459
  %v541 = vpack.c.b16 %v469, %v460
  %v758 = vunpack.c.l.b16 %v95
  %v759 = vunpack.c.l.b16 %v96
  %v760 = vunpack.c.l.b16 %v97
  %v761 = vunpack.c.l.b16 %v98
  %v762 = vunpack.c.l.b16 %v99
  %v763 = vunpack.c.l.b16 %v100
  %v764 = vunpack.c.l.b16 %v101
  %v765 = vunpack.c.l.b16 %v102
  %v766 = vunpack.c.l.b16 %v103
  %v767 = vunpack.c.l.b16 %v104
  %v768 = vunpack.c.l.b16 %v105
  %v769 = vunpack.c.l.b16 %v106
  %v770 = vunpack.c.l.b16 %v107
  %v771 = vunpack.c.l.b16 %v108
  %v772 = vunpack.c.l.b16 %v109
  %v773 = vunpack.c.l.b16 %v110
  %v774 = vunpack.c.l.b16 %v111
  %v775 = vunpack.c.l.b16 %v112
  %v776 = vunpack.c.l.b16 %v113
  %v777 = vunpack.c.l.b16 %v114
  %v778 = vunpack.c.l.b16 %v115
  %v779 = vunpack.c.l.b16 %v116
  %v780 = vunpack.c.l.b16 %v117
  %v781 = vunpack.c.l.b16 %v118
  %v782 = vunpack.c.l.b16 %v119
  %v783 = vunpack.c.l.b16 %v120
  %v784 = vunpack.c.l.b16 %v121
  %v785 = vunpack.c.l.b16 %v122
  %v786 = vunpack.c.l.b16 %v123
  %v787 = vunpack.c.l.b16 %v124
  %v788 = vunpack.c.l.b16 %v125
  %v789 = vunpack.c.l.b16 %v126
  %v790 = vunpack.c.l.b16 %v127
  %v791 = vunpack.c.l.b16 %v128
  %v792 = vunpack.c.l.b16 %v129
  %v793 = vunpack.c.l.b16 %v130
  %v794 = vunpack.c.l.b16 %v131
  %v795 = vunpack.c.l.b16 %v132
  %v796 = vunpack.c.l.b16 %v133
  %v797 = vunpack.c.l.b16 %v134
  %v798 = vunpack.c.l.b16 %v135
  %v799 = vunpack.c.l.b16 %v136
  %v800 = vunpack.c.l.b16 %v137
  %v801 = vunpack.c.l.b16 %v138
  %v802 = vunpack.c.l.b16 %v139
  %v803 = vunpack.c.l.b16 %v140
  %v804 = vunpack.c.l.b16 %v141
  %v805 = vunpack.c.l.b16 %v142
  %v806 = vunpack.c.l.b16 %v143
  %v807 = vunpack.c.l.b16 %v144
  %v808 = vunpack.c.l.b16 %v145
  %v809 = vunpack.c.l.b16 %v146
  %v810 = vunpack.c.l.b16 %v147
  %v811 = vunpack.c.l.b16 %v148
  %v812 = vunpack.c.l.b16 %v149
  %v813 = vunpack.c.l.b16 %v150
  %v814 = vunpack.c.l.b16 %v151
  %v815 = vunpack.c.l.b16 %v152
  %v816 = vunpack.c.l.b16 %v153
  %v817 = vunpack.c.l.b16 %v154
  %v818 = vunpack.c.l.b16 %v155
  %v819 = vunpack.c.l.b16 %v156
  %v820 = vunpack.c.l.b16 %v157
  %v821 = vunpack.c.l.b16 %v158
  %v822 = vunpack.c.l.b16 %v159
  %v823 = vunpack.c.l.b16 %v160
  %v824 = vunpack.c.l.b16 %v161
  %v825 = vunpack.c.l.b16 %v162
  %v826 = vunpack.c.l.b16 %v163
  %v827 = vunpack.c.l.b16 %v164
  %v828 = vunpack.c.l.b16 %v165
  %v829 = vunpack.c.l.b16 %v166
  %v830 = vunpack.c.l.b16 %v167
  %v831 = vunpack.c.l.b16 %v168
  %v832 = vunpack.c.l.b16 %v169
  %v833 = vunpack.c.l.b16 %v170
  %v834 = vunpack.c.l.b16 %v171
  %v835 = vunpack.c.l.b16 %v172
  %v836 = vunpack.c.l.b16 %v173
  %v837 = vunpack.c.l.b16 %v174
  %v838 = vunpack.c.l.b16 %v175
  %v839 = vunpack.c.l.b16 %v176
  %v840 = vunpack.c.l.b16 %v177
  %v841 = vunpack.c.l.b16 %v178
  %v842 = vunpack.c.l.b16 %v179
  %v843 = vunpack.c.l.b16 %v180
  %v844 = vunpack.c.l.b16 %v181
  %v845 = vunpack.c.l.b16 %v182
  %v846 = vunpack.c.l.b16 %v183
  %v847 = vunpack.c.l.b16 %v184
  %v848 = vunpack.c.l.b16 %v185
  %v849 = vunpack.c.l.b16 %v186
  %v850 = vunpack.c.l.b16 %v187
  %v851 = vunpack.c.l.b16 %v188
  %v852 = vunpack.c.l.b16 %v189
  %v853 = vunpack.c.l.b16 %v190
  %v854 = vunpack.c.l.b16 %v191
  %v855 = vunpack.c.l.b16 %v192
  %v856 = vunpack.c.l.b16 %v193
  %v857 = vunpack.c.l.b16 %v194
  %v858 = vunpack.c.l.b16 %v195
  %v859 = vunpack.c.l.b16 %v196
  %v860 = vunpack.c.l.b16 %v197
  %v861 = vunpack.c.l.b16 %v198
  %v862 = vunpack.c.l.b16 %v199
  %v863 = vunpack.c.l.b16 %v200
  %v864 = vunpack.c.l.b16 %v201
  %v865 = vunpack.c.l.b16 %v202
  %v866 = vunpack.c.l.b16 %v203
  %v867 = vunpack.c.l.b16 %v204
  %v868 = vunpack.c.l.b16 %v205
  %v869 = vunpack.c.l.b16 %v206
  %v870 = vunpack.c.l.b16 %v207
  %v871 = vunpack.c.l.b16 %v208
  %v872 = vunpack.c.l.b16 %v209
  %v873 = vunpack.c.l.b16 %v210
  %v874 = vunpack.c.l.b16 %v211
  %v875 = vunpack.c.l.b16 %v212
  %v876 = vunpack.c.l.b16 %v213
  %v877 = vunpack.c.l.b16 %v214
  %v878 = vunpack.c.l.b16 %v215
  %v879 = vunpack.c.l.b16 %v216
  %v880 = vunpack.c.l.b16 %v217
  %v881 = vunpack.c.l.b16 %v218
  %v882 = vunpack.c.l.b16 %v219
  %v883 = vunpack.c.l.b16 %v220
  %v884 = vunpack.c.l.b16 %v221
  %v885 = vunpack.c.l.b16 %v222
  %v886 = vunpack.c.l.b16 %v223
  %v887 = vunpack.c.l.b16 %v224
  %v888 = vunpack.c.l.b16 %v225
  %v889 = vunpack.c.l.b16 %v226
  %v890 = vunpack.c.l.b16 %v227
  %v891 = vunpack.c.l.b16 %v228
  %v892 = vunpack.c.l.b16 %v229
  %v893 = vunpack.c.l.b16 %v230
  %v894 = vunpack.c.l.b16 %v231
  %v895 = vunpack.c.l.b16 %v232
  %v896 = vunpack.c.l.b16 %v233
  %v897 = vunpack.c.l.b16 %v234
  %v898 = vunpack.c.l.b16 %v235
  %v899 = vunpack.c.l.b16 %v236
  %v900 = vunpack.c.l.b16 %v237
  %v901 = vunpack.c.l.b16 %v238
  %v902 = vpack.c.b16 %v759, %v758
  %v903 = vpack.c.b16 %v761, %v760
  %v904 = vpack.c.b16 %v763, %v762
  %v905 = vpack.c.b16 %v765, %v764
  %v906 = vpack.c.b16 %v767, %v766
  %v907 = vpack.c.b16 %v769, %v768
  %v908 = vpack.c.b16 %v771, %v770
  %v909 = vpack.c.b16 %v773, %v772
  %v910 = vpack.c.b16 %v775, %v774
  %v911 = vpack.c.b16 %v777, %v776
  %v912 = vpack.c.b16 %v779, %v778
  %v913 = vpack.c.b16 %v781, %v780
  %v914 = vpack.c.b16 %v783, %v782
  %v915 = vpack.c.b16 %v785, %v784
  %v916 = vpack.c.b16 %v787, %v786
  %v917 = vpack.c.b16 %v789, %v788
  %v918 = vpack.c.b16 %v791, %v790
  %v919 = vpack.c.b16 %v793, %v792
  %v920 = vpack.c.b16 %v795, %v794
  %v921 = vpack.c.b16 %v797, %v796
  %v922 = vpack.c.b16 %v799, %v798
  %v923 = vpack.c.b16 %v801, %v800
  %v924 = vpack.c.b16 %v803, %v802
  %v925 = vpack.c.b16 %v805, %v804
  %v926 = vpack.c.b16 %v807, %v806
  %v927 = vpack.c.b16 %v809, %v808
  %v928 = vpack.c.b16 %v811, %v810
  %v929 = vpack.c.b16 %v813, %v812
  %v930 = vpack.c.b16 %v815, %v814
  %v931 = vpack.c.b16 %v817, %v816
  %v932 = vpack.c.b16 %v819, %v818
  %v933 = vpack.c.b16 %v821, %v820
  %v934 = vpack.c.b16 %v823, %v822
  %v935 = vpack.c.b16 %v825, %v824
  %v936 = vpack.c.b16 %v827, %v826
  %v937 = vpack.c.b16 %v829, %v828
  %v938 = vpack.c.b16 %v831, %v830
  %v939 = vpack.c.b16 %v833, %v832
  %v940 = vpack.c.b16 %v835, %v834
  %v941 = vpack.c.b16 %v837, %v836
  %v942 = vpack.c.b16 %v839, %v838
  %v943 = vpack.c.b16 %v841, %v840
  %v944 = vpack.c.b16 %v843, %v842
  %v945 = vpack.c.b16 %v845, %v844
  %v946 = vpack.c.b16 %v847, %v846
  %v947 = vpack.c.b16 %v849, %v848
  %v948 = vpack.c.b16 %v851, %v850
  %v949 = vpack.c.b16 %v853, %v852
  %v950 = vpack.c.b16 %v855, %v854
  %v951 = vpack.c.b16 %v857, %v856
  %v952 = vpack.c.b16 %v859, %v858
  %v953 = vpack.c.b16 %v861, %v860
  %v954 = vpack.c.b16 %v863, %v862
  %v955 = vpack.c.b16 %v865, %v864
  %v956 = vpack.c.b16 %v867, %v866
  %v957 = vpack.c.b16 %v869, %v868
  %v958 = vpack.c.b16 %v871, %v870
  %v959 = vpack.c.b16 %v873, %v872
  %v960 = vpack.c.b16 %v875, %v874
  %v961 = vpack.c.b16 %v877, %v876
  %v962 = vpack.c.b16 %v879, %v878
  %v963 = vpack.c.b16 %v881, %v880
  %v964 = vpack.c.b16 %v883, %v882
  %v965 = vpack.c.b16 %v885, %v884
  %v966 = vpack.c.b16 %v887, %v886
  %v967 = vpack.c.b16 %v889, %v888
  %v968 = vpack.c.b16 %v891, %v890
  %v969 = vpack.c.b16 %v893, %v892
  %v970 = vpack.c.b16 %v895, %v894
  %v971 = vpack.c.b16 %v897, %v896
  %v972 = vpack.c.b16 %v899, %v898
  %v973 = vpack.c.b16 %v901, %v900
  %1046 = vmatprep.subr.bf16.mxu0 0
  %1047 = vmatpush1.bf16.msra.mxu0 %v909
  %1048 = vmatprep.subr.bf16.mxu0 0
  %1049 = vmatpush1.bf16.msra.mxu0 %v908
  %1050 = vmatprep.subr.bf16.mxu0 0
  %1051 = vmatpush1.bf16.msra.mxu0 %v907
  %1052 = vmatprep.subr.bf16.mxu0 0
  %1053 = vmatpush1.bf16.msra.mxu0 %v906
  %1054 = vmatprep.subr.bf16.mxu0 0
  %1055 = vmatpush1.bf16.msra.mxu0 %v905
  %1056 = vmatprep.subr.bf16.mxu0 0
  %1057 = vmatpush1.bf16.msra.mxu0 %v904
  %1058 = vmatprep.subr.bf16.mxu0 0
  %1059 = vmatpush1.bf16.msra.mxu0 %v903
  %1060 = vmatprep.subr.bf16.mxu0 0
  %1061 = vmatpush1.bf16.msra.mxu0 %v902
  %1062 = vmatprep.subr.bf16.mxu0 0
  %1063 = vmatpush2.bf16.msra.mxu0 %v917
  %1064 = vmatprep.subr.bf16.mxu0 0
  %1065 = vmatpush2.bf16.msra.mxu0 %v916
  %1066 = vmatprep.subr.bf16.mxu0 0
  %1067 = vmatpush2.bf16.msra.mxu0 %v915
  %1068 = vmatprep.subr.bf16.mxu0 0
  %1069 = vmatpush2.bf16.msra.mxu0 %v914
  %1070 = vmatprep.subr.bf16.mxu0 0
  %1071 = vmatpush2.bf16.msra.mxu0 %v913
  %1072 = vmatprep.subr.bf16.mxu0 0
  %1073 = vmatpush2.bf16.msra.mxu0 %v912
  %1074 = vmatprep.subr.bf16.mxu0 0
  %1075 = vmatpush2.bf16.msra.mxu0 %v911
  %1076 = vmatprep.subr.bf16.mxu0 0
  %1077 = vmatpush2.bf16.msra.mxu0 %v910
  %1078 = vmatprep.mubr.bf16.mxu0 %v471
  %1079 = vmatmul.mubr.bf16.gmra.mxu0 %v470
  %v1080 = vpop.f32.mrf.mxu0
  %v1081 = vadd.f32 %v244, %v1080
  %v1082 = vpop.f32.mrf.mxu0
  %v1083 = vpop.f32.mrf.mxu0
  %v1084 = vadd.f32 %v244, %v1083
  %v1085 = vpop.f32.mrf.mxu0
  %1086 = vmatprep.mubr.bf16.mxu0 %v480
  %1087 = vmatmul.mubr.bf16.gmra.mxu0 %v479
  %v1088 = vpop.f32.mrf.mxu0
  %v1089 = vadd.f32 %v244, %v1088
  %v1090 = vpop.f32.mrf.mxu0
  %v1091 = vpop.f32.mrf.mxu0
  %v1092 = vadd.f32 %v244, %v1091
  %v1093 = vpop.f32.mrf.mxu0
  %1094 = vmatprep.mubr.bf16.mxu0 %v489
  %1095 = vmatmul.mubr.bf16.gmra.mxu0 %v488
  %v1096 = vpop.f32.mrf.mxu0
  %v1097 = vadd.f32 %v244, %v1096
  %v1098 = vpop.f32.mrf.mxu0
  %v1099 = vpop.f32.mrf.mxu0
  %v1100 = vadd.f32 %v244, %v1099
  %v1101 = vpop.f32.mrf.mxu0
  %1102 = vmatprep.mubr.bf16.mxu0 %v498
  %1103 = vmatmul.mubr.bf16.gmra.mxu0 %v497
  %v1104 = vpop.f32.mrf.mxu0
  %v1105 = vadd.f32 %v244, %v1104
  %v1106 = vpop.f32.mrf.mxu0
  %v1107 = vpop.f32.mrf.mxu0
  %v1108 = vadd.f32 %v244, %v1107
  %v1109 = vpop.f32.mrf.mxu0
  %1110 = vmatprep.mubr.bf16.mxu0 %v507
  %1111 = vmatmul.mubr.bf16.gmra.mxu0 %v506
  %v1112 = vpop.f32.mrf.mxu0
  %v1113 = vadd.f32 %v244, %v1112
  %v1114 = vpop.f32.mrf.mxu0
  %v1115 = vpop.f32.mrf.mxu0
  %v1116 = vadd.f32 %v244, %v1115
  %v1117 = vpop.f32.mrf.mxu0
  %1118 = vmatprep.mubr.bf16.mxu0 %v516
  %1119 = vmatmul.mubr.bf16.gmra.mxu0 %v515
  %v1120 = vpop.f32.mrf.mxu0
  %v1121 = vadd.f32 %v244, %v1120
  %v1122 = vpop.f32.mrf.mxu0
  %v1123 = vpop.f32.mrf.mxu0
  %v1124 = vadd.f32 %v244, %v1123
  %v1125 = vpop.f32.mrf.mxu0
  %1126 = vmatprep.mubr.bf16.mxu0 %v525
  %1127 = vmatmul.mubr.bf16.gmra.mxu0 %v524
  %v1128 = vpop.f32.mrf.mxu0
  %v1129 = vadd.f32 %v244, %v1128
  %v1130 = vpop.f32.mrf.mxu0
  %v1131 = vpop.f32.mrf.mxu0
  %v1132 = vadd.f32 %v244, %v1131
  %v1133 = vpop.f32.mrf.mxu0
  %1134 = vmatprep.mubr.bf16.mxu0 %v534
  %1135 = vmatmul.mubr.bf16.gmra.mxu0 %v533
  %v1136 = vpop.f32.mrf.mxu0
  %v1137 = vadd.f32 %v244, %v1136
  %v1138 = vpop.f32.mrf.mxu0
  %v1139 = vpop.f32.mrf.mxu0
  %v1140 = vadd.f32 %v244, %v1139
  %v1141 = vpop.f32.mrf.mxu0
  %1142 = vdwg.mxu0
  %1143 = vmatprep.subr.bf16.mxu0 0
  %1144 = vmatpush1.bf16.msra.mxu0 %v925
  %1145 = vmatprep.subr.bf16.mxu0 0
  %1146 = vmatpush1.bf16.msra.mxu0 %v924
  %1147 = vmatprep.subr.bf16.mxu0 0
  %1148 = vmatpush1.bf16.msra.mxu0 %v923
  %1149 = vmatprep.subr.bf16.mxu0 0
  %1150 = vmatpush1.bf16.msra.mxu0 %v922
  %1151 = vmatprep.subr.bf16.mxu0 0
  %1152 = vmatpush1.bf16.msra.mxu0 %v921
  %1153 = vmatprep.subr.bf16.mxu0 0
  %1154 = vmatpush1.bf16.msra.mxu0 %v920
  %1155 = vmatprep.subr.bf16.mxu0 0
  %1156 = vmatpush1.bf16.msra.mxu0 %v919
  %1157 = vmatprep.subr.bf16.mxu0 0
  %1158 = vmatpush1.bf16.msra.mxu0 %v918
  %1159 = vmatprep.subr.bf16.mxu0 0
  %1160 = vmatpush2.bf16.msra.mxu0 %v933
  %1161 = vmatprep.subr.bf16.mxu0 0
  %1162 = vmatpush2.bf16.msra.mxu0 %v932
  %1163 = vmatprep.subr.bf16.mxu0 0
  %1164 = vmatpush2.bf16.msra.mxu0 %v931
  %1165 = vmatprep.subr.bf16.mxu0 0
  %1166 = vmatpush2.bf16.msra.mxu0 %v930
  %1167 = vmatprep.subr.bf16.mxu0 0
  %1168 = vmatpush2.bf16.msra.mxu0 %v929
  %1169 = vmatprep.subr.bf16.mxu0 0
  %1170 = vmatpush2.bf16.msra.mxu0 %v928
  %1171 = vmatprep.subr.bf16.mxu0 0
  %1172 = vmatpush2.bf16.msra.mxu0 %v927
  %1173 = vmatprep.subr.bf16.mxu0 0
  %1174 = vmatpush2.bf16.msra.mxu0 %v926
  %1175 = vmatprep.mubr.bf16.mxu0 %v473
  %1176 = vmatmul.mubr.bf16.gmra.mxu0 %v472
  %v1177 = vpop.f32.mrf.mxu0
  %v1178 = vadd.f32 %v1081, %v1177
  %v1179 = vpop.f32.mrf.mxu0
  %v1180 = vpop.f32.mrf.mxu0
  %v1181 = vadd.f32 %v1084, %v1180
  %v1182 = vpop.f32.mrf.mxu0
  %1183 = vmatprep.mubr.bf16.mxu0 %v482
  %1184 = vmatmul.mubr.bf16.gmra.mxu0 %v481
  %v1185 = vpop.f32.mrf.mxu0
  %v1186 = vadd.f32 %v1089, %v1185
  %v1187 = vpop.f32.mrf.mxu0
  %v1188 = vpop.f32.mrf.mxu0
  %v1189 = vadd.f32 %v1092, %v1188
  %v1190 = vpop.f32.mrf.mxu0
  %1191 = vmatprep.mubr.bf16.mxu0 %v491
  %1192 = vmatmul.mubr.bf16.gmra.mxu0 %v490
  %v1193 = vpop.f32.mrf.mxu0
  %v1194 = vadd.f32 %v1097, %v1193
  %v1195 = vpop.f32.mrf.mxu0
  %v1196 = vpop.f32.mrf.mxu0
  %v1197 = vadd.f32 %v1100, %v1196
  %v1198 = vpop.f32.mrf.mxu0
  %1199 = vmatprep.mubr.bf16.mxu0 %v500
  %1200 = vmatmul.mubr.bf16.gmra.mxu0 %v499
  %v1201 = vpop.f32.mrf.mxu0
  %v1202 = vadd.f32 %v1105, %v1201
  %v1203 = vpop.f32.mrf.mxu0
  %v1204 = vpop.f32.mrf.mxu0
  %v1205 = vadd.f32 %v1108, %v1204
  %v1206 = vpop.f32.mrf.mxu0
  %1207 = vmatprep.mubr.bf16.mxu0 %v509
  %1208 = vmatmul.mubr.bf16.gmra.mxu0 %v508
  %v1209 = vpop.f32.mrf.mxu0
  %v1210 = vadd.f32 %v1113, %v1209
  %v1211 = vpop.f32.mrf.mxu0
  %v1212 = vpop.f32.mrf.mxu0
  %v1213 = vadd.f32 %v1116, %v1212
  %v1214 = vpop.f32.mrf.mxu0
  %1215 = vmatprep.mubr.bf16.mxu0 %v518
  %1216 = vmatmul.mubr.bf16.gmra.mxu0 %v517
  %v1217 = vpop.f32.mrf.mxu0
  %v1218 = vadd.f32 %v1121, %v1217
  %v1219 = vpop.f32.mrf.mxu0
  %v1220 = vpop.f32.mrf.mxu0
  %v1221 = vadd.f32 %v1124, %v1220
  %v1222 = vpop.f32.mrf.mxu0
  %1223 = vmatprep.mubr.bf16.mxu0 %v527
  %1224 = vmatmul.mubr.bf16.gmra.mxu0 %v526
  %v1225 = vpop.f32.mrf.mxu0
  %v1226 = vadd.f32 %v1129, %v1225
  %v1227 = vpop.f32.mrf.mxu0
  %v1228 = vpop.f32.mrf.mxu0
  %v1229 = vadd.f32 %v1132, %v1228
  %v1230 = vpop.f32.mrf.mxu0
  %1231 = vmatprep.mubr.bf16.mxu0 %v536
  %1232 = vmatmul.mubr.bf16.gmra.mxu0 %v535
  %v1233 = vpop.f32.mrf.mxu0
  %v1234 = vadd.f32 %v1137, %v1233
  %v1235 = vpop.f32.mrf.mxu0
  %v1236 = vpop.f32.mrf.mxu0
  %v1237 = vadd.f32 %v1140, %v1236
  %v1238 = vpop.f32.mrf.mxu0
  %1239 = vdwg.mxu0
  %1240 = vmatprep.subr.bf16.mxu0 0
  %1241 = vmatpush1.bf16.msra.mxu0 %v941
  %1242 = vmatprep.subr.bf16.mxu0 0
  %1243 = vmatpush1.bf16.msra.mxu0 %v940
  %1244 = vmatprep.subr.bf16.mxu0 0
  %1245 = vmatpush1.bf16.msra.mxu0 %v939
  %1246 = vmatprep.subr.bf16.mxu0 0
  %1247 = vmatpush1.bf16.msra.mxu0 %v938
  %1248 = vmatprep.subr.bf16.mxu0 0
  %1249 = vmatpush1.bf16.msra.mxu0 %v937
  %1250 = vmatprep.subr.bf16.mxu0 0
  %1251 = vmatpush1.bf16.msra.mxu0 %v936
  %1252 = vmatprep.subr.bf16.mxu0 0
  %1253 = vmatpush1.bf16.msra.mxu0 %v935
  %1254 = vmatprep.subr.bf16.mxu0 0
  %1255 = vmatpush1.bf16.msra.mxu0 %v934
  %1256 = vmatprep.subr.bf16.mxu0 0
  %1257 = vmatpush2.bf16.msra.mxu0 %v949
  %1258 = vmatprep.subr.bf16.mxu0 0
  %1259 = vmatpush2.bf16.msra.mxu0 %v948
  %1260 = vmatprep.subr.bf16.mxu0 0
  %1261 = vmatpush2.bf16.msra.mxu0 %v947
  %1262 = vmatprep.subr.bf16.mxu0 0
  %1263 = vmatpush2.bf16.msra.mxu0 %v946
  %1264 = vmatprep.subr.bf16.mxu0 0
  %1265 = vmatpush2.bf16.msra.mxu0 %v945
  %1266 = vmatprep.subr.bf16.mxu0 0
  %1267 = vmatpush2.bf16.msra.mxu0 %v944
  %1268 = vmatprep.subr.bf16.mxu0 0
  %1269 = vmatpush2.bf16.msra.mxu0 %v943
  %1270 = vmatprep.subr.bf16.mxu0 0
  %1271 = vmatpush2.bf16.msra.mxu0 %v942
  %1272 = vmatprep.mubr.bf16.mxu0 %v475
  %1273 = vmatmul.mubr.bf16.gmra.mxu0 %v474
  %v1274 = vpop.f32.mrf.mxu0
  %v1275 = vadd.f32 %v1178, %v1274
  %v1276 = vpop.f32.mrf.mxu0
  %v1277 = vpop.f32.mrf.mxu0
  %v1278 = vadd.f32 %v1181, %v1277
  %v1279 = vpop.f32.mrf.mxu0
  %1280 = vmatprep.mubr.bf16.mxu0 %v484
  %1281 = vmatmul.mubr.bf16.gmra.mxu0 %v483
  %v1282 = vpop.f32.mrf.mxu0
  %v1283 = vadd.f32 %v1186, %v1282
  %v1284 = vpop.f32.mrf.mxu0
  %v1285 = vpop.f32.mrf.mxu0
  %v1286 = vadd.f32 %v1189, %v1285
  %v1287 = vpop.f32.mrf.mxu0
  %1288 = vmatprep.mubr.bf16.mxu0 %v493
  %1289 = vmatmul.mubr.bf16.gmra.mxu0 %v492
  %v1290 = vpop.f32.mrf.mxu0
  %v1291 = vadd.f32 %v1194, %v1290
  %v1292 = vpop.f32.mrf.mxu0
  %v1293 = vpop.f32.mrf.mxu0
  %v1294 = vadd.f32 %v1197, %v1293
  %v1295 = vpop.f32.mrf.mxu0
  %1296 = vmatprep.mubr.bf16.mxu0 %v502
  %1297 = vmatmul.mubr.bf16.gmra.mxu0 %v501
  %v1298 = vpop.f32.mrf.mxu0
  %v1299 = vadd.f32 %v1202, %v1298
  %v1300 = vpop.f32.mrf.mxu0
  %v1301 = vpop.f32.mrf.mxu0
  %v1302 = vadd.f32 %v1205, %v1301
  %v1303 = vpop.f32.mrf.mxu0
  %1304 = vmatprep.mubr.bf16.mxu0 %v511
  %1305 = vmatmul.mubr.bf16.gmra.mxu0 %v510
  %v1306 = vpop.f32.mrf.mxu0
  %v1307 = vadd.f32 %v1210, %v1306
  %v1308 = vpop.f32.mrf.mxu0
  %v1309 = vpop.f32.mrf.mxu0
  %v1310 = vadd.f32 %v1213, %v1309
  %v1311 = vpop.f32.mrf.mxu0
  %1312 = vmatprep.mubr.bf16.mxu0 %v520
  %1313 = vmatmul.mubr.bf16.gmra.mxu0 %v519
  %v1314 = vpop.f32.mrf.mxu0
  %v1315 = vadd.f32 %v1218, %v1314
  %v1316 = vpop.f32.mrf.mxu0
  %v1317 = vpop.f32.mrf.mxu0
  %v1318 = vadd.f32 %v1221, %v1317
  %v1319 = vpop.f32.mrf.mxu0
  %1320 = vmatprep.mubr.bf16.mxu0 %v529
  %1321 = vmatmul.mubr.bf16.gmra.mxu0 %v528
  %v1322 = vpop.f32.mrf.mxu0
  %v1323 = vadd.f32 %v1226, %v1322
  %v1324 = vpop.f32.mrf.mxu0
  %v1325 = vpop.f32.mrf.mxu0
  %v1326 = vadd.f32 %v1229, %v1325
  %v1327 = vpop.f32.mrf.mxu0
  %1328 = vmatprep.mubr.bf16.mxu0 %v538
  %1329 = vmatmul.mubr.bf16.gmra.mxu0 %v537
  %v1330 = vpop.f32.mrf.mxu0
  %v1331 = vadd.f32 %v1234, %v1330
  %v1332 = vpop.f32.mrf.mxu0
  %v1333 = vpop.f32.mrf.mxu0
  %v1334 = vadd.f32 %v1237, %v1333
  %v1335 = vpop.f32.mrf.mxu0
  %1336 = vdwg.mxu0
  %1337 = vmatprep.subr.bf16.mxu0 0
  %1338 = vmatpush1.bf16.msra.mxu0 %v957
  %1339 = vmatprep.subr.bf16.mxu0 0
  %1340 = vmatpush1.bf16.msra.mxu0 %v956
  %1341 = vmatprep.subr.bf16.mxu0 0
  %1342 = vmatpush1.bf16.msra.mxu0 %v955
  %1343 = vmatprep.subr.bf16.mxu0 0
  %1344 = vmatpush1.bf16.msra.mxu0 %v954
  %1345 = vmatprep.subr.bf16.mxu0 0
  %1346 = vmatpush1.bf16.msra.mxu0 %v953
  %1347 = vmatprep.subr.bf16.mxu0 0
  %1348 = vmatpush1.bf16.msra.mxu0 %v952
  %1349 = vmatprep.subr.bf16.mxu0 0
  %1350 = vmatpush1.bf16.msra.mxu0 %v951
  %1351 = vmatprep.subr.bf16.mxu0 0
  %1352 = vmatpush1.bf16.msra.mxu0 %v950
  %1353 = vmatprep.subr.bf16.mxu0 0
  %1354 = vmatpush2.bf16.msra.mxu0 %v965
  %1355 = vmatprep.subr.bf16.mxu0 0
  %1356 = vmatpush2.bf16.msra.mxu0 %v964
  %1357 = vmatprep.subr.bf16.mxu0 0
  %1358 = vmatpush2.bf16.msra.mxu0 %v963
  %1359 = vmatprep.subr.bf16.mxu0 0
  %1360 = vmatpush2.bf16.msra.mxu0 %v962
  %1361 = vmatprep.subr.bf16.mxu0 0
  %1362 = vmatpush2.bf16.msra.mxu0 %v961
  %1363 = vmatprep.subr.bf16.mxu0 0
  %1364 = vmatpush2.bf16.msra.mxu0 %v960
  %1365 = vmatprep.subr.bf16.mxu0 0
  %1366 = vmatpush2.bf16.msra.mxu0 %v959
  %1367 = vmatprep.subr.bf16.mxu0 0
  %1368 = vmatpush2.bf16.msra.mxu0 %v958
  %1369 = vmatprep.mubr.bf16.mxu0 %v477
  %1370 = vmatmul.mubr.bf16.gmra.mxu0 %v476
  %v1371 = vpop.f32.mrf.mxu0
  %v1372 = vadd.f32 %v1275, %v1371
  %v1373 = vpop.f32.mrf.mxu0
  %v1374 = vpop.f32.mrf.mxu0
  %v1375 = vadd.f32 %v1278, %v1374
  %v1376 = vpop.f32.mrf.mxu0
  %1377 = vmatprep.mubr.bf16.mxu0 %v486
  %1378 = vmatmul.mubr.bf16.gmra.mxu0 %v485
  %v1379 = vpop.f32.mrf.mxu0
  %v1380 = vadd.f32 %v1283, %v1379
  %v1381 = vpop.f32.mrf.mxu0
  %v1382 = vpop.f32.mrf.mxu0
  %v1383 = vadd.f32 %v1286, %v1382
  %v1384 = vpop.f32.mrf.mxu0
  %1385 = vmatprep.mubr.bf16.mxu0 %v495
  %1386 = vmatmul.mubr.bf16.gmra.mxu0 %v494
  %v1387 = vpop.f32.mrf.mxu0
  %v1388 = vadd.f32 %v1291, %v1387
  %v1389 = vpop.f32.mrf.mxu0
  %v1390 = vpop.f32.mrf.mxu0
  %v1391 = vadd.f32 %v1294, %v1390
  %v1392 = vpop.f32.mrf.mxu0
  %1393 = vmatprep.mubr.bf16.mxu0 %v504
  %1394 = vmatmul.mubr.bf16.gmra.mxu0 %v503
  %v1395 = vpop.f32.mrf.mxu0
  %v1396 = vadd.f32 %v1299, %v1395
  %v1397 = vpop.f32.mrf.mxu0
  %v1398 = vpop.f32.mrf.mxu0
  %v1399 = vadd.f32 %v1302, %v1398
  %v1400 = vpop.f32.mrf.mxu0
  %1401 = vmatprep.mubr.bf16.mxu0 %v513
  %1402 = vmatmul.mubr.bf16.gmra.mxu0 %v512
  %v1403 = vpop.f32.mrf.mxu0
  %v1404 = vadd.f32 %v1307, %v1403
  %v1405 = vpop.f32.mrf.mxu0
  %v1406 = vpop.f32.mrf.mxu0
  %v1407 = vadd.f32 %v1310, %v1406
  %v1408 = vpop.f32.mrf.mxu0
  %1409 = vmatprep.mubr.bf16.mxu0 %v522
  %1410 = vmatmul.mubr.bf16.gmra.mxu0 %v521
  %v1411 = vpop.f32.mrf.mxu0
  %v1412 = vadd.f32 %v1315, %v1411
  %v1413 = vpop.f32.mrf.mxu0
  %v1414 = vpop.f32.mrf.mxu0
  %v1415 = vadd.f32 %v1318, %v1414
  %v1416 = vpop.f32.mrf.mxu0
  %1417 = vmatprep.mubr.bf16.mxu0 %v531
  %1418 = vmatmul.mubr.bf16.gmra.mxu0 %v530
  %v1419 = vpop.f32.mrf.mxu0
  %v1420 = vadd.f32 %v1323, %v1419
  %v1421 = vpop.f32.mrf.mxu0
  %v1422 = vpop.f32.mrf.mxu0
  %v1423 = vadd.f32 %v1326, %v1422
  %v1424 = vpop.f32.mrf.mxu0
  %1425 = vmatprep.mubr.bf16.mxu0 %v540
  %1426 = vmatmul.mubr.bf16.gmra.mxu0 %v539
  %v1427 = vpop.f32.mrf.mxu0
  %v1428 = vadd.f32 %v1331, %v1427
  %v1429 = vpop.f32.mrf.mxu0
  %v1430 = vpop.f32.mrf.mxu0
  %v1431 = vadd.f32 %v1334, %v1430
  %v1432 = vpop.f32.mrf.mxu0
  %1433 = vdwg.mxu0
  %1434 = vmatprep.subr.bf16.mxu0 0
  %1435 = vmatpush1.bf16.msra.mxu0 %v973
  %1436 = vmatprep.subr.bf16.mxu0 0
  %1437 = vmatpush1.bf16.msra.mxu0 %v972
  %1438 = vmatprep.subr.bf16.mxu0 0
  %1439 = vmatpush1.bf16.msra.mxu0 %v971
  %1440 = vmatprep.subr.bf16.mxu0 0
  %1441 = vmatpush1.bf16.msra.mxu0 %v970
  %1442 = vmatprep.subr.bf16.mxu0 0
  %1443 = vmatpush1.bf16.msra.mxu0 %v969
  %1444 = vmatprep.subr.bf16.mxu0 0
  %1445 = vmatpush1.bf16.msra.mxu0 %v968
  %1446 = vmatprep.subr.bf16.mxu0 0
  %1447 = vmatpush1.bf16.msra.mxu0 %v967
  %1448 = vmatprep.subr.bf16.mxu0 0
  %1449 = vmatpush1.bf16.msra.mxu0 %v966
  %1450 = vmatprep.subr.bf16.mxu0 0
  %1451 = vmatpush2.bf16.msra.mxu0 0
  %1452 = vmatprep.subr.bf16.mxu0 0
  %1453 = vmatpush2.bf16.msra.mxu0 0
  %1454 = vmatprep.subr.bf16.mxu0 0
  %1455 = vmatpush2.bf16.msra.mxu0 0
  %1456 = vmatprep.subr.bf16.mxu0 0
  %1457 = vmatpush2.bf16.msra.mxu0 0
  %1458 = vmatprep.subr.bf16.mxu0 0
  %1459 = vmatpush2.bf16.msra.mxu0 0
  %1460 = vmatprep.subr.bf16.mxu0 0
  %1461 = vmatpush2.bf16.msra.mxu0 0
  %1462 = vmatprep.subr.bf16.mxu0 0
  %1463 = vmatpush2.bf16.msra.mxu0 0
  %1464 = vmatprep.subr.bf16.mxu0 0
  %1465 = vmatpush2.bf16.msra.mxu0 0
  %1466 = vmatprep.mubr.bf16.mxu0 0
  %1467 = vmatmul.mubr.bf16.gmra.mxu0 %v478
  %v1468 = vpop.f32.mrf.mxu0
  %v1469 = vadd.f32 %v1372, %v1468
  %v1470 = vpop.f32.mrf.mxu0
  %v1471 = vpop.f32.mrf.mxu0
  %v1472 = vadd.f32 %v1375, %v1471
  %v1473 = vpop.f32.mrf.mxu0
  %1474 = vmatprep.mubr.bf16.mxu0 0
  %1475 = vmatmul.mubr.bf16.gmra.mxu0 %v487
  %v1476 = vpop.f32.mrf.mxu0
  %v1477 = vadd.f32 %v1380, %v1476
  %v1478 = vpop.f32.mrf.mxu0
  %v1479 = vpop.f32.mrf.mxu0
  %v1480 = vadd.f32 %v1383, %v1479
  %v1481 = vpop.f32.mrf.mxu0
  %1482 = vmatprep.mubr.bf16.mxu0 0
  %1483 = vmatmul.mubr.bf16.gmra.mxu0 %v496
  %v1484 = vpop.f32.mrf.mxu0
  %v1485 = vadd.f32 %v1388, %v1484
  %v1486 = vpop.f32.mrf.mxu0
  %v1487 = vpop.f32.mrf.mxu0
  %v1488 = vadd.f32 %v1391, %v1487
  %v1489 = vpop.f32.mrf.mxu0
  %1490 = vmatprep.mubr.bf16.mxu0 0
  %1491 = vmatmul.mubr.bf16.gmra.mxu0 %v505
  %v1492 = vpop.f32.mrf.mxu0
  %v1493 = vadd.f32 %v1396, %v1492
  %v1494 = vpop.f32.mrf.mxu0
  %v1495 = vpop.f32.mrf.mxu0
  %v1496 = vadd.f32 %v1399, %v1495
  %v1497 = vpop.f32.mrf.mxu0
  %1498 = vmatprep.mubr.bf16.mxu0 0
  %1499 = vmatmul.mubr.bf16.gmra.mxu0 %v514
  %v1500 = vpop.f32.mrf.mxu0
  %v1501 = vadd.f32 %v1404, %v1500
  %v1502 = vpop.f32.mrf.mxu0
  %v1503 = vpop.f32.mrf.mxu0
  %v1504 = vadd.f32 %v1407, %v1503
  %v1505 = vpop.f32.mrf.mxu0
  %1506 = vmatprep.mubr.bf16.mxu0 0
  %1507 = vmatmul.mubr.bf16.gmra.mxu0 %v523
  %v1508 = vpop.f32.mrf.mxu0
  %v1509 = vadd.f32 %v1412, %v1508
  %v1510 = vpop.f32.mrf.mxu0
  %v1511 = vpop.f32.mrf.mxu0
  %v1512 = vadd.f32 %v1415, %v1511
  %v1513 = vpop.f32.mrf.mxu0
  %1514 = vmatprep.mubr.bf16.mxu0 0
  %1515 = vmatmul.mubr.bf16.gmra.mxu0 %v532
  %v1516 = vpop.f32.mrf.mxu0
  %v1517 = vadd.f32 %v1420, %v1516
  %v1518 = vpop.f32.mrf.mxu0
  %v1519 = vpop.f32.mrf.mxu0
  %v1520 = vadd.f32 %v1423, %v1519
  %v1521 = vpop.f32.mrf.mxu0
  %1522 = vmatprep.mubr.bf16.mxu0 0
  %1523 = vmatmul.mubr.bf16.gmra.mxu0 %v541
  %v1524 = vpop.f32.mrf.mxu0
  %v1525 = vadd.f32 %v1428, %v1524
  %v1526 = vpop.f32.mrf.mxu0
  %v1527 = vpop.f32.mrf.mxu0
  %v1528 = vadd.f32 %v1431, %v1527
  %v1529 = vpop.f32.mrf.mxu0
  %1530 = vdwg.mxu0
  %v1531 = vmax.f32 %v1469, 0.0
  %v1532 = vmax.f32 %v1472, 0.0
  %v1533 = vmax.f32 %v1477, 0.0
  %v1534 = vmax.f32 %v1480, 0.0
  %v1535 = vmax.f32 %v1485, 0.0
  %v1536 = vmax.f32 %v1488, 0.0
  %v1537 = vmax.f32 %v1493, 0.0
  %v1538 = vmax.f32 %v1496, 0.0
  %v1539 = vmax.f32 %v1501, 0.0
  %v1540 = vmax.f32 %v1504, 0.0
  %v1541 = vmax.f32 %v1509, 0.0
  %v1542 = vmax.f32 %v1512, 0.0
  %v1543 = vmax.f32 %v1517, 0.0
  %v1544 = vmax.f32 %v1520, 0.0
  %v1545 = vmax.f32 %v1525, 0.0
  %v1546 = vmax.f32 %v1528, 0.0
  %v1547 = vpack.c.bf16 %v1532, %v1531
  %v1548 = vpack.c.bf16 %v1534, %v1533
  %v1549 = vpack.c.bf16 %v1536, %v1535
  %v1550 = vpack.c.bf16 %v1538, %v1537
  %v1551 = vpack.c.bf16 %v1540, %v1539
  %v1552 = vpack.c.bf16 %v1542, %v1541
  %v1553 = vpack.c.bf16 %v1544, %v1543
  %v1554 = vpack.c.bf16 %v1546, %v1545
  %v1563 = vunpack.c.l.b16 %v1547
  %v1564 = vunpack.c.h.b16 %v1547
  %v1565 = vunpack.c.l.b16 %v1548
  %v1566 = vunpack.c.h.b16 %v1548
  %v1567 = vunpack.c.l.b16 %v1549
  %v1568 = vunpack.c.h.b16 %v1549
  %v1569 = vunpack.c.l.b16 %v1550
  %v1570 = vunpack.c.h.b16 %v1550
  %v1571 = vunpack.c.l.b16 %v1551
  %v1572 = vunpack.c.h.b16 %v1551
  %v1573 = vunpack.c.l.b16 %v1552
  %v1574 = vunpack.c.h.b16 %v1552
  %v1575 = vunpack.c.l.b16 %v1553
  %v1576 = vunpack.c.h.b16 %v1553
  %v1577 = vunpack.c.l.b16 %v1554
  %v1578 = vunpack.c.h.b16 %v1554
  %v1579 = vpack.c.b16 %v1563, %v1563
  %v1580 = vpack.c.b16 %v1564, %v1564
  %v1581 = vpack.c.b16 %v1565, %v1565
  %v1582 = vpack.c.b16 %v1566, %v1566
  %v1583 = vpack.c.b16 %v1567, %v1567
  %v1584 = vpack.c.b16 %v1568, %v1568
  %v1585 = vpack.c.b16 %v1569, %v1569
  %v1586 = vpack.c.b16 %v1570, %v1570
  %v1587 = vpack.c.b16 %v1571, %v1571
  %v1588 = vpack.c.b16 %v1572, %v1572
  %v1589 = vpack.c.b16 %v1573, %v1573
  %v1590 = vpack.c.b16 %v1574, %v1574
  %v1591 = vpack.c.b16 %v1575, %v1575
  %v1592 = vpack.c.b16 %v1576, %v1576
  %v1593 = vpack.c.b16 %v1577, %v1577
  %v1594 = vpack.c.b16 %v1578, %v1578
  %1611 = vst [vmem:[%s3] sm:$0xf] %v1579
  %1612 = vst [vmem:[%s3 + $0x4] sm:$0xf] %v1580
  %1613 = vst [vmem:[%s3 + $0x8] sm:$0xf] %v1581
  %1614 = vst [vmem:[%s3 + $0xc] sm:$0xf] %v1582
  %1615 = vst [vmem:[%s3 + $0x10] sm:$0xf] %v1583
  %1616 = vst [vmem:[%s3 + $0x14] sm:$0xf] %v1584
  %1617 = vst [vmem:[%s3 + $0x18] sm:$0xf] %v1585
  %1618 = vst [vmem:[%s3 + $0x1c] sm:$0xf] %v1586
  %1619 = vst [vmem:[%s3 + $0x20] sm:$0xf] %v1587
  %1620 = vst [vmem:[%s3 + $0x24] sm:$0xf] %v1588
  %1621 = vst [vmem:[%s3 + $0x28] sm:$0xf] %v1589
  %1622 = vst [vmem:[%s3 + $0x2c] sm:$0xf] %v1590
  %1623 = vst [vmem:[%s3 + $0x30] sm:$0xf] %v1591
  %1624 = vst [vmem:[%s3 + $0x34] sm:$0xf] %v1592
  %1625 = vst [vmem:[%s3 + $0x38] sm:$0xf] %v1593
  %1626 = vst [vmem:[%s3 + $0x3c] sm:$0xf] %v1594
  // Predicated region
  $region14: #{encoder_forward.4} parent=0 // pred_check
    _
  $region15: #{encoder_forward.4} parent=0 // pred_check_branch
    %1628 = sbr.rel (0) target = $region17
  $region16: #{encoder_forward.4} parent=0 // pred_region
    _
  $region17: #{encoder_forward.4} parent=0 // pred_fallthru
    _
  // Predicated region
  $region18: #{encoder_forward.4} parent=0 // pred_check
    _
  $region19: #{encoder_forward.4} parent=0 // pred_check_branch
    %1630 = sbr.rel (0) target = $region21
  $region20: #{encoder_forward.4} parent=0 // pred_region
    _
  $region21: #{encoder_forward.4} parent=0 // pred_fallthru
    _

// kernel: encoder_forward.5
$region0: #{encoder_forward.5}
  #allocation0 [shape = 'u32[]', space=smem, size = 0x4, offset = 0x4, fixed_abs, tag = 'smem constant byte address 0x4 - core index']
  #allocation1 [shape = 'u32[144,128]{1,0:T(1,128)}', space=vmem, size = 0x12000, scoped, tag = 'internal scratch']
  #allocation2 [shape = 'f32[2,32]{1,0:T(2,128)}', space=vmem, size = 0x400, scoped, tag = 'scratch operand']
  %s0 = inlined_call_operand.vmem [shape: bf16[2,8192], index: 0, kind: input, shape index: {}]
  %s1 = inlined_call_operand.vmem [shape: bf16[8192,32], index: 1, kind: input, shape index: {}]
  %s2 = inlined_call_operand.vmem [shape: f32[2,32], index: 2, kind: input, shape index: {}]
  %s3 = inlined_call_operand.hbm [shape: f32[2,32], index: 3, kind: output, shape index: {}]
  %s4 = sld [smem:[#allocation0]]
  $region53: #{encoder_forward.5} parent=0
    _
  %s6 = ssub.s32 1, %s4
  %s7 = scalar_select 0, %s6, %s4
  $region1: #{encoder_forward.5} parent=0
    #allocation3 [shape = 'u8[1024]{0}', space=vmem, size = 0x400, scoped, tag = 'output window, operand 0, single buffered']
    #allocation4 [shape = 's32[2]{0}', space=sflag, size = 0x8, scoped, tag = 'scoped memory for encoder_forward.5']
    %8 = vsyncpa [#allocation4], 0
    loop: start=0, step=1, limit=6
    $region2: #{encoder_forward.5} parent=1 // loop_pre_header
      _
    $region3: #{encoder_forward.5} parent=1 // loop_header
      %s10 = sphi 0, %s14
      %p11 = scmp.ge.s32.totalorder %s10, 6
      %s20 = sphi 0, %s22
      %s23 = sphi 0, %s20
      %s24 = sphi 0, %s23
      %s40 = sphi 0, %s24
      %s46 = sphi 0, %s48
      %s49 = sphi 0, %s46
      %s50 = sphi 0, %s49
      %s66 = sphi 0, %s50
      %s70 = sphi 0, %s70
      %s72 = sphi 0, %s70
      %s73 = sphi 0, %s72
      %s87 = sphi 0, %s73
      %s91 = sphi 0, %s91
      %s93 = sphi 0, %s91
      %s94 = sphi 0, %s93
      %s108 = sphi 0, %s94
    $region4: #{encoder_forward.5} parent=1 // loop_header_branch
      %13 = sbr.rel (%p11) target = $region8
    $region5: #{encoder_forward.5} parent=1 // loop_body
      %s15 = ssub.s32 %s10, 1
      %s16 = ssub.s32 %s10, 2
      %s17 = sadd.s32 %s10, 1
      %s18 = ssub.s32 %s10, %s17
      %p19 = scmp.eq.s32.totalorder %s18, 0
      %s21 = sadd.s32 %s20, 1
      %s22 = scalar_select %p19, %s20, %s21
      %p25 = pneg %p19
      %p26 = scmp.eq.s32.totalorder %s10, 3
      %p27 = por %p25, %p26
      %p28 = scmp.ne.s32.totalorder %s20, %s23
      %p29 = scmp.eq.s32.totalorder %s10, 0
      %p30 = por %p28, %p29
      %p31 = scmp.ne.s32.totalorder %s20, %s23
      %p32 = scmp.eq.s32.totalorder %s15, 3
      %p33 = por %p31, %p32
      %p34 = scmp.ne.s32.totalorder %s23, %s24
      %p35 = scmp.eq.s32.totalorder %s15, 0
      %p36 = por %p34, %p35
      %p37 = scmp.ne.s32.totalorder %s23, %s24
      %p38 = scmp.eq.s32.totalorder %s16, 3
      %p39 = por %p37, %p38
      %p41 = scmp.ne.s32.totalorder %s24, %s40
      %p42 = scmp.eq.s32.totalorder %s16, 0
      %p43 = por %p41, %p42
      %s44 = ssub.s32 %s10, %s17
      %p45 = scmp.eq.s32.totalorder %s44, 0
      %s47 = sadd.s32 %s46, 1
      %s48 = scalar_select %p45, %s46, %s47
      %p51 = pneg %p45
      %p52 = scmp.eq.s32.totalorder %s10, 3
      %p53 = por %p51, %p52
      %p54 = scmp.ne.s32.totalorder %s46, %s49
      %p55 = scmp.eq.s32.totalorder %s10, 0
      %p56 = por %p54, %p55
      %p57 = scmp.ne.s32.totalorder %s46, %s49
      %p58 = scmp.eq.s32.totalorder %s15, 3
      %p59 = por %p57, %p58
      %p60 = scmp.ne.s32.totalorder %s49, %s50
      %p61 = scmp.eq.s32.totalorder %s15, 0
      %p62 = por %p60, %p61
      %p63 = scmp.ne.s32.totalorder %s49, %s50
      %p64 = scmp.eq.s32.totalorder %s16, 3
      %p65 = por %p63, %p64
      %p67 = scmp.ne.s32.totalorder %s50, %s66
      %p68 = scmp.eq.s32.totalorder %s16, 0
      %p69 = por %p67, %p68
      %s71 = sadd.s32 %s70, 1
      %p74 = scmp.eq.s32.totalorder %s10, 3
      %p75 = scmp.ne.s32.totalorder %s70, %s72
      %p76 = scmp.eq.s32.totalorder %s10, 0
      %p77 = por %p75, %p76
      %p78 = scmp.ne.s32.totalorder %s70, %s72
      %p79 = scmp.eq.s32.totalorder %s15, 3
      %p80 = por %p78, %p79
      %p81 = scmp.ne.s32.totalorder %s72, %s73
      %p82 = scmp.eq.s32.totalorder %s15, 0
      %p83 = por %p81, %p82
      %p84 = scmp.ne.s32.totalorder %s72, %s73
      %p85 = scmp.eq.s32.totalorder %s16, 3
      %p86 = por %p84, %p85
      %p88 = scmp.ne.s32.totalorder %s73, %s87
      %p89 = scmp.eq.s32.totalorder %s16, 0
      %p90 = por %p88, %p89
      %s92 = sadd.s32 %s91, 1
      %p95 = scmp.eq.s32.totalorder %s10, 3
      %p96 = scmp.ne.s32.totalorder %s91, %s93
      %p97 = scmp.eq.s32.totalorder %s10, 0
      %p98 = por %p96, %p97
      %p99 = scmp.ne.s32.totalorder %s91, %s93
      %p100 = scmp.eq.s32.totalorder %s15, 3
      %p101 = por %p99, %p100
      %p102 = scmp.ne.s32.totalorder %s93, %s94
      %p103 = scmp.eq.s32.totalorder %s15, 0
      %p104 = por %p102, %p103
      %p105 = scmp.ne.s32.totalorder %s93, %s94
      %p106 = scmp.eq.s32.totalorder %s16, 3
      %p107 = por %p105, %p106
      %p109 = scmp.ne.s32.totalorder %s94, %s108
      %p110 = scmp.eq.s32.totalorder %s16, 0
      %p111 = por %p109, %p110
      %p112 = scmp.le.s32.totalorder 1, %s10
      %p113 = scmp.lt.s32.totalorder %s10, 5
      %p114 = pnand %p112, %p113
      %p115 = pneg %p114
      // Predicated region
      $region9: #{encoder_forward.5} parent=5 // pred_check
        _
      $region10: #{encoder_forward.5} parent=5 // pred_check_branch
        %117 = sbr.rel (%p114) target = $region12
      $region11: #{encoder_forward.5} parent=5 // pred_region
        %s118 = ssub.s32 %s10, 1
        // Predicated region
        $region13: #{encoder_forward.5} parent=11 // pred_check
          %p119 = pneg %p83
        $region14: #{encoder_forward.5} parent=11 // pred_check_branch
          %121 = sbr.rel (%p119) target = $region16
        $region15: #{encoder_forward.5} parent=11 // pred_region
          _
        $region16: #{encoder_forward.5} parent=11 // pred_fallthru
          _
      $region12: #{encoder_forward.5} parent=5 // pred_fallthru
        _
      %p122 = scmp.lt.s32.totalorder %s10, 4
      // Predicated region
      $region17: #{encoder_forward.5} parent=5 // pred_check
        %p123 = pneg %p122
      $region18: #{encoder_forward.5} parent=5 // pred_check_branch
        %125 = sbr.rel (%p123) target = $region20
      $region19: #{encoder_forward.5} parent=5 // pred_region
        // Predicated region
        $region21: #{encoder_forward.5} parent=19 // pred_check
          %p126 = pneg %p30
        $region22: #{encoder_forward.5} parent=19 // pred_check_branch
          %128 = sbr.rel (%p126) target = $region24
        $region23: #{encoder_forward.5} parent=19 // pred_region
          %s129 = smul.u32 16, %s10
          %p130 = scmp.lt.s32.totalorder %s129, 63
          %s131 = scalar_select %p130, %s129, 63
          %s132 = scalar_lea.vmem %s0, %s131
          %s133 = smul.u32 16, %s10
        $region24: #{encoder_forward.5} parent=19 // pred_fallthru
          _
        // Predicated region
        $region25: #{encoder_forward.5} parent=19 // pred_check
          %p134 = pneg %p56
        $region26: #{encoder_forward.5} parent=19 // pred_check_branch
          %136 = sbr.rel (%p134) target = $region28
        $region27: #{encoder_forward.5} parent=19 // pred_region
          %s137 = smul.u32 256, %s10
          %p138 = scmp.lt.s32.totalorder %s137, 1023
          %s139 = scalar_select %p138, %s137, 1023
          %s140 = smul.addr %s139, 4
          %s141 = scalar_lea.vmem %s1, %s140
          %s142 = smul.u32 256, %s10
        $region28: #{encoder_forward.5} parent=19 // pred_fallthru
          _
      $region20: #{encoder_forward.5} parent=5 // pred_fallthru
        _
      %p143 = scmp.le.s32.totalorder 1, %s10
      %p144 = scmp.lt.s32.totalorder %s10, 5
      %p145 = pnand %p143, %p144
      %p146 = pneg %p145
      // Predicated region
      $region29: #{encoder_forward.5} parent=5 // pred_check
        _
      $region30: #{encoder_forward.5} parent=5 // pred_check_branch
        %148 = sbr.rel (%p145) target = $region32
      $region31: #{encoder_forward.5} parent=5 // pred_region
        %s149 = ssub.s32 %s10, 1
        %s150 = smul.u32 16, %s15
        %p151 = scmp.lt.s32.totalorder %s150, 63
        %s152 = scalar_select %p151, %s150, 63
        %s153 = scalar_lea.vmem %s0, %s152
        %p154 = pneg %p36
        %p155 = pneg %p33
        %s156 = smul.u32 256, %s15
        %p157 = scmp.lt.s32.totalorder %s156, 1023
        %s158 = scalar_select %p157, %s156, 1023
        %s159 = smul.addr %s158, 4
        %s160 = scalar_lea.vmem %s1, %s159
        %p161 = pneg %p62
        %p162 = pneg %p59
        %p163 = pneg %p83
        %p164 = pneg %p80
        %p165 = pneg %p104
        %p166 = pneg %p101
        %s167 = smul.u32 16, %s15
        %p168 = scmp.lt.s32.totalorder %s167, 63
        %s169 = scalar_select %p168, %s167, 63
        %s170 = scalar_lea.vmem %s0, %s169
        %s171 = smul.u32 16, %s15
        %s172 = smul.u32 256, %s15
        %p173 = scmp.lt.s32.totalorder %s172, 1023
        %s174 = scalar_select %p173, %s172, 1023
        %s175 = smul.addr %s174, 4
        %s176 = scalar_lea.vmem %s1, %s175
        %s177 = smul.u32 256, %s15
        %p179 = scmp.eq.s32.totalorder %s15, 0
        // Predicated region
        $region33: #{encoder_forward.5} parent=31 // pred_check
          %p180 = pneg %p179
        $region34: #{encoder_forward.5} parent=31 // pred_check_branch
          %182 = sbr.rel (%p180) target = $region36
        $region35: #{encoder_forward.5} parent=31 // pred_region
          %vm183 = vcmask 254976
          %184 = vst.msk [vmem:[#allocation2] sm:$0x3] %vm183, 0.0
        $region36: #{encoder_forward.5} parent=31 // pred_fallthru
          _
        %v185 = vld [vmem:[#allocation2] sm:$0x3]
        %v186 = vld [vmem:[%s170] sm:$0xff]
        %v187 = vld [vmem:[%s170 + $0x8] sm:$0xff]
        %v188 = vld [vmem:[%s176] sm:$0xf]
        %v189 = vld [vmem:[%s176 + $0x4] sm:$0xf]
        %v190 = vld [vmem:[%s176 + $0x8] sm:$0xf]
        %v191 = vld [vmem:[%s176 + $0xc] sm:$0xf]
        %v192 = vld [vmem:[%s176 + $0x10] sm:$0xf]
        %v193 = vld [vmem:[%s176 + $0x14] sm:$0xf]
        %v194 = vld [vmem:[%s176 + $0x18] sm:$0xf]
        %v195 = vld [vmem:[%s176 + $0x1c] sm:$0xf]
        %v196 = vld [vmem:[%s176 + $0x20] sm:$0xf]
        %v197 = vld [vmem:[%s176 + $0x24] sm:$0xf]
        %v198 = vld [vmem:[%s176 + $0x28] sm:$0xf]
        %v199 = vld [vmem:[%s176 + $0x2c] sm:$0xf]
        %v200 = vld [vmem:[%s176 + $0x30] sm:$0xf]
        %v201 = vld [vmem:[%s176 + $0x34] sm:$0xf]
        %v202 = vld [vmem:[%s176 + $0x38] sm:$0xf]
        %v203 = vld [vmem:[%s176 + $0x3c] sm:$0xf]
        %v204 = vld [vmem:[%s176 + $0x40] sm:$0xf]
        %v205 = vld [vmem:[%s176 + $0x44] sm:$0xf]
        %v206 = vld [vmem:[%s176 + $0x48] sm:$0xf]
        %v207 = vld [vmem:[%s176 + $0x4c] sm:$0xf]
        %v208 = vld [vmem:[%s176 + $0x50] sm:$0xf]
        %v209 = vld [vmem:[%s176 + $0x54] sm:$0xf]
        %v210 = vld [vmem:[%s176 + $0x58] sm:$0xf]
        %v211 = vld [vmem:[%s176 + $0x5c] sm:$0xf]
        %v212 = vld [vmem:[%s176 + $0x60] sm:$0xf]
        %v213 = vld [vmem:[%s176 + $0x64] sm:$0xf]
        %v214 = vld [vmem:[%s176 + $0x68] sm:$0xf]
        %v215 = vld [vmem:[%s176 + $0x6c] sm:$0xf]
        %v216 = vld [vmem:[%s176 + $0x70] sm:$0xf]
        %v217 = vld [vmem:[%s176 + $0x74] sm:$0xf]
        %v218 = vld [vmem:[%s176 + $0x78] sm:$0xf]
        %v219 = vld [vmem:[%s176 + $0x7c] sm:$0xf]
        %v220 = vld [vmem:[%s176 + $0x80] sm:$0xf]
        %v221 = vld [vmem:[%s176 + $0x84] sm:$0xf]
        %v222 = vld [vmem:[%s176 + $0x88] sm:$0xf]
        %v223 = vld [vmem:[%s176 + $0x8c] sm:$0xf]
        %v224 = vld [vmem:[%s176 + $0x90] sm:$0xf]
        %v225 = vld [vmem:[%s176 + $0x94] sm:$0xf]
        %v226 = vld [vmem:[%s176 + $0x98] sm:$0xf]
        %v227 = vld [vmem:[%s176 + $0x9c] sm:$0xf]
        %v228 = vld [vmem:[%s176 + $0xa0] sm:$0xf]
        %v229 = vld [vmem:[%s176 + $0xa4] sm:$0xf]
        %v230 = vld [vmem:[%s176 + $0xa8] sm:$0xf]
        %v231 = vld [vmem:[%s176 + $0xac] sm:$0xf]
        %v232 = vld [vmem:[%s176 + $0xb0] sm:$0xf]
        %v233 = vld [vmem:[%s176 + $0xb4] sm:$0xf]
        %v234 = vld [vmem:[%s176 + $0xb8] sm:$0xf]
        %v235 = vld [vmem:[%s176 + $0xbc] sm:$0xf]
        %v236 = vld [vmem:[%s176 + $0xc0] sm:$0xf]
        %v237 = vld [vmem:[%s176 + $0xc4] sm:$0xf]
        %v238 = vld [vmem:[%s176 + $0xc8] sm:$0xf]
        %v239 = vld [vmem:[%s176 + $0xcc] sm:$0xf]
        %v240 = vld [vmem:[%s176 + $0xd0] sm:$0xf]
        %v241 = vld [vmem:[%s176 + $0xd4] sm:$0xf]
        %v242 = vld [vmem:[%s176 + $0xd8] sm:$0xf]
        %v243 = vld [vmem:[%s176 + $0xdc] sm:$0xf]
        %v244 = vld [vmem:[%s176 + $0xe0] sm:$0xf]
        %v245 = vld [vmem:[%s176 + $0xe4] sm:$0xf]
        %v246 = vld [vmem:[%s176 + $0xe8] sm:$0xf]
        %v247 = vld [vmem:[%s176 + $0xec] sm:$0xf]
        %v248 = vld [vmem:[%s176 + $0xf0] sm:$0xf]
        %v249 = vld [vmem:[%s176 + $0xf4] sm:$0xf]
        %v250 = vld [vmem:[%s176 + $0xf8] sm:$0xf]
        %v251 = vld [vmem:[%s176 + $0xfc] sm:$0xf]
        %v252 = vld [vmem:[%s176 + $0x100] sm:$0xf]
        %v253 = vld [vmem:[%s176 + $0x104] sm:$0xf]
        %v254 = vld [vmem:[%s176 + $0x108] sm:$0xf]
        %v255 = vld [vmem:[%s176 + $0x10c] sm:$0xf]
        %v256 = vld [vmem:[%s176 + $0x110] sm:$0xf]
        %v257 = vld [vmem:[%s176 + $0x114] sm:$0xf]
        %v258 = vld [vmem:[%s176 + $0x118] sm:$0xf]
        %v259 = vld [vmem:[%s176 + $0x11c] sm:$0xf]
        %v260 = vld [vmem:[%s176 + $0x120] sm:$0xf]
        %v261 = vld [vmem:[%s176 + $0x124] sm:$0xf]
        %v262 = vld [vmem:[%s176 + $0x128] sm:$0xf]
        %v263 = vld [vmem:[%s176 + $0x12c] sm:$0xf]
        %v264 = vld [vmem:[%s176 + $0x130] sm:$0xf]
        %v265 = vld [vmem:[%s176 + $0x134] sm:$0xf]
        %v266 = vld [vmem:[%s176 + $0x138] sm:$0xf]
        %v267 = vld [vmem:[%s176 + $0x13c] sm:$0xf]
        %v268 = vld [vmem:[%s176 + $0x140] sm:$0xf]
        %v269 = vld [vmem:[%s176 + $0x144] sm:$0xf]
        %v270 = vld [vmem:[%s176 + $0x148] sm:$0xf]
        %v271 = vld [vmem:[%s176 + $0x14c] sm:$0xf]
        %v272 = vld [vmem:[%s176 + $0x150] sm:$0xf]
        %v273 = vld [vmem:[%s176 + $0x154] sm:$0xf]
        %v274 = vld [vmem:[%s176 + $0x158] sm:$0xf]
        %v275 = vld [vmem:[%s176 + $0x15c] sm:$0xf]
        %v276 = vld [vmem:[%s176 + $0x160] sm:$0xf]
        %v277 = vld [vmem:[%s176 + $0x164] sm:$0xf]
        %v278 = vld [vmem:[%s176 + $0x168] sm:$0xf]
        %v279 = vld [vmem:[%s176 + $0x16c] sm:$0xf]
        %v280 = vld [vmem:[%s176 + $0x170] sm:$0xf]
        %v281 = vld [vmem:[%s176 + $0x174] sm:$0xf]
        %v282 = vld [vmem:[%s176 + $0x178] sm:$0xf]
        %v283 = vld [vmem:[%s176 + $0x17c] sm:$0xf]
        %v284 = vld [vmem:[%s176 + $0x180] sm:$0xf]
        %v285 = vld [vmem:[%s176 + $0x184] sm:$0xf]
        %v286 = vld [vmem:[%s176 + $0x188] sm:$0xf]
        %v287 = vld [vmem:[%s176 + $0x18c] sm:$0xf]
        %v288 = vld [vmem:[%s176 + $0x190] sm:$0xf]
        %v289 = vld [vmem:[%s176 + $0x194] sm:$0xf]
        %v290 = vld [vmem:[%s176 + $0x198] sm:$0xf]
        %v291 = vld [vmem:[%s176 + $0x19c] sm:$0xf]
        %v292 = vld [vmem:[%s176 + $0x1a0] sm:$0xf]
        %v293 = vld [vmem:[%s176 + $0x1a4] sm:$0xf]
        %v294 = vld [vmem:[%s176 + $0x1a8] sm:$0xf]
        %v295 = vld [vmem:[%s176 + $0x1ac] sm:$0xf]
        %v296 = vld [vmem:[%s176 + $0x1b0] sm:$0xf]
        %v297 = vld [vmem:[%s176 + $0x1b4] sm:$0xf]
        %v298 = vld [vmem:[%s176 + $0x1b8] sm:$0xf]
        %v299 = vld [vmem:[%s176 + $0x1bc] sm:$0xf]
        %v300 = vld [vmem:[%s176 + $0x1c0] sm:$0xf]
        %v301 = vld [vmem:[%s176 + $0x1c4] sm:$0xf]
        %v302 = vld [vmem:[%s176 + $0x1c8] sm:$0xf]
        %v303 = vld [vmem:[%s176 + $0x1cc] sm:$0xf]
        %v304 = vld [vmem:[%s176 + $0x1d0] sm:$0xf]
        %v305 = vld [vmem:[%s176 + $0x1d4] sm:$0xf]
        %v306 = vld [vmem:[%s176 + $0x1d8] sm:$0xf]
        %v307 = vld [vmem:[%s176 + $0x1dc] sm:$0xf]
        %v308 = vld [vmem:[%s176 + $0x1e0] sm:$0xf]
        %v309 = vld [vmem:[%s176 + $0x1e4] sm:$0xf]
        %v310 = vld [vmem:[%s176 + $0x1e8] sm:$0xf]
        %v311 = vld [vmem:[%s176 + $0x1ec] sm:$0xf]
        %v312 = vld [vmem:[%s176 + $0x1f0] sm:$0xf]
        %v313 = vld [vmem:[%s176 + $0x1f4] sm:$0xf]
        %v314 = vld [vmem:[%s176 + $0x1f8] sm:$0xf]
        %v315 = vld [vmem:[%s176 + $0x1fc] sm:$0xf]
        %v316 = vld [vmem:[%s176 + $0x200] sm:$0xf]
        %v317 = vld [vmem:[%s176 + $0x204] sm:$0xf]
        %v318 = vld [vmem:[%s176 + $0x208] sm:$0xf]
        %v319 = vld [vmem:[%s176 + $0x20c] sm:$0xf]
        %v320 = vld [vmem:[%s176 + $0x210] sm:$0xf]
        %v321 = vld [vmem:[%s176 + $0x214] sm:$0xf]
        %v322 = vld [vmem:[%s176 + $0x218] sm:$0xf]
        %v323 = vld [vmem:[%s176 + $0x21c] sm:$0xf]
        %v324 = vld [vmem:[%s176 + $0x220] sm:$0xf]
        %v325 = vld [vmem:[%s176 + $0x224] sm:$0xf]
        %v326 = vld [vmem:[%s176 + $0x228] sm:$0xf]
        %v327 = vld [vmem:[%s176 + $0x22c] sm:$0xf]
        %v328 = vld [vmem:[%s176 + $0x230] sm:$0xf]
        %v329 = vld [vmem:[%s176 + $0x234] sm:$0xf]
        %v330 = vld [vmem:[%s176 + $0x238] sm:$0xf]
        %v331 = vld [vmem:[%s176 + $0x23c] sm:$0xf]
        %v332 = vld [vmem:[%s176 + $0x240] sm:$0xf]
        %v333 = vld [vmem:[%s176 + $0x244] sm:$0xf]
        %v334 = vld [vmem:[%s176 + $0x248] sm:$0xf]
        %v335 = vld [vmem:[%s176 + $0x24c] sm:$0xf]
        %v336 = vld [vmem:[%s176 + $0x250] sm:$0xf]
        %v337 = vld [vmem:[%s176 + $0x254] sm:$0xf]
        %v338 = vld [vmem:[%s176 + $0x258] sm:$0xf]
        %v339 = vld [vmem:[%s176 + $0x25c] sm:$0xf]
        %v340 = vld [vmem:[%s176 + $0x260] sm:$0xf]
        %v341 = vld [vmem:[%s176 + $0x264] sm:$0xf]
        %v342 = vld [vmem:[%s176 + $0x268] sm:$0xf]
        %v343 = vld [vmem:[%s176 + $0x26c] sm:$0xf]
        %v344 = vld [vmem:[%s176 + $0x270] sm:$0xf]
        %v345 = vld [vmem:[%s176 + $0x274] sm:$0xf]
        %v346 = vld [vmem:[%s176 + $0x278] sm:$0xf]
        %v347 = vld [vmem:[%s176 + $0x27c] sm:$0xf]
        %v348 = vld [vmem:[%s176 + $0x280] sm:$0xf]
        %v349 = vld [vmem:[%s176 + $0x284] sm:$0xf]
        %v350 = vld [vmem:[%s176 + $0x288] sm:$0xf]
        %v351 = vld [vmem:[%s176 + $0x28c] sm:$0xf]
        %v352 = vld [vmem:[%s176 + $0x290] sm:$0xf]
        %v353 = vld [vmem:[%s176 + $0x294] sm:$0xf]
        %v354 = vld [vmem:[%s176 + $0x298] sm:$0xf]
        %v355 = vld [vmem:[%s176 + $0x29c] sm:$0xf]
        %v356 = vld [vmem:[%s176 + $0x2a0] sm:$0xf]
        %v357 = vld [vmem:[%s176 + $0x2a4] sm:$0xf]
        %v358 = vld [vmem:[%s176 + $0x2a8] sm:$0xf]
        %v359 = vld [vmem:[%s176 + $0x2ac] sm:$0xf]
        %v360 = vld [vmem:[%s176 + $0x2b0] sm:$0xf]
        %v361 = vld [vmem:[%s176 + $0x2b4] sm:$0xf]
        %v362 = vld [vmem:[%s176 + $0x2b8] sm:$0xf]
        %v363 = vld [vmem:[%s176 + $0x2bc] sm:$0xf]
        %v364 = vld [vmem:[%s176 + $0x2c0] sm:$0xf]
        %v365 = vld [vmem:[%s176 + $0x2c4] sm:$0xf]
        %v366 = vld [vmem:[%s176 + $0x2c8] sm:$0xf]
        %v367 = vld [vmem:[%s176 + $0x2cc] sm:$0xf]
        %v368 = vld [vmem:[%s176 + $0x2d0] sm:$0xf]
        %v369 = vld [vmem:[%s176 + $0x2d4] sm:$0xf]
        %v370 = vld [vmem:[%s176 + $0x2d8] sm:$0xf]
        %v371 = vld [vmem:[%s176 + $0x2dc] sm:$0xf]
        %v372 = vld [vmem:[%s176 + $0x2e0] sm:$0xf]
        %v373 = vld [vmem:[%s176 + $0x2e4] sm:$0xf]
        %v374 = vld [vmem:[%s176 + $0x2e8] sm:$0xf]
        %v375 = vld [vmem:[%s176 + $0x2ec] sm:$0xf]
        %v376 = vld [vmem:[%s176 + $0x2f0] sm:$0xf]
        %v377 = vld [vmem:[%s176 + $0x2f4] sm:$0xf]
        %v378 = vld [vmem:[%s176 + $0x2f8] sm:$0xf]
        %v379 = vld [vmem:[%s176 + $0x2fc] sm:$0xf]
        %v380 = vld [vmem:[%s176 + $0x300] sm:$0xf]
        %v381 = vld [vmem:[%s176 + $0x304] sm:$0xf]
        %v382 = vld [vmem:[%s176 + $0x308] sm:$0xf]
        %v383 = vld [vmem:[%s176 + $0x30c] sm:$0xf]
        %v384 = vld [vmem:[%s176 + $0x310] sm:$0xf]
        %v385 = vld [vmem:[%s176 + $0x314] sm:$0xf]
        %v386 = vld [vmem:[%s176 + $0x318] sm:$0xf]
        %v387 = vld [vmem:[%s176 + $0x31c] sm:$0xf]
        %v388 = vld [vmem:[%s176 + $0x320] sm:$0xf]
        %v389 = vld [vmem:[%s176 + $0x324] sm:$0xf]
        %v390 = vld [vmem:[%s176 + $0x328] sm:$0xf]
        %v391 = vld [vmem:[%s176 + $0x32c] sm:$0xf]
        %v392 = vld [vmem:[%s176 + $0x330] sm:$0xf]
        %v393 = vld [vmem:[%s176 + $0x334] sm:$0xf]
        %v394 = vld [vmem:[%s176 + $0x338] sm:$0xf]
        %v395 = vld [vmem:[%s176 + $0x33c] sm:$0xf]
        %v396 = vld [vmem:[%s176 + $0x340] sm:$0xf]
        %v397 = vld [vmem:[%s176 + $0x344] sm:$0xf]
        %v398 = vld [vmem:[%s176 + $0x348] sm:$0xf]
        %v399 = vld [vmem:[%s176 + $0x34c] sm:$0xf]
        %v400 = vld [vmem:[%s176 + $0x350] sm:$0xf]
        %v401 = vld [vmem:[%s176 + $0x354] sm:$0xf]
        %v402 = vld [vmem:[%s176 + $0x358] sm:$0xf]
        %v403 = vld [vmem:[%s176 + $0x35c] sm:$0xf]
        %v404 = vld [vmem:[%s176 + $0x360] sm:$0xf]
        %v405 = vld [vmem:[%s176 + $0x364] sm:$0xf]
        %v406 = vld [vmem:[%s176 + $0x368] sm:$0xf]
        %v407 = vld [vmem:[%s176 + $0x36c] sm:$0xf]
        %v408 = vld [vmem:[%s176 + $0x370] sm:$0xf]
        %v409 = vld [vmem:[%s176 + $0x374] sm:$0xf]
        %v410 = vld [vmem:[%s176 + $0x378] sm:$0xf]
        %v411 = vld [vmem:[%s176 + $0x37c] sm:$0xf]
        %v412 = vld [vmem:[%s176 + $0x380] sm:$0xf]
        %v413 = vld [vmem:[%s176 + $0x384] sm:$0xf]
        %v414 = vld [vmem:[%s176 + $0x388] sm:$0xf]
        %v415 = vld [vmem:[%s176 + $0x38c] sm:$0xf]
        %v416 = vld [vmem:[%s176 + $0x390] sm:$0xf]
        %v417 = vld [vmem:[%s176 + $0x394] sm:$0xf]
        %v418 = vld [vmem:[%s176 + $0x398] sm:$0xf]
        %v419 = vld [vmem:[%s176 + $0x39c] sm:$0xf]
        %v420 = vld [vmem:[%s176 + $0x3a0] sm:$0xf]
        %v421 = vld [vmem:[%s176 + $0x3a4] sm:$0xf]
        %v422 = vld [vmem:[%s176 + $0x3a8] sm:$0xf]
        %v423 = vld [vmem:[%s176 + $0x3ac] sm:$0xf]
        %v424 = vld [vmem:[%s176 + $0x3b0] sm:$0xf]
        %v425 = vld [vmem:[%s176 + $0x3b4] sm:$0xf]
        %v426 = vld [vmem:[%s176 + $0x3b8] sm:$0xf]
        %v427 = vld [vmem:[%s176 + $0x3bc] sm:$0xf]
        %v428 = vld [vmem:[%s176 + $0x3c0] sm:$0xf]
        %v429 = vld [vmem:[%s176 + $0x3c4] sm:$0xf]
        %v430 = vld [vmem:[%s176 + $0x3c8] sm:$0xf]
        %v431 = vld [vmem:[%s176 + $0x3cc] sm:$0xf]
        %v432 = vld [vmem:[%s176 + $0x3d0] sm:$0xf]
        %v433 = vld [vmem:[%s176 + $0x3d4] sm:$0xf]
        %v434 = vld [vmem:[%s176 + $0x3d8] sm:$0xf]
        %v435 = vld [vmem:[%s176 + $0x3dc] sm:$0xf]
        %v436 = vld [vmem:[%s176 + $0x3e0] sm:$0xf]
        %v437 = vld [vmem:[%s176 + $0x3e4] sm:$0xf]
        %v438 = vld [vmem:[%s176 + $0x3e8] sm:$0xf]
        %v439 = vld [vmem:[%s176 + $0x3ec] sm:$0xf]
        %v440 = vld [vmem:[%s176 + $0x3f0] sm:$0xf]
        %v441 = vld [vmem:[%s176 + $0x3f4] sm:$0xf]
        %v442 = vld [vmem:[%s176 + $0x3f8] sm:$0xf]
        %v443 = vld [vmem:[%s176 + $0x3fc] sm:$0xf]
        %v446 = vcombine.high %v186, %v186
        %v448 = vunpack.c.l.s4 1966171168
        %v449 = vunpack.c.0.s8 %v448
        %v450 = vlaneseq
        %v451 = vshrl.u32 %v450, 7
        %v452 = vsub.s32 %v449, %v451
        %v453 = vrot.slane %v186, %v452
        %v455 = vunpack.c.l.s4 1966171168
        %v456 = vunpack.c.0.s8 %v455
        %v457 = vlaneseq
        %v458 = vshrl.u32 %v457, 7
        %v459 = vsub.s32 %v456, %v458
        %v460 = vrot.slane %v446, %v459
        %v461 = vcombine.high %v453, %v453
        %v462 = vcombine.high %v460, %v460
        %v464 = vunpack.c.l.s4 1966171168
        %v465 = vunpack.c.0.s8 %v464
        %v466 = vlaneseq
        %v467 = vshrl.u32 %v466, 7
        %v468 = vsub.s32 %v465, %v467
        %v469 = vrot.slane %v453, %v468
        %v471 = vunpack.c.l.s4 1966171168
        %v472 = vunpack.c.0.s8 %v471
        %v473 = vlaneseq
        %v474 = vshrl.u32 %v473, 7
        %v475 = vsub.s32 %v472, %v474
        %v476 = vrot.slane %v460, %v475
        %v478 = vunpack.c.l.s4 1966171168
        %v479 = vunpack.c.0.s8 %v478
        %v480 = vlaneseq
        %v481 = vshrl.u32 %v480, 7
        %v482 = vsub.s32 %v479, %v481
        %v483 = vrot.slane %v461, %v482
        %v485 = vunpack.c.l.s4 1966171168
        %v486 = vunpack.c.0.s8 %v485
        %v487 = vlaneseq
        %v488 = vshrl.u32 %v487, 7
        %v489 = vsub.s32 %v486, %v488
        %v490 = vrot.slane %v462, %v489
        %v491 = vcombine.high %v469, %v469
        %v492 = vcombine.high %v476, %v476
        %v493 = vcombine.high %v483, %v483
        %v494 = vcombine.high %v490, %v490
        %v495 = vcombine.high %v187, %v187
        %v497 = vunpack.c.l.s4 1966171168
        %v498 = vunpack.c.0.s8 %v497
        %v499 = vlaneseq
        %v500 = vshrl.u32 %v499, 7
        %v501 = vsub.s32 %v498, %v500
        %v502 = vrot.slane %v187, %v501
        %v504 = vunpack.c.l.s4 1966171168
        %v505 = vunpack.c.0.s8 %v504
        %v506 = vlaneseq
        %v507 = vshrl.u32 %v506, 7
        %v508 = vsub.s32 %v505, %v507
        %v509 = vrot.slane %v495, %v508
        %v510 = vcombine.high %v502, %v502
        %v511 = vcombine.high %v509, %v509
        %v513 = vunpack.c.l.s4 1966171168
        %v514 = vunpack.c.0.s8 %v513
        %v515 = vlaneseq
        %v516 = vshrl.u32 %v515, 7
        %v517 = vsub.s32 %v514, %v516
        %v518 = vrot.slane %v502, %v517
        %v520 = vunpack.c.l.s4 1966171168
        %v521 = vunpack.c.0.s8 %v520
        %v522 = vlaneseq
        %v523 = vshrl.u32 %v522, 7
        %v524 = vsub.s32 %v521, %v523
        %v525 = vrot.slane %v509, %v524
        %v527 = vunpack.c.l.s4 1966171168
        %v528 = vunpack.c.0.s8 %v527
        %v529 = vlaneseq
        %v530 = vshrl.u32 %v529, 7
        %v531 = vsub.s32 %v528, %v530
        %v532 = vrot.slane %v510, %v531
        %v534 = vunpack.c.l.s4 1966171168
        %v535 = vunpack.c.0.s8 %v534
        %v536 = vlaneseq
        %v537 = vshrl.u32 %v536, 7
        %v538 = vsub.s32 %v535, %v537
        %v539 = vrot.slane %v511, %v538
        %v540 = vcombine.high %v518, %v518
        %v541 = vcombine.high %v525, %v525
        %v542 = vcombine.high %v532, %v532
        %v543 = vcombine.high %v539, %v539
        %v816 = vunpack.c.l.b16 %v188
        %v817 = vunpack.c.l.b16 %v189
        %v818 = vunpack.c.l.b16 %v190
        %v819 = vunpack.c.l.b16 %v191
        %v820 = vunpack.c.l.b16 %v192
        %v821 = vunpack.c.l.b16 %v193
        %v822 = vunpack.c.l.b16 %v194
        %v823 = vunpack.c.l.b16 %v195
        %v824 = vunpack.c.l.b16 %v196
        %v825 = vunpack.c.l.b16 %v197
        %v826 = vunpack.c.l.b16 %v198
        %v827 = vunpack.c.l.b16 %v199
        %v828 = vunpack.c.l.b16 %v200
        %v829 = vunpack.c.l.b16 %v201
        %v830 = vunpack.c.l.b16 %v202
        %v831 = vunpack.c.l.b16 %v203
        %v832 = vunpack.c.l.b16 %v204
        %v833 = vunpack.c.l.b16 %v205
        %v834 = vunpack.c.l.b16 %v206
        %v835 = vunpack.c.l.b16 %v207
        %v836 = vunpack.c.l.b16 %v208
        %v837 = vunpack.c.l.b16 %v209
        %v838 = vunpack.c.l.b16 %v210
        %v839 = vunpack.c.l.b16 %v211
        %v840 = vunpack.c.l.b16 %v212
        %v841 = vunpack.c.l.b16 %v213
        %v842 = vunpack.c.l.b16 %v214
        %v843 = vunpack.c.l.b16 %v215
        %v844 = vunpack.c.l.b16 %v216
        %v845 = vunpack.c.l.b16 %v217
        %v846 = vunpack.c.l.b16 %v218
        %v847 = vunpack.c.l.b16 %v219
        %v848 = vunpack.c.l.b16 %v220
        %v849 = vunpack.c.l.b16 %v221
        %v850 = vunpack.c.l.b16 %v222
        %v851 = vunpack.c.l.b16 %v223
        %v852 = vunpack.c.l.b16 %v224
        %v853 = vunpack.c.l.b16 %v225
        %v854 = vunpack.c.l.b16 %v226
        %v855 = vunpack.c.l.b16 %v227
        %v856 = vunpack.c.l.b16 %v228
        %v857 = vunpack.c.l.b16 %v229
        %v858 = vunpack.c.l.b16 %v230
        %v859 = vunpack.c.l.b16 %v231
        %v860 = vunpack.c.l.b16 %v232
        %v861 = vunpack.c.l.b16 %v233
        %v862 = vunpack.c.l.b16 %v234
        %v863 = vunpack.c.l.b16 %v235
        %v864 = vunpack.c.l.b16 %v236
        %v865 = vunpack.c.l.b16 %v237
        %v866 = vunpack.c.l.b16 %v238
        %v867 = vunpack.c.l.b16 %v239
        %v868 = vunpack.c.l.b16 %v240
        %v869 = vunpack.c.l.b16 %v241
        %v870 = vunpack.c.l.b16 %v242
        %v871 = vunpack.c.l.b16 %v243
        %v872 = vunpack.c.l.b16 %v244
        %v873 = vunpack.c.l.b16 %v245
        %v874 = vunpack.c.l.b16 %v246
        %v875 = vunpack.c.l.b16 %v247
        %v876 = vunpack.c.l.b16 %v248
        %v877 = vunpack.c.l.b16 %v249
        %v878 = vunpack.c.l.b16 %v250
        %v879 = vunpack.c.l.b16 %v251
        %v880 = vunpack.c.l.b16 %v252
        %v881 = vunpack.c.l.b16 %v253
        %v882 = vunpack.c.l.b16 %v254
        %v883 = vunpack.c.l.b16 %v255
        %v884 = vunpack.c.l.b16 %v256
        %v885 = vunpack.c.l.b16 %v257
        %v886 = vunpack.c.l.b16 %v258
        %v887 = vunpack.c.l.b16 %v259
        %v888 = vunpack.c.l.b16 %v260
        %v889 = vunpack.c.l.b16 %v261
        %v890 = vunpack.c.l.b16 %v262
        %v891 = vunpack.c.l.b16 %v263
        %v892 = vunpack.c.l.b16 %v264
        %v893 = vunpack.c.l.b16 %v265
        %v894 = vunpack.c.l.b16 %v266
        %v895 = vunpack.c.l.b16 %v267
        %v896 = vunpack.c.l.b16 %v268
        %v897 = vunpack.c.l.b16 %v269
        %v898 = vunpack.c.l.b16 %v270
        %v899 = vunpack.c.l.b16 %v271
        %v900 = vunpack.c.l.b16 %v272
        %v901 = vunpack.c.l.b16 %v273
        %v902 = vunpack.c.l.b16 %v274
        %v903 = vunpack.c.l.b16 %v275
        %v904 = vunpack.c.l.b16 %v276
        %v905 = vunpack.c.l.b16 %v277
        %v906 = vunpack.c.l.b16 %v278
        %v907 = vunpack.c.l.b16 %v279
        %v908 = vunpack.c.l.b16 %v280
        %v909 = vunpack.c.l.b16 %v281
        %v910 = vunpack.c.l.b16 %v282
        %v911 = vunpack.c.l.b16 %v283
        %v912 = vunpack.c.l.b16 %v284
        %v913 = vunpack.c.l.b16 %v285
        %v914 = vunpack.c.l.b16 %v286
        %v915 = vunpack.c.l.b16 %v287
        %v916 = vunpack.c.l.b16 %v288
        %v917 = vunpack.c.l.b16 %v289
        %v918 = vunpack.c.l.b16 %v290
        %v919 = vunpack.c.l.b16 %v291
        %v920 = vunpack.c.l.b16 %v292
        %v921 = vunpack.c.l.b16 %v293
        %v922 = vunpack.c.l.b16 %v294
        %v923 = vunpack.c.l.b16 %v295
        %v924 = vunpack.c.l.b16 %v296
        %v925 = vunpack.c.l.b16 %v297
        %v926 = vunpack.c.l.b16 %v298
        %v927 = vunpack.c.l.b16 %v299
        %v928 = vunpack.c.l.b16 %v300
        %v929 = vunpack.c.l.b16 %v301
        %v930 = vunpack.c.l.b16 %v302
        %v931 = vunpack.c.l.b16 %v303
        %v932 = vunpack.c.l.b16 %v304
        %v933 = vunpack.c.l.b16 %v305
        %v934 = vunpack.c.l.b16 %v306
        %v935 = vunpack.c.l.b16 %v307
        %v936 = vunpack.c.l.b16 %v308
        %v937 = vunpack.c.l.b16 %v309
        %v938 = vunpack.c.l.b16 %v310
        %v939 = vunpack.c.l.b16 %v311
        %v940 = vunpack.c.l.b16 %v312
        %v941 = vunpack.c.l.b16 %v313
        %v942 = vunpack.c.l.b16 %v314
        %v943 = vunpack.c.l.b16 %v315
        %v944 = vunpack.c.l.b16 %v316
        %v945 = vunpack.c.l.b16 %v317
        %v946 = vunpack.c.l.b16 %v318
        %v947 = vunpack.c.l.b16 %v319
        %v948 = vunpack.c.l.b16 %v320
        %v949 = vunpack.c.l.b16 %v321
        %v950 = vunpack.c.l.b16 %v322
        %v951 = vunpack.c.l.b16 %v323
        %v952 = vunpack.c.l.b16 %v324
        %v953 = vunpack.c.l.b16 %v325
        %v954 = vunpack.c.l.b16 %v326
        %v955 = vunpack.c.l.b16 %v327
        %v956 = vunpack.c.l.b16 %v328
        %v957 = vunpack.c.l.b16 %v329
        %v958 = vunpack.c.l.b16 %v330
        %v959 = vunpack.c.l.b16 %v331
        %v960 = vunpack.c.l.b16 %v332
        %v961 = vunpack.c.l.b16 %v333
        %v962 = vunpack.c.l.b16 %v334
        %v963 = vunpack.c.l.b16 %v335
        %v964 = vunpack.c.l.b16 %v336
        %v965 = vunpack.c.l.b16 %v337
        %v966 = vunpack.c.l.b16 %v338
        %v967 = vunpack.c.l.b16 %v339
        %v968 = vunpack.c.l.b16 %v340
        %v969 = vunpack.c.l.b16 %v341
        %v970 = vunpack.c.l.b16 %v342
        %v971 = vunpack.c.l.b16 %v343
        %v972 = vunpack.c.l.b16 %v344
        %v973 = vunpack.c.l.b16 %v345
        %v974 = vunpack.c.l.b16 %v346
        %v975 = vunpack.c.l.b16 %v347
        %v976 = vunpack.c.l.b16 %v348
        %v977 = vunpack.c.l.b16 %v349
        %v978 = vunpack.c.l.b16 %v350
        %v979 = vunpack.c.l.b16 %v351
        %v980 = vunpack.c.l.b16 %v352
        %v981 = vunpack.c.l.b16 %v353
        %v982 = vunpack.c.l.b16 %v354
        %v983 = vunpack.c.l.b16 %v355
        %v984 = vunpack.c.l.b16 %v356
        %v985 = vunpack.c.l.b16 %v357
        %v986 = vunpack.c.l.b16 %v358
        %v987 = vunpack.c.l.b16 %v359
        %v988 = vunpack.c.l.b16 %v360
        %v989 = vunpack.c.l.b16 %v361
        %v990 = vunpack.c.l.b16 %v362
        %v991 = vunpack.c.l.b16 %v363
        %v992 = vunpack.c.l.b16 %v364
        %v993 = vunpack.c.l.b16 %v365
        %v994 = vunpack.c.l.b16 %v366
        %v995 = vunpack.c.l.b16 %v367
        %v996 = vunpack.c.l.b16 %v368
        %v997 = vunpack.c.l.b16 %v369
        %v998 = vunpack.c.l.b16 %v370
        %v999 = vunpack.c.l.b16 %v371
        %v1000 = vunpack.c.l.b16 %v372
        %v1001 = vunpack.c.l.b16 %v373
        %v1002 = vunpack.c.l.b16 %v374
        %v1003 = vunpack.c.l.b16 %v375
        %v1004 = vunpack.c.l.b16 %v376
        %v1005 = vunpack.c.l.b16 %v377
        %v1006 = vunpack.c.l.b16 %v378
        %v1007 = vunpack.c.l.b16 %v379
        %v1008 = vunpack.c.l.b16 %v380
        %v1009 = vunpack.c.l.b16 %v381
        %v1010 = vunpack.c.l.b16 %v382
        %v1011 = vunpack.c.l.b16 %v383
        %v1012 = vunpack.c.l.b16 %v384
        %v1013 = vunpack.c.l.b16 %v385
        %v1014 = vunpack.c.l.b16 %v386
        %v1015 = vunpack.c.l.b16 %v387
        %v1016 = vunpack.c.l.b16 %v388
        %v1017 = vunpack.c.l.b16 %v389
        %v1018 = vunpack.c.l.b16 %v390
        %v1019 = vunpack.c.l.b16 %v391
        %v1020 = vunpack.c.l.b16 %v392
        %v1021 = vunpack.c.l.b16 %v393
        %v1022 = vunpack.c.l.b16 %v394
        %v1023 = vunpack.c.l.b16 %v395
        %v1024 = vunpack.c.l.b16 %v396
        %v1025 = vunpack.c.l.b16 %v397
        %v1026 = vunpack.c.l.b16 %v398
        %v1027 = vunpack.c.l.b16 %v399
        %v1028 = vunpack.c.l.b16 %v400
        %v1029 = vunpack.c.l.b16 %v401
        %v1030 = vunpack.c.l.b16 %v402
        %v1031 = vunpack.c.l.b16 %v403
        %v1032 = vunpack.c.l.b16 %v404
        %v1033 = vunpack.c.l.b16 %v405
        %v1034 = vunpack.c.l.b16 %v406
        %v1035 = vunpack.c.l.b16 %v407
        %v1036 = vunpack.c.l.b16 %v408
        %v1037 = vunpack.c.l.b16 %v409
        %v1038 = vunpack.c.l.b16 %v410
        %v1039 = vunpack.c.l.b16 %v411
        %v1040 = vunpack.c.l.b16 %v412
        %v1041 = vunpack.c.l.b16 %v413
        %v1042 = vunpack.c.l.b16 %v414
        %v1043 = vunpack.c.l.b16 %v415
        %v1044 = vunpack.c.l.b16 %v416
        %v1045 = vunpack.c.l.b16 %v417
        %v1046 = vunpack.c.l.b16 %v418
        %v1047 = vunpack.c.l.b16 %v419
        %v1048 = vunpack.c.l.b16 %v420
        %v1049 = vunpack.c.l.b16 %v421
        %v1050 = vunpack.c.l.b16 %v422
        %v1051 = vunpack.c.l.b16 %v423
        %v1052 = vunpack.c.l.b16 %v424
        %v1053 = vunpack.c.l.b16 %v425
        %v1054 = vunpack.c.l.b16 %v426
        %v1055 = vunpack.c.l.b16 %v427
        %v1056 = vunpack.c.l.b16 %v428
        %v1057 = vunpack.c.l.b16 %v429
        %v1058 = vunpack.c.l.b16 %v430
        %v1059 = vunpack.c.l.b16 %v431
        %v1060 = vunpack.c.l.b16 %v432
        %v1061 = vunpack.c.l.b16 %v433
        %v1062 = vunpack.c.l.b16 %v434
        %v1063 = vunpack.c.l.b16 %v435
        %v1064 = vunpack.c.l.b16 %v436
        %v1065 = vunpack.c.l.b16 %v437
        %v1066 = vunpack.c.l.b16 %v438
        %v1067 = vunpack.c.l.b16 %v439
        %v1068 = vunpack.c.l.b16 %v440
        %v1069 = vunpack.c.l.b16 %v441
        %v1070 = vunpack.c.l.b16 %v442
        %v1071 = vunpack.c.l.b16 %v443
        %v1072 = vpack.c.b16 %v817, %v816
        %v1073 = vpack.c.b16 %v819, %v818
        %v1074 = vpack.c.b16 %v821, %v820
        %v1075 = vpack.c.b16 %v823, %v822
        %v1076 = vpack.c.b16 %v825, %v824
        %v1077 = vpack.c.b16 %v827, %v826
        %v1078 = vpack.c.b16 %v829, %v828
        %v1079 = vpack.c.b16 %v831, %v830
        %v1080 = vpack.c.b16 %v833, %v832
        %v1081 = vpack.c.b16 %v835, %v834
        %v1082 = vpack.c.b16 %v837, %v836
        %v1083 = vpack.c.b16 %v839, %v838
        %v1084 = vpack.c.b16 %v841, %v840
        %v1085 = vpack.c.b16 %v843, %v842
        %v1086 = vpack.c.b16 %v845, %v844
        %v1087 = vpack.c.b16 %v847, %v846
        %v1088 = vpack.c.b16 %v849, %v848
        %v1089 = vpack.c.b16 %v851, %v850
        %v1090 = vpack.c.b16 %v853, %v852
        %v1091 = vpack.c.b16 %v855, %v854
        %v1092 = vpack.c.b16 %v857, %v856
        %v1093 = vpack.c.b16 %v859, %v858
        %v1094 = vpack.c.b16 %v861, %v860
        %v1095 = vpack.c.b16 %v863, %v862
        %v1096 = vpack.c.b16 %v865, %v864
        %v1097 = vpack.c.b16 %v867, %v866
        %v1098 = vpack.c.b16 %v869, %v868
        %v1099 = vpack.c.b16 %v871, %v870
        %v1100 = vpack.c.b16 %v873, %v872
        %v1101 = vpack.c.b16 %v875, %v874
        %v1102 = vpack.c.b16 %v877, %v876
        %v1103 = vpack.c.b16 %v879, %v878
        %v1104 = vpack.c.b16 %v881, %v880
        %v1105 = vpack.c.b16 %v883, %v882
        %v1106 = vpack.c.b16 %v885, %v884
        %v1107 = vpack.c.b16 %v887, %v886
        %v1108 = vpack.c.b16 %v889, %v888
        %v1109 = vpack.c.b16 %v891, %v890
        %v1110 = vpack.c.b16 %v893, %v892
        %v1111 = vpack.c.b16 %v895, %v894
        %v1112 = vpack.c.b16 %v897, %v896
        %v1113 = vpack.c.b16 %v899, %v898
        %v1114 = vpack.c.b16 %v901, %v900
        %v1115 = vpack.c.b16 %v903, %v902
        %v1116 = vpack.c.b16 %v905, %v904
        %v1117 = vpack.c.b16 %v907, %v906
        %v1118 = vpack.c.b16 %v909, %v908
        %v1119 = vpack.c.b16 %v911, %v910
        %v1120 = vpack.c.b16 %v913, %v912
        %v1121 = vpack.c.b16 %v915, %v914
        %v1122 = vpack.c.b16 %v917, %v916
        %v1123 = vpack.c.b16 %v919, %v918
        %v1124 = vpack.c.b16 %v921, %v920
        %v1125 = vpack.c.b16 %v923, %v922
        %v1126 = vpack.c.b16 %v925, %v924
        %v1127 = vpack.c.b16 %v927, %v926
        %v1128 = vpack.c.b16 %v929, %v928
        %v1129 = vpack.c.b16 %v931, %v930
        %v1130 = vpack.c.b16 %v933, %v932
        %v1131 = vpack.c.b16 %v935, %v934
        %v1132 = vpack.c.b16 %v937, %v936
        %v1133 = vpack.c.b16 %v939, %v938
        %v1134 = vpack.c.b16 %v941, %v940
        %v1135 = vpack.c.b16 %v943, %v942
        %v1136 = vpack.c.b16 %v945, %v944
        %v1137 = vpack.c.b16 %v947, %v946
        %v1138 = vpack.c.b16 %v949, %v948
        %v1139 = vpack.c.b16 %v951, %v950
        %v1140 = vpack.c.b16 %v953, %v952
        %v1141 = vpack.c.b16 %v955, %v954
        %v1142 = vpack.c.b16 %v957, %v956
        %v1143 = vpack.c.b16 %v959, %v958
        %v1144 = vpack.c.b16 %v961, %v960
        %v1145 = vpack.c.b16 %v963, %v962
        %v1146 = vpack.c.b16 %v965, %v964
        %v1147 = vpack.c.b16 %v967, %v966
        %v1148 = vpack.c.b16 %v969, %v968
        %v1149 = vpack.c.b16 %v971, %v970
        %v1150 = vpack.c.b16 %v973, %v972
        %v1151 = vpack.c.b16 %v975, %v974
        %v1152 = vpack.c.b16 %v977, %v976
        %v1153 = vpack.c.b16 %v979, %v978
        %v1154 = vpack.c.b16 %v981, %v980
        %v1155 = vpack.c.b16 %v983, %v982
        %v1156 = vpack.c.b16 %v985, %v984
        %v1157 = vpack.c.b16 %v987, %v986
        %v1158 = vpack.c.b16 %v989, %v988
        %v1159 = vpack.c.b16 %v991, %v990
        %v1160 = vpack.c.b16 %v993, %v992
        %v1161 = vpack.c.b16 %v995, %v994
        %v1162 = vpack.c.b16 %v997, %v996
        %v1163 = vpack.c.b16 %v999, %v998
        %v1164 = vpack.c.b16 %v1001, %v1000
        %v1165 = vpack.c.b16 %v1003, %v1002
        %v1166 = vpack.c.b16 %v1005, %v1004
        %v1167 = vpack.c.b16 %v1007, %v1006
        %v1168 = vpack.c.b16 %v1009, %v1008
        %v1169 = vpack.c.b16 %v1011, %v1010
        %v1170 = vpack.c.b16 %v1013, %v1012
        %v1171 = vpack.c.b16 %v1015, %v1014
        %v1172 = vpack.c.b16 %v1017, %v1016
        %v1173 = vpack.c.b16 %v1019, %v1018
        %v1174 = vpack.c.b16 %v1021, %v1020
        %v1175 = vpack.c.b16 %v1023, %v1022
        %v1176 = vpack.c.b16 %v1025, %v1024
        %v1177 = vpack.c.b16 %v1027, %v1026
        %v1178 = vpack.c.b16 %v1029, %v1028
        %v1179 = vpack.c.b16 %v1031, %v1030
        %v1180 = vpack.c.b16 %v1033, %v1032
        %v1181 = vpack.c.b16 %v1035, %v1034
        %v1182 = vpack.c.b16 %v1037, %v1036
        %v1183 = vpack.c.b16 %v1039, %v1038
        %v1184 = vpack.c.b16 %v1041, %v1040
        %v1185 = vpack.c.b16 %v1043, %v1042
        %v1186 = vpack.c.b16 %v1045, %v1044
        %v1187 = vpack.c.b16 %v1047, %v1046
        %v1188 = vpack.c.b16 %v1049, %v1048
        %v1189 = vpack.c.b16 %v1051, %v1050
        %v1190 = vpack.c.b16 %v1053, %v1052
        %v1191 = vpack.c.b16 %v1055, %v1054
        %v1192 = vpack.c.b16 %v1057, %v1056
        %v1193 = vpack.c.b16 %v1059, %v1058
        %v1194 = vpack.c.b16 %v1061, %v1060
        %v1195 = vpack.c.b16 %v1063, %v1062
        %v1196 = vpack.c.b16 %v1065, %v1064
        %v1197 = vpack.c.b16 %v1067, %v1066
        %v1198 = vpack.c.b16 %v1069, %v1068
        %v1199 = vpack.c.b16 %v1071, %v1070
        %1328 = vmatprep.subr.bf16.mxu0 0
        %1329 = vmatpush1.bf16.msra.mxu0 %v1079
        %1330 = vmatprep.subr.bf16.mxu0 0
        %1331 = vmatpush1.bf16.msra.mxu0 %v1078
        %1332 = vmatprep.subr.bf16.mxu0 0
        %1333 = vmatpush1.bf16.msra.mxu0 %v1077
        %1334 = vmatprep.subr.bf16.mxu0 0
        %1335 = vmatpush1.bf16.msra.mxu0 %v1076
        %1336 = vmatprep.subr.bf16.mxu0 0
        %1337 = vmatpush1.bf16.msra.mxu0 %v1075
        %1338 = vmatprep.subr.bf16.mxu0 0
        %1339 = vmatpush1.bf16.msra.mxu0 %v1074
        %1340 = vmatprep.subr.bf16.mxu0 0
        %1341 = vmatpush1.bf16.msra.mxu0 %v1073
        %1342 = vmatprep.subr.bf16.mxu0 0
        %1343 = vmatpush1.bf16.msra.mxu0 %v1072
        %1344 = vmatprep.subr.bf16.mxu0 0
        %1345 = vmatpush2.bf16.msra.mxu0 %v1087
        %1346 = vmatprep.subr.bf16.mxu0 0
        %1347 = vmatpush2.bf16.msra.mxu0 %v1086
        %1348 = vmatprep.subr.bf16.mxu0 0
        %1349 = vmatpush2.bf16.msra.mxu0 %v1085
        %1350 = vmatprep.subr.bf16.mxu0 0
        %1351 = vmatpush2.bf16.msra.mxu0 %v1084
        %1352 = vmatprep.subr.bf16.mxu0 0
        %1353 = vmatpush2.bf16.msra.mxu0 %v1083
        %1354 = vmatprep.subr.bf16.mxu0 0
        %1355 = vmatpush2.bf16.msra.mxu0 %v1082
        %1356 = vmatprep.subr.bf16.mxu0 0
        %1357 = vmatpush2.bf16.msra.mxu0 %v1081
        %1358 = vmatprep.subr.bf16.mxu0 0
        %1359 = vmatpush2.bf16.msra.mxu0 %v1080
        %1360 = vmatprep.mubr.bf16.mxu0 %v483
        %1361 = vmatmul.mubr.bf16.gmra.mxu0 %v469
        %v1362 = vpop.f32.mrf.mxu0
        %v1363 = vadd.f32 0.0, %v1362
        %v1364 = vpop.f32.mrf.mxu0
        %v1365 = vpop.f32.mrf.mxu0
        %v1366 = vpop.f32.mrf.mxu0
        %1367 = vdwg.mxu0
        %1368 = vmatprep.subr.bf16.mxu0 0
        %1369 = vmatpush1.bf16.msra.mxu0 %v1095
        %1370 = vmatprep.subr.bf16.mxu0 0
        %1371 = vmatpush1.bf16.msra.mxu0 %v1094
        %1372 = vmatprep.subr.bf16.mxu0 0
        %1373 = vmatpush1.bf16.msra.mxu0 %v1093
        %1374 = vmatprep.subr.bf16.mxu0 0
        %1375 = vmatpush1.bf16.msra.mxu0 %v1092
        %1376 = vmatprep.subr.bf16.mxu0 0
        %1377 = vmatpush1.bf16.msra.mxu0 %v1091
        %1378 = vmatprep.subr.bf16.mxu0 0
        %1379 = vmatpush1.bf16.msra.mxu0 %v1090
        %1380 = vmatprep.subr.bf16.mxu0 0
        %1381 = vmatpush1.bf16.msra.mxu0 %v1089
        %1382 = vmatprep.subr.bf16.mxu0 0
        %1383 = vmatpush1.bf16.msra.mxu0 %v1088
        %1384 = vmatprep.subr.bf16.mxu0 0
        %1385 = vmatpush2.bf16.msra.mxu0 %v1103
        %1386 = vmatprep.subr.bf16.mxu0 0
        %1387 = vmatpush2.bf16.msra.mxu0 %v1102
        %1388 = vmatprep.subr.bf16.mxu0 0
        %1389 = vmatpush2.bf16.msra.mxu0 %v1101
        %1390 = vmatprep.subr.bf16.mxu0 0
        %1391 = vmatpush2.bf16.msra.mxu0 %v1100
        %1392 = vmatprep.subr.bf16.mxu0 0
        %1393 = vmatpush2.bf16.msra.mxu0 %v1099
        %1394 = vmatprep.subr.bf16.mxu0 0
        %1395 = vmatpush2.bf16.msra.mxu0 %v1098
        %1396 = vmatprep.subr.bf16.mxu0 0
        %1397 = vmatpush2.bf16.msra.mxu0 %v1097
        %1398 = vmatprep.subr.bf16.mxu0 0
        %1399 = vmatpush2.bf16.msra.mxu0 %v1096
        %1400 = vmatprep.mubr.bf16.mxu0 %v493
        %1401 = vmatmul.mubr.bf16.gmra.mxu0 %v491
        %v1402 = vpop.f32.mrf.mxu0
        %v1403 = vadd.f32 %v1363, %v1402
        %v1404 = vpop.f32.mrf.mxu0
        %v1405 = vpop.f32.mrf.mxu0
        %v1406 = vpop.f32.mrf.mxu0
        %1407 = vdwg.mxu0
        %1408 = vmatprep.subr.bf16.mxu0 0
        %1409 = vmatpush1.bf16.msra.mxu0 %v1111
        %1410 = vmatprep.subr.bf16.mxu0 0
        %1411 = vmatpush1.bf16.msra.mxu0 %v1110
        %1412 = vmatprep.subr.bf16.mxu0 0
        %1413 = vmatpush1.bf16.msra.mxu0 %v1109
        %1414 = vmatprep.subr.bf16.mxu0 0
        %1415 = vmatpush1.bf16.msra.mxu0 %v1108
        %1416 = vmatprep.subr.bf16.mxu0 0
        %1417 = vmatpush1.bf16.msra.mxu0 %v1107
        %1418 = vmatprep.subr.bf16.mxu0 0
        %1419 = vmatpush1.bf16.msra.mxu0 %v1106
        %1420 = vmatprep.subr.bf16.mxu0 0
        %1421 = vmatpush1.bf16.msra.mxu0 %v1105
        %1422 = vmatprep.subr.bf16.mxu0 0
        %1423 = vmatpush1.bf16.msra.mxu0 %v1104
        %1424 = vmatprep.subr.bf16.mxu0 0
        %1425 = vmatpush2.bf16.msra.mxu0 %v1119
        %1426 = vmatprep.subr.bf16.mxu0 0
        %1427 = vmatpush2.bf16.msra.mxu0 %v1118
        %1428 = vmatprep.subr.bf16.mxu0 0
        %1429 = vmatpush2.bf16.msra.mxu0 %v1117
        %1430 = vmatprep.subr.bf16.mxu0 0
        %1431 = vmatpush2.bf16.msra.mxu0 %v1116
        %1432 = vmatprep.subr.bf16.mxu0 0
        %1433 = vmatpush2.bf16.msra.mxu0 %v1115
        %1434 = vmatprep.subr.bf16.mxu0 0
        %1435 = vmatpush2.bf16.msra.mxu0 %v1114
        %1436 = vmatprep.subr.bf16.mxu0 0
        %1437 = vmatpush2.bf16.msra.mxu0 %v1113
        %1438 = vmatprep.subr.bf16.mxu0 0
        %1439 = vmatpush2.bf16.msra.mxu0 %v1112
        %1440 = vmatprep.mubr.bf16.mxu0 %v490
        %1441 = vmatmul.mubr.bf16.gmra.mxu0 %v476
        %v1442 = vpop.f32.mrf.mxu0
        %v1443 = vadd.f32 %v1403, %v1442
        %v1444 = vpop.f32.mrf.mxu0
        %v1445 = vpop.f32.mrf.mxu0
        %v1446 = vpop.f32.mrf.mxu0
        %1447 = vdwg.mxu0
        %1448 = vmatprep.subr.bf16.mxu0 0
        %1449 = vmatpush1.bf16.msra.mxu0 %v1127
        %1450 = vmatprep.subr.bf16.mxu0 0
        %1451 = vmatpush1.bf16.msra.mxu0 %v1126
        %1452 = vmatprep.subr.bf16.mxu0 0
        %1453 = vmatpush1.bf16.msra.mxu0 %v1125
        %1454 = vmatprep.subr.bf16.mxu0 0
        %1455 = vmatpush1.bf16.msra.mxu0 %v1124
        %1456 = vmatprep.subr.bf16.mxu0 0
        %1457 = vmatpush1.bf16.msra.mxu0 %v1123
        %1458 = vmatprep.subr.bf16.mxu0 0
        %1459 = vmatpush1.bf16.msra.mxu0 %v1122
        %1460 = vmatprep.subr.bf16.mxu0 0
        %1461 = vmatpush1.bf16.msra.mxu0 %v1121
        %1462 = vmatprep.subr.bf16.mxu0 0
        %1463 = vmatpush1.bf16.msra.mxu0 %v1120
        %1464 = vmatprep.subr.bf16.mxu0 0
        %1465 = vmatpush2.bf16.msra.mxu0 %v1135
        %1466 = vmatprep.subr.bf16.mxu0 0
        %1467 = vmatpush2.bf16.msra.mxu0 %v1134
        %1468 = vmatprep.subr.bf16.mxu0 0
        %1469 = vmatpush2.bf16.msra.mxu0 %v1133
        %1470 = vmatprep.subr.bf16.mxu0 0
        %1471 = vmatpush2.bf16.msra.mxu0 %v1132
        %1472 = vmatprep.subr.bf16.mxu0 0
        %1473 = vmatpush2.bf16.msra.mxu0 %v1131
        %1474 = vmatprep.subr.bf16.mxu0 0
        %1475 = vmatpush2.bf16.msra.mxu0 %v1130
        %1476 = vmatprep.subr.bf16.mxu0 0
        %1477 = vmatpush2.bf16.msra.mxu0 %v1129
        %1478 = vmatprep.subr.bf16.mxu0 0
        %1479 = vmatpush2.bf16.msra.mxu0 %v1128
        %1480 = vmatprep.mubr.bf16.mxu0 %v494
        %1481 = vmatmul.mubr.bf16.gmra.mxu0 %v492
        %v1482 = vpop.f32.mrf.mxu0
        %v1483 = vadd.f32 %v1443, %v1482
        %v1484 = vpop.f32.mrf.mxu0
        %v1485 = vpop.f32.mrf.mxu0
        %v1486 = vpop.f32.mrf.mxu0
        %1487 = vdwg.mxu0
        %1488 = vmatprep.subr.bf16.mxu0 0
        %1489 = vmatpush1.bf16.msra.mxu0 %v1143
        %1490 = vmatprep.subr.bf16.mxu0 0
        %1491 = vmatpush1.bf16.msra.mxu0 %v1142
        %1492 = vmatprep.subr.bf16.mxu0 0
        %1493 = vmatpush1.bf16.msra.mxu0 %v1141
        %1494 = vmatprep.subr.bf16.mxu0 0
        %1495 = vmatpush1.bf16.msra.mxu0 %v1140
        %1496 = vmatprep.subr.bf16.mxu0 0
        %1497 = vmatpush1.bf16.msra.mxu0 %v1139
        %1498 = vmatprep.subr.bf16.mxu0 0
        %1499 = vmatpush1.bf16.msra.mxu0 %v1138
        %1500 = vmatprep.subr.bf16.mxu0 0
        %1501 = vmatpush1.bf16.msra.mxu0 %v1137
        %1502 = vmatprep.subr.bf16.mxu0 0
        %1503 = vmatpush1.bf16.msra.mxu0 %v1136
        %1504 = vmatprep.subr.bf16.mxu0 0
        %1505 = vmatpush2.bf16.msra.mxu0 %v1151
        %1506 = vmatprep.subr.bf16.mxu0 0
        %1507 = vmatpush2.bf16.msra.mxu0 %v1150
        %1508 = vmatprep.subr.bf16.mxu0 0
        %1509 = vmatpush2.bf16.msra.mxu0 %v1149
        %1510 = vmatprep.subr.bf16.mxu0 0
        %1511 = vmatpush2.bf16.msra.mxu0 %v1148
        %1512 = vmatprep.subr.bf16.mxu0 0
        %1513 = vmatpush2.bf16.msra.mxu0 %v1147
        %1514 = vmatprep.subr.bf16.mxu0 0
        %1515 = vmatpush2.bf16.msra.mxu0 %v1146
        %1516 = vmatprep.subr.bf16.mxu0 0
        %1517 = vmatpush2.bf16.msra.mxu0 %v1145
        %1518 = vmatprep.subr.bf16.mxu0 0
        %1519 = vmatpush2.bf16.msra.mxu0 %v1144
        %1520 = vmatprep.mubr.bf16.mxu0 %v532
        %1521 = vmatmul.mubr.bf16.gmra.mxu0 %v518
        %v1522 = vpop.f32.mrf.mxu0
        %v1523 = vadd.f32 %v1483, %v1522
        %v1524 = vpop.f32.mrf.mxu0
        %v1525 = vpop.f32.mrf.mxu0
        %v1526 = vpop.f32.mrf.mxu0
        %1527 = vdwg.mxu0
        %1528 = vmatprep.subr.bf16.mxu0 0
        %1529 = vmatpush1.bf16.msra.mxu0 %v1159
        %1530 = vmatprep.subr.bf16.mxu0 0
        %1531 = vmatpush1.bf16.msra.mxu0 %v1158
        %1532 = vmatprep.subr.bf16.mxu0 0
        %1533 = vmatpush1.bf16.msra.mxu0 %v1157
        %1534 = vmatprep.subr.bf16.mxu0 0
        %1535 = vmatpush1.bf16.msra.mxu0 %v1156
        %1536 = vmatprep.subr.bf16.mxu0 0
        %1537 = vmatpush1.bf16.msra.mxu0 %v1155
        %1538 = vmatprep.subr.bf16.mxu0 0
        %1539 = vmatpush1.bf16.msra.mxu0 %v1154
        %1540 = vmatprep.subr.bf16.mxu0 0
        %1541 = vmatpush1.bf16.msra.mxu0 %v1153
        %1542 = vmatprep.subr.bf16.mxu0 0
        %1543 = vmatpush1.bf16.msra.mxu0 %v1152
        %1544 = vmatprep.subr.bf16.mxu0 0
        %1545 = vmatpush2.bf16.msra.mxu0 %v1167
        %1546 = vmatprep.subr.bf16.mxu0 0
        %1547 = vmatpush2.bf16.msra.mxu0 %v1166
        %1548 = vmatprep.subr.bf16.mxu0 0
        %1549 = vmatpush2.bf16.msra.mxu0 %v1165
        %1550 = vmatprep.subr.bf16.mxu0 0
        %1551 = vmatpush2.bf16.msra.mxu0 %v1164
        %1552 = vmatprep.subr.bf16.mxu0 0
        %1553 = vmatpush2.bf16.msra.mxu0 %v1163
        %1554 = vmatprep.subr.bf16.mxu0 0
        %1555 = vmatpush2.bf16.msra.mxu0 %v1162
        %1556 = vmatprep.subr.bf16.mxu0 0
        %1557 = vmatpush2.bf16.msra.mxu0 %v1161
        %1558 = vmatprep.subr.bf16.mxu0 0
        %1559 = vmatpush2.bf16.msra.mxu0 %v1160
        %1560 = vmatprep.mubr.bf16.mxu0 %v542
        %1561 = vmatmul.mubr.bf16.gmra.mxu0 %v540
        %v1562 = vpop.f32.mrf.mxu0
        %v1563 = vadd.f32 %v1523, %v1562
        %v1564 = vpop.f32.mrf.mxu0
        %v1565 = vpop.f32.mrf.mxu0
        %v1566 = vpop.f32.mrf.mxu0
        %1567 = vdwg.mxu0
        %1568 = vmatprep.subr.bf16.mxu0 0
        %1569 = vmatpush1.bf16.msra.mxu0 %v1175
        %1570 = vmatprep.subr.bf16.mxu0 0
        %1571 = vmatpush1.bf16.msra.mxu0 %v1174
        %1572 = vmatprep.subr.bf16.mxu0 0
        %1573 = vmatpush1.bf16.msra.mxu0 %v1173
        %1574 = vmatprep.subr.bf16.mxu0 0
        %1575 = vmatpush1.bf16.msra.mxu0 %v1172
        %1576 = vmatprep.subr.bf16.mxu0 0
        %1577 = vmatpush1.bf16.msra.mxu0 %v1171
        %1578 = vmatprep.subr.bf16.mxu0 0
        %1579 = vmatpush1.bf16.msra.mxu0 %v1170
        %1580 = vmatprep.subr.bf16.mxu0 0
        %1581 = vmatpush1.bf16.msra.mxu0 %v1169
        %1582 = vmatprep.subr.bf16.mxu0 0
        %1583 = vmatpush1.bf16.msra.mxu0 %v1168
        %1584 = vmatprep.subr.bf16.mxu0 0
        %1585 = vmatpush2.bf16.msra.mxu0 %v1183
        %1586 = vmatprep.subr.bf16.mxu0 0
        %1587 = vmatpush2.bf16.msra.mxu0 %v1182
        %1588 = vmatprep.subr.bf16.mxu0 0
        %1589 = vmatpush2.bf16.msra.mxu0 %v1181
        %1590 = vmatprep.subr.bf16.mxu0 0
        %1591 = vmatpush2.bf16.msra.mxu0 %v1180
        %1592 = vmatprep.subr.bf16.mxu0 0
        %1593 = vmatpush2.bf16.msra.mxu0 %v1179
        %1594 = vmatprep.subr.bf16.mxu0 0
        %1595 = vmatpush2.bf16.msra.mxu0 %v1178
        %1596 = vmatprep.subr.bf16.mxu0 0
        %1597 = vmatpush2.bf16.msra.mxu0 %v1177
        %1598 = vmatprep.subr.bf16.mxu0 0
        %1599 = vmatpush2.bf16.msra.mxu0 %v1176
        %1600 = vmatprep.mubr.bf16.mxu0 %v539
        %1601 = vmatmul.mubr.bf16.gmra.mxu0 %v525
        %v1602 = vpop.f32.mrf.mxu0
        %v1603 = vadd.f32 %v1563, %v1602
        %v1604 = vpop.f32.mrf.mxu0
        %v1605 = vpop.f32.mrf.mxu0
        %v1606 = vpop.f32.mrf.mxu0
        %1607 = vdwg.mxu0
        %1608 = vmatprep.subr.bf16.mxu0 0
        %1609 = vmatpush1.bf16.msra.mxu0 %v1191
        %1610 = vmatprep.subr.bf16.mxu0 0
        %1611 = vmatpush1.bf16.msra.mxu0 %v1190
        %1612 = vmatprep.subr.bf16.mxu0 0
        %1613 = vmatpush1.bf16.msra.mxu0 %v1189
        %1614 = vmatprep.subr.bf16.mxu0 0
        %1615 = vmatpush1.bf16.msra.mxu0 %v1188
        %1616 = vmatprep.subr.bf16.mxu0 0
        %1617 = vmatpush1.bf16.msra.mxu0 %v1187
        %1618 = vmatprep.subr.bf16.mxu0 0
        %1619 = vmatpush1.bf16.msra.mxu0 %v1186
        %1620 = vmatprep.subr.bf16.mxu0 0
        %1621 = vmatpush1.bf16.msra.mxu0 %v1185
        %1622 = vmatprep.subr.bf16.mxu0 0
        %1623 = vmatpush1.bf16.msra.mxu0 %v1184
        %1624 = vmatprep.subr.bf16.mxu0 0
        %1625 = vmatpush2.bf16.msra.mxu0 %v1199
        %1626 = vmatprep.subr.bf16.mxu0 0
        %1627 = vmatpush2.bf16.msra.mxu0 %v1198
        %1628 = vmatprep.subr.bf16.mxu0 0
        %1629 = vmatpush2.bf16.msra.mxu0 %v1197
        %1630 = vmatprep.subr.bf16.mxu0 0
        %1631 = vmatpush2.bf16.msra.mxu0 %v1196
        %1632 = vmatprep.subr.bf16.mxu0 0
        %1633 = vmatpush2.bf16.msra.mxu0 %v1195
        %1634 = vmatprep.subr.bf16.mxu0 0
        %1635 = vmatpush2.bf16.msra.mxu0 %v1194
        %1636 = vmatprep.subr.bf16.mxu0 0
        %1637 = vmatpush2.bf16.msra.mxu0 %v1193
        %1638 = vmatprep.subr.bf16.mxu0 0
        %1639 = vmatpush2.bf16.msra.mxu0 %v1192
        %1640 = vmatprep.mubr.bf16.mxu0 %v543
        %1641 = vmatmul.mubr.bf16.gmra.mxu0 %v541
        %v1642 = vpop.f32.mrf.mxu0
        %v1643 = vadd.f32 %v1603, %v1642
        %v1644 = vpop.f32.mrf.mxu0
        %v1645 = vpop.f32.mrf.mxu0
        %v1646 = vpop.f32.mrf.mxu0
        %1647 = vdwg.mxu0
        %v1648 = vadd.f32 %v185, %v1643
        %vm1649 = vcmask 254976
        %1650 = vst.msk [vmem:[#allocation2] sm:$0x3] %vm1649, %v1648
        %p1651 = scmp.eq.s32.totalorder %s15, 3
        // Predicated region
        $region37: #{encoder_forward.5} parent=31 // pred_check
          %p1652 = pneg %p1651
        $region38: #{encoder_forward.5} parent=31 // pred_check_branch
          %1654 = sbr.rel (%p1652) target = $region40
        $region39: #{encoder_forward.5} parent=31 // pred_region
          %v1655 = vld [vmem:[#allocation2] sm:$0x3]
          %v1656 = vld [vmem:[%s2] sm:$0x3]
          %v1657 = vadd.f32 %v1655, %v1656
          %v1658 = vmax.f32 %v1657, 0.0
          %1659 = vst.msk [vmem:[#allocation3] sm:$0x3] %vm1649, %v1658
        $region40: #{encoder_forward.5} parent=31 // pred_fallthru
          _
        // Predicated region
        $region41: #{encoder_forward.5} parent=31 // pred_check
          %p1660 = pneg %p101
        $region42: #{encoder_forward.5} parent=31 // pred_check_branch
          %1662 = sbr.rel (%p1660) target = $region44
        $region43: #{encoder_forward.5} parent=31 // pred_region
          %s1664 = ssub.s32 32, 32
          %1665 = vsyncadd [#allocation4], %s1664
          %s1667 = sshll.u32 [#allocation3], 4
          %s1668 = int_to_ptr.vmem [resolvable:$true] %s1667
          %1670 = dma.vmem_to_hbm [thread:$0]  %s1668, 32, %s3, [#allocation4]
        $region44: #{encoder_forward.5} parent=31 // pred_fallthru
          _
        // Predicated region
        $region45: #{encoder_forward.5} parent=31 // pred_check
          %p1671 = pneg %p101
        $region46: #{encoder_forward.5} parent=31 // pred_check_branch
          %1673 = sbr.rel (%p1671) target = $region48
        $region47: #{encoder_forward.5} parent=31 // pred_region
          %1674 = dma.done [#allocation4], 32
        $region48: #{encoder_forward.5} parent=31 // pred_fallthru
          _
      $region32: #{encoder_forward.5} parent=5 // pred_fallthru
        _
      %p1675 = scmp.le.s32.totalorder 2, %s10
      // Predicated region
      $region49: #{encoder_forward.5} parent=5 // pred_check
        %p1676 = pneg %p1675
      $region50: #{encoder_forward.5} parent=5 // pred_check_branch
        %1678 = sbr.rel (%p1676) target = $region52
      $region51: #{encoder_forward.5} parent=5 // pred_region
        %s1679 = ssub.s32 %s10, 2
      $region52: #{encoder_forward.5} parent=5 // pred_fallthru
        _
    $region6: #{encoder_forward.5} parent=1 // loop_footer
      %s14 = sadd.s32 1, %s10
    $region7: #{encoder_forward.5} parent=1 // loop_footer_branch
      %9 = sbr.rel target = $region3
    $region8: #{encoder_forward.5} parent=1 // loop_exit
      _
    %1680 = vsyncpa [#allocation4], 1
    %s1681 = scalar_lea.sflag [#allocation4], 1
    %1682 = vsyncpa %s1681, 1

</llo_original>
